<compile_context>
chip_gen: v7x
topology: tpu7x:2x2x1
jax: 0.10.0
libtpu: 0.0.40
codegen_flags: <defaults>
</compile_context>

<pallas_src>
import functools
import math

import jax
import jax.numpy as jnp
from jax import lax
from jax.experimental import pallas as pl
from jax.experimental.pallas import tpu as pltpu


def _sae_kernel(k, n_valid, block_m, x_ref, b_enc_ref, w_enc_t_ref, w_dec_ref,
                b_dec_ref, recon_ref, e2_ref):
    """One batch tile.

    x_ref:       [TM, d_in] f32 (tile of the (padded) batch)
    b_enc_ref:   [1, H]     f32 effective encoder bias (b_dec folded in)
    w_enc_t_ref: [d_in, H]  compute dtype (bf16), VMEM-resident
    w_dec_ref:   [H, d_in]  compute dtype (bf16), VMEM-resident
    b_dec_ref:   [1, d_in]  f32 decoder bias
    recon_ref:   [TM, d_in] f32 output tile
    e2_ref:      [1, 1, d_in] per-tile column sums of (recon - x)^2
                 (padded rows masked out); wrapper finalizes fvu.
    """
    cdt = w_enc_t_ref.dtype                      # MXU input dtype (bf16)
    x = x_ref[...]                               # [TM, d_in] f32

    # ---- encoder: relu(x @ W_enc^T + b_enc_eff) ----
    # (the `x - b_dec` subtract was folded into b_enc_eff at prep time)
    pre = jnp.dot(x.astype(cdt), w_enc_t_ref[...],
                  preferred_element_type=jnp.float32)
    pre = jnp.maximum(pre + b_enc_ref[...], 0.0)          # [TM, H] f32

    # ---- exact top-k threshold: k lane-reduce passes over `pre` ----
    # The running threshold is non-increasing, so masking from `pre` each pass
    # is equivalent to the cumulative mask but does NOT carry a second
    # [TM, H] f32 array across passes (no per-pass spill writeback).
    # Ties at the k-th value keep extra activations (vs torch.topk keeping one);
    # with f32-accumulated pre this is a measure-zero event.
    # TODO(synk): for production SAE widths (H ~ 16k-64k) switch to a
    # count-based (radix/bit binary-search) threshold select and an H-tiled
    # encoder / K-accumulated decoder so no full [TM, H] pre is resident.
    thresh = jnp.max(pre, axis=-1, keepdims=True)          # XLU lane reduce
    for _ in range(k - 1):
        thresh = jnp.max(jnp.where(pre >= thresh, -jnp.inf, pre),
                         axis=-1, keepdims=True)
    z = jnp.where(pre >= thresh, pre, 0.0)

    # ---- decoder: z @ W_dec + b_dec ----
    recon = jnp.dot(z.astype(cdt), w_dec_ref[...],
                    preferred_element_type=jnp.float32) + b_dec_ref[...]
    recon_ref[...] = recon

    # ---- streamed fvu numerator partials (single lane-dense store) ----
    e = recon - x
    if n_valid % block_m != 0:       # static: padded rows exist in last tile
        row = (pl.program_id(0) * block_m
               + lax.broadcasted_iota(jnp.int32, (block_m, 1), 0))
        e = jnp.where(row < n_valid, e, 0.0)
    e2_ref[...] = jnp.sum(e * e, axis=0, keepdims=True)[None]

    # TODO(synk): activation_count / activate_latents / highest_activations
    # bookkeeping, analyze / steer (dampen_neurons) branches and the
    # train-mode auxk loss are host/file-state dependent and not implemented.


def prepare_sae_params(w_enc, b_enc, w_dec, b_dec, compute_dtype=jnp.bfloat16):
    """One-time (parameter-load-time) prep:
      * pre-transpose W_enc to [d_in, H] and cast MXU operands to bf16,
      * fold the pre-encoder bias subtraction into the encoder bias (f32):
          relu((x - b_dec) @ W_enc^T + b_enc) == relu(x @ W_enc^T + b_enc_eff)
        with b_enc_eff = b_enc - b_dec @ W_enc^T.
    """
    H, d_in = w_enc.shape
    w_enc_t = jnp.transpose(w_enc)                                  # [d_in, H]
    b_enc_eff = (b_enc.astype(jnp.float32)
                 - jnp.dot(b_dec.astype(jnp.float32),
                           w_enc_t.astype(jnp.float32)))
    return (w_enc_t.astype(compute_dtype),                          # [d_in, H]
            b_enc_eff.reshape(1, H).astype(jnp.float32),
            w_dec.astype(compute_dtype),                            # [H, d_in]
            b_dec.reshape(1, d_in).astype(jnp.float32))


def _round_up(x, m):
    return ((x + m - 1) // m) * m


@functools.partial(jax.jit,
                   static_argnames=("k", "block_m", "single_buffer_weights"))
def sae_forward(x, w_enc_t, b_enc, w_dec, b_dec, *, k, block_m=128,
                single_buffer_weights=True):
    """x: [B, d_in] f32; params as returned by prepare_sae_params.
    Returns (recon [B, d_in] f32, fvu scalar f32)."""
    B, d_in = x.shape
    H = w_enc_t.shape[1]

    # Batch tile: multiple of 8 sublanes, and small enough that there are
    # >= ~8 grid steps (>= 4 per TensorCore under v7x megacore) so the x-tile
    # DMA / recon writeback overlap with compute.  M streams through the MXU,
    # so shrinking the batch tile costs no MXU efficiency on any generation.
    bm = max(8, min(block_m, _round_up(pl.cdiv(B, 8), 8)))
    num_tiles = pl.cdiv(B, bm)
    B_pad = num_tiles * bm
    x_pad = x if B_pad == B else jnp.pad(x, ((0, B_pad - B), (0, 0)))

    use_single = single_buffer_weights and hasattr(pl, "Buffered")

    def _resident(shape):
        # Constant index_map -> DMA'd once, stays VMEM-resident across tiles.
        idx = lambda i: (0,) * len(shape)
        if use_single:
            return pl.BlockSpec(shape, idx,
                                pipeline_mode=pl.Buffered(buffer_count=1))
        return pl.BlockSpec(shape, idx)

    # ---- VMEM budget derived from the actual buffers (not a fixed 32 MiB) ----
    weight_bufs = 1 if use_single else 2
    resident = weight_bufs * (d_in * H * w_enc_t.dtype.itemsize
                              + H * d_in * w_dec.dtype.itemsize
                              + H * 4 + d_in * 4)
    io_bufs = 2 * (bm * d_in * 4) * 2 + 2 * (d_in * 4)   # x, recon (dbl), stats
    temps = 2 * bm * H * 4 + bm * H * 2 + bm * d_in * 2  # pre/z f32 + bf16 casts
    needed = resident + io_bufs + temps
    try:
        phys_vmem = pltpu.get_tpu_info().vmem_capacity_bytes
    except Exception:
        phys_vmem = 64 * 1024 * 1024                      # conservative (v7x)
    cap = min(100 * 1024 * 1024, int(phys_vmem * 3) // 4)
    vmem_limit = int(min(cap, max(2 * needed, 32 * 1024 * 1024)))

    flops = 4 * B_pad * d_in * H                           # two matmuls
    bytes_accessed = (B_pad * d_in * 4 * 2                 # x in + recon out
                      + w_enc_t.size * w_enc_t.dtype.itemsize
                      + w_dec.size * w_dec.dtype.itemsize
                      + b_enc.size * 4 + b_dec.size * 4
                      + num_tiles * d_in * 4)              # e^2 partials

    kernel = functools.partial(_sae_kernel, k, B, bm)
    recon_pad, e2 = pl.pallas_call(
        kernel,
        grid=(num_tiles,),
        in_specs=[
            pl.BlockSpec((bm, d_in), lambda i: (i, 0)),    # x tile
            _resident((1, H)),                             # b_enc_eff
            _resident((d_in, H)),                          # W_enc^T (bf16)
            _resident((H, d_in)),                          # W_dec (bf16)
            _resident((1, d_in)),                          # b_dec
        ],
        out_specs=(
            pl.BlockSpec((bm, d_in), lambda i: (i, 0)),    # recon tile
            pl.BlockSpec((1, 1, d_in), lambda i: (i, 0, 0)),  # e^2 partials
        ),
        out_shape=(
            jax.ShapeDtypeStruct((B_pad, d_in), jnp.float32),
            jax.ShapeDtypeStruct((num_tiles, 1, d_in), jnp.float32),
        ),
        compiler_params=pltpu.CompilerParams(
            dimension_semantics=("parallel",),
            vmem_limit_bytes=vmem_limit),
        cost_estimate=pl.CostEstimate(
            flops=flops, transcendentals=0, bytes_accessed=bytes_accessed),
    )(x_pad, b_enc, w_enc_t, w_dec, b_dec)

    recon = recon_pad if B_pad == B else recon_pad[:B]

    # fvu: numerator streamed from the kernel; denominator uses the centered
    # two-pass formula directly on x (matches the PyTorch expression and
    # avoids the sum(x^2) - sum(mean)^2 cancellation).  x is [B, d_in], so
    # this extra pass is negligible next to the [B, H] kernel work.
    sum_e2 = jnp.sum(e2)
    total_var = jnp.sum(jnp.square(x - jnp.mean(x, axis=0, keepdims=True)))
    fvu = sum_e2 / total_var
    return recon, fvu


def sae_reference(x, w_enc, b_enc, w_dec, b_dec, k,
                  compute_dtype=jnp.bfloat16):
    """Pure-JAX mirror of the PyTorch forward, using the same bf16-input /
    f32-accumulate matmul quantization as the kernel."""
    sae_in = x - b_dec
    pre = jnp.dot(sae_in.astype(compute_dtype),
                  jnp.transpose(w_enc).astype(compute_dtype),
                  preferred_element_type=jnp.float32) + b_enc
    pre = jnp.maximum(pre, 0.0)
    vals, idx = lax.top_k(pre, k)
    z = jnp.zeros_like(pre)
    z = jax.vmap(lambda zr, ir, vr: zr.at[ir].set(vr))(z, idx, vals)
    recon = jnp.dot(z.astype(compute_dtype), w_dec.astype(compute_dtype),
                    preferred_element_type=jnp.float32) + b_dec
    e = recon - x
    tv = jnp.sum((x - jnp.mean(x, axis=0, keepdims=True)) ** 2)
    return recon, jnp.sum(e * e) / tv


if __name__ == "__main__":
    # SAE-consistent small sizes: input_dim=128, sae_scale_size=4 -> hidden=512,
    # sae_k=16.  Batch 500 is deliberately NOT a tile multiple so the
    # pad-and-mask path is exercised; block_m auto-shrinks to 64 -> 8 grid
    # steps (4 per TensorCore on v7x megacore).
    B, d_in, scale_size, k = 500, 128, 4, 16
    H = d_in * scale_size

    key = jax.random.PRNGKey(0)
    kx, kw = jax.random.split(key)

    x = jax.random.normal(kx, (B, d_in), dtype=jnp.float32)

    # nn.Linear default init U(-1/sqrt(d_in), 1/sqrt(d_in)); encoder bias zeroed.
    bound = 1.0 / math.sqrt(d_in)
    w_enc = jax.random.uniform(kw, (H, d_in), dtype=jnp.float32,
                               minval=-bound, maxval=bound)
    b_enc = jnp.zeros((H,), dtype=jnp.float32)
    # W_dec = clone of encoder weight with rows normalized to unit norm (dim=1).
    eps = jnp.finfo(jnp.float32).eps
    w_dec = w_enc / (jnp.linalg.norm(w_enc, axis=1, keepdims=True) + eps)
    b_dec = jnp.zeros((d_in,), dtype=jnp.float32)

    # One-time parameter prep (pre-transpose + bias fold + compute-dtype cast).
    params = prepare_sae_params(w_enc, b_enc, w_dec, b_dec,
                                compute_dtype=jnp.bfloat16)

    try:
        recon, fvu = sae_forward(x, *params, k=k)
    except Exception:
        # Fallback for jax versions where pipeline_mode=pl.Buffered(1) is not
        # supported on top-level pallas_call BlockSpecs.
        recon, fvu = sae_forward(x, *params, k=k, single_buffer_weights=False)
    jax.block_until_ready((recon, fvu))

    recon_ref, fvu_ref = sae_reference(x, w_enc, b_enc, w_dec, b_dec, k,
                                       compute_dtype=jnp.bfloat16)
    max_err = jnp.max(jnp.abs(recon - recon_ref))
    assert jnp.allclose(recon, recon_ref, atol=2e-3, rtol=2e-3), (
        f"recon mismatch: max abs err {max_err}")
    assert jnp.allclose(fvu, fvu_ref, atol=2e-3, rtol=2e-3), (
        f"fvu mismatch: {fvu} vs {fvu_ref}")

    print("KERNEL_OK")
</pallas_src>

<mosaic_0001>
module attributes {stable_mosaic.version = 11 : i64} {
  func.func @_sae_kernel(%arg0: i32, %arg1: memref<64x128xf32, #tpu.memory_space<vmem>>, %arg2: memref<1x512xf32, #tpu.memory_space<vmem>>, %arg3: memref<128x512xbf16, #tpu.memory_space<vmem>>, %arg4: memref<512x128xbf16, #tpu.memory_space<vmem>>, %arg5: memref<1x128xf32, #tpu.memory_space<vmem>>, %arg6: memref<64x128xf32, #tpu.memory_space<vmem>>, %arg7: memref<1x1x128xf32, #tpu.memory_space<vmem>>) attributes {dimension_semantics = [#tpu.dimension_semantics<parallel>], iteration_bounds = array<i64: 8>, scalar_prefetch = 0 : i64, scratch_operands = 0 : i64, tpu.core_type = #tpu.core_type<tc>, window_params = [{transform_indices = @transform_0, window_bounds = array<i64: 64, 128>}, {pipeline_mode = #tpu.pipeline_mode<synchronous>, transform_indices = @transform_1, window_bounds = array<i64: 1, 512>}, {pipeline_mode = #tpu.pipeline_mode<synchronous>, transform_indices = @transform_2, window_bounds = array<i64: 128, 512>}, {pipeline_mode = #tpu.pipeline_mode<synchronous>, transform_indices = @transform_3, window_bounds = array<i64: 512, 128>}, {pipeline_mode = #tpu.pipeline_mode<synchronous>, transform_indices = @transform_4, window_bounds = array<i64: 1, 128>}, {transform_indices = @transform_5, window_bounds = array<i64: 64, 128>}, {transform_indices = @transform_6, window_bounds = array<i64: 1, 1, 128>}]} {
    %c0 = arith.constant 0 : index
    %c0_0 = arith.constant 0 : index
    %0 = vector.load %arg1[%c0, %c0_0] : memref<64x128xf32, #tpu.memory_space<vmem>>, vector<64x128xf32>
    %1 = arith.truncf %0 : vector<64x128xf32> to vector<64x128xbf16>
    %c0_1 = arith.constant 0 : index
    %c0_2 = arith.constant 0 : index
    %2 = vector.load %arg3[%c0_1, %c0_2] : memref<128x512xbf16, #tpu.memory_space<vmem>>, vector<128x512xbf16>
    %cst = arith.constant dense<0.000000e+00> : vector<64x512xf32>
    %3 = tpu.matmul %1, %2, %cst {dimension_numbers = #tpu.dot_dimension_numbers<[1], [0], [0], [1], [0, 0, 1, 1], [], []>} : vector<64x128xbf16>, vector<128x512xbf16>, vector<64x512xf32> -> vector<64x512xf32>
    %c0_3 = arith.constant 0 : index
    %c0_4 = arith.constant 0 : index
    %4 = vector.load %arg2[%c0_3, %c0_4] : memref<1x512xf32, #tpu.memory_space<vmem>>, vector<1x512xf32>
    %5 = vector.broadcast %4 : vector<1x512xf32> to vector<64x512xf32>
    %6 = arith.addf %3, %5 : vector<64x512xf32>
    %cst_5 = arith.constant 0.000000e+00 : f32
    %7 = vector.broadcast %cst_5 : f32 to vector<64x512xf32>
    %8 = arith.maximumf %6, %7 : vector<64x512xf32>
    %cst_6 = arith.constant dense<0xFF800000> : vector<64xf32>
    %9 = vector.multi_reduction <maximumf>, %8, %cst_6 [1] : vector<64x512xf32> to vector<64xf32>
    %10 = vector.shape_cast %9 : vector<64xf32> to vector<64x1xf32>
    %11 = vector.broadcast %10 : vector<64x1xf32> to vector<64x512xf32>
    %12 = arith.cmpf oge, %8, %11 : vector<64x512xf32>
    %cst_7 = arith.constant 0xFF800000 : f32
    %13 = vector.broadcast %cst_7 : f32 to vector<64x512xf32>
    %14 = arith.select %12, %13, %8 : vector<64x512xi1>, vector<64x512xf32>
    %cst_8 = arith.constant dense<0xFF800000> : vector<64xf32>
    %15 = vector.multi_reduction <maximumf>, %14, %cst_8 [1] : vector<64x512xf32> to vector<64xf32>
    %16 = vector.shape_cast %15 : vector<64xf32> to vector<64x1xf32>
    %17 = vector.broadcast %16 : vector<64x1xf32> to vector<64x512xf32>
    %18 = arith.cmpf oge, %8, %17 : vector<64x512xf32>
    %cst_9 = arith.constant 0xFF800000 : f32
    %19 = vector.broadcast %cst_9 : f32 to vector<64x512xf32>
    %20 = arith.select %18, %19, %8 : vector<64x512xi1>, vector<64x512xf32>
    %cst_10 = arith.constant dense<0xFF800000> : vector<64xf32>
    %21 = vector.multi_reduction <maximumf>, %20, %cst_10 [1] : vector<64x512xf32> to vector<64xf32>
    %22 = vector.shape_cast %21 : vector<64xf32> to vector<64x1xf32>
    %23 = vector.broadcast %22 : vector<64x1xf32> to vector<64x512xf32>
    %24 = arith.cmpf oge, %8, %23 : vector<64x512xf32>
    %cst_11 = arith.constant 0xFF800000 : f32
    %25 = vector.broadcast %cst_11 : f32 to vector<64x512xf32>
    %26 = arith.select %24, %25, %8 : vector<64x512xi1>, vector<64x512xf32>
    %cst_12 = arith.constant dense<0xFF800000> : vector<64xf32>
    %27 = vector.multi_reduction <maximumf>, %26, %cst_12 [1] : vector<64x512xf32> to vector<64xf32>
    %28 = vector.shape_cast %27 : vector<64xf32> to vector<64x1xf32>
    %29 = vector.broadcast %28 : vector<64x1xf32> to vector<64x512xf32>
    %30 = arith.cmpf oge, %8, %29 : vector<64x512xf32>
    %cst_13 = arith.constant 0xFF800000 : f32
    %31 = vector.broadcast %cst_13 : f32 to vector<64x512xf32>
    %32 = arith.select %30, %31, %8 : vector<64x512xi1>, vector<64x512xf32>
    %cst_14 = arith.constant dense<0xFF800000> : vector<64xf32>
    %33 = vector.multi_reduction <maximumf>, %32, %cst_14 [1] : vector<64x512xf32> to vector<64xf32>
    %34 = vector.shape_cast %33 : vector<64xf32> to vector<64x1xf32>
    %35 = vector.broadcast %34 : vector<64x1xf32> to vector<64x512xf32>
    %36 = arith.cmpf oge, %8, %35 : vector<64x512xf32>
    %cst_15 = arith.constant 0xFF800000 : f32
    %37 = vector.broadcast %cst_15 : f32 to vector<64x512xf32>
    %38 = arith.select %36, %37, %8 : vector<64x512xi1>, vector<64x512xf32>
    %cst_16 = arith.constant dense<0xFF800000> : vector<64xf32>
    %39 = vector.multi_reduction <maximumf>, %38, %cst_16 [1] : vector<64x512xf32> to vector<64xf32>
    %40 = vector.shape_cast %39 : vector<64xf32> to vector<64x1xf32>
    %41 = vector.broadcast %40 : vector<64x1xf32> to vector<64x512xf32>
    %42 = arith.cmpf oge, %8, %41 : vector<64x512xf32>
    %cst_17 = arith.constant 0xFF800000 : f32
    %43 = vector.broadcast %cst_17 : f32 to vector<64x512xf32>
    %44 = arith.select %42, %43, %8 : vector<64x512xi1>, vector<64x512xf32>
    %cst_18 = arith.constant dense<0xFF800000> : vector<64xf32>
    %45 = vector.multi_reduction <maximumf>, %44, %cst_18 [1] : vector<64x512xf32> to vector<64xf32>
    %46 = vector.shape_cast %45 : vector<64xf32> to vector<64x1xf32>
    %47 = vector.broadcast %46 : vector<64x1xf32> to vector<64x512xf32>
    %48 = arith.cmpf oge, %8, %47 : vector<64x512xf32>
    %cst_19 = arith.constant 0xFF800000 : f32
    %49 = vector.broadcast %cst_19 : f32 to vector<64x512xf32>
    %50 = arith.select %48, %49, %8 : vector<64x512xi1>, vector<64x512xf32>
    %cst_20 = arith.constant dense<0xFF800000> : vector<64xf32>
    %51 = vector.multi_reduction <maximumf>, %50, %cst_20 [1] : vector<64x512xf32> to vector<64xf32>
    %52 = vector.shape_cast %51 : vector<64xf32> to vector<64x1xf32>
    %53 = vector.broadcast %52 : vector<64x1xf32> to vector<64x512xf32>
    %54 = arith.cmpf oge, %8, %53 : vector<64x512xf32>
    %cst_21 = arith.constant 0xFF800000 : f32
    %55 = vector.broadcast %cst_21 : f32 to vector<64x512xf32>
    %56 = arith.select %54, %55, %8 : vector<64x512xi1>, vector<64x512xf32>
    %cst_22 = arith.constant dense<0xFF800000> : vector<64xf32>
    %57 = vector.multi_reduction <maximumf>, %56, %cst_22 [1] : vector<64x512xf32> to vector<64xf32>
    %58 = vector.shape_cast %57 : vector<64xf32> to vector<64x1xf32>
    %59 = vector.broadcast %58 : vector<64x1xf32> to vector<64x512xf32>
    %60 = arith.cmpf oge, %8, %59 : vector<64x512xf32>
    %cst_23 = arith.constant 0xFF800000 : f32
    %61 = vector.broadcast %cst_23 : f32 to vector<64x512xf32>
    %62 = arith.select %60, %61, %8 : vector<64x512xi1>, vector<64x512xf32>
    %cst_24 = arith.constant dense<0xFF800000> : vector<64xf32>
    %63 = vector.multi_reduction <maximumf>, %62, %cst_24 [1] : vector<64x512xf32> to vector<64xf32>
    %64 = vector.shape_cast %63 : vector<64xf32> to vector<64x1xf32>
    %65 = vector.broadcast %64 : vector<64x1xf32> to vector<64x512xf32>
    %66 = arith.cmpf oge, %8, %65 : vector<64x512xf32>
    %cst_25 = arith.constant 0xFF800000 : f32
    %67 = vector.broadcast %cst_25 : f32 to vector<64x512xf32>
    %68 = arith.select %66, %67, %8 : vector<64x512xi1>, vector<64x512xf32>
    %cst_26 = arith.constant dense<0xFF800000> : vector<64xf32>
    %69 = vector.multi_reduction <maximumf>, %68, %cst_26 [1] : vector<64x512xf32> to vector<64xf32>
    %70 = vector.shape_cast %69 : vector<64xf32> to vector<64x1xf32>
    %71 = vector.broadcast %70 : vector<64x1xf32> to vector<64x512xf32>
    %72 = arith.cmpf oge, %8, %71 : vector<64x512xf32>
    %cst_27 = arith.constant 0xFF800000 : f32
    %73 = vector.broadcast %cst_27 : f32 to vector<64x512xf32>
    %74 = arith.select %72, %73, %8 : vector<64x512xi1>, vector<64x512xf32>
    %cst_28 = arith.constant dense<0xFF800000> : vector<64xf32>
    %75 = vector.multi_reduction <maximumf>, %74, %cst_28 [1] : vector<64x512xf32> to vector<64xf32>
    %76 = vector.shape_cast %75 : vector<64xf32> to vector<64x1xf32>
    %77 = vector.broadcast %76 : vector<64x1xf32> to vector<64x512xf32>
    %78 = arith.cmpf oge, %8, %77 : vector<64x512xf32>
    %cst_29 = arith.constant 0xFF800000 : f32
    %79 = vector.broadcast %cst_29 : f32 to vector<64x512xf32>
    %80 = arith.select %78, %79, %8 : vector<64x512xi1>, vector<64x512xf32>
    %cst_30 = arith.constant dense<0xFF800000> : vector<64xf32>
    %81 = vector.multi_reduction <maximumf>, %80, %cst_30 [1] : vector<64x512xf32> to vector<64xf32>
    %82 = vector.shape_cast %81 : vector<64xf32> to vector<64x1xf32>
    %83 = vector.broadcast %82 : vector<64x1xf32> to vector<64x512xf32>
    %84 = arith.cmpf oge, %8, %83 : vector<64x512xf32>
    %cst_31 = arith.constant 0xFF800000 : f32
    %85 = vector.broadcast %cst_31 : f32 to vector<64x512xf32>
    %86 = arith.select %84, %85, %8 : vector<64x512xi1>, vector<64x512xf32>
    %cst_32 = arith.constant dense<0xFF800000> : vector<64xf32>
    %87 = vector.multi_reduction <maximumf>, %86, %cst_32 [1] : vector<64x512xf32> to vector<64xf32>
    %88 = vector.shape_cast %87 : vector<64xf32> to vector<64x1xf32>
    %89 = vector.broadcast %88 : vector<64x1xf32> to vector<64x512xf32>
    %90 = arith.cmpf oge, %8, %89 : vector<64x512xf32>
    %cst_33 = arith.constant 0xFF800000 : f32
    %91 = vector.broadcast %cst_33 : f32 to vector<64x512xf32>
    %92 = arith.select %90, %91, %8 : vector<64x512xi1>, vector<64x512xf32>
    %cst_34 = arith.constant dense<0xFF800000> : vector<64xf32>
    %93 = vector.multi_reduction <maximumf>, %92, %cst_34 [1] : vector<64x512xf32> to vector<64xf32>
    %94 = vector.shape_cast %93 : vector<64xf32> to vector<64x1xf32>
    %95 = vector.broadcast %94 : vector<64x1xf32> to vector<64x512xf32>
    %96 = arith.cmpf oge, %8, %95 : vector<64x512xf32>
    %cst_35 = arith.constant 0xFF800000 : f32
    %97 = vector.broadcast %cst_35 : f32 to vector<64x512xf32>
    %98 = arith.select %96, %97, %8 : vector<64x512xi1>, vector<64x512xf32>
    %cst_36 = arith.constant dense<0xFF800000> : vector<64xf32>
    %99 = vector.multi_reduction <maximumf>, %98, %cst_36 [1] : vector<64x512xf32> to vector<64xf32>
    %100 = vector.shape_cast %99 : vector<64xf32> to vector<64x1xf32>
    %101 = vector.broadcast %100 : vector<64x1xf32> to vector<64x512xf32>
    %102 = arith.cmpf oge, %8, %101 : vector<64x512xf32>
    %cst_37 = arith.constant 0.000000e+00 : f32
    %103 = vector.broadcast %cst_37 : f32 to vector<64x512xf32>
    %104 = arith.select %102, %8, %103 : vector<64x512xi1>, vector<64x512xf32>
    %105 = arith.truncf %104 : vector<64x512xf32> to vector<64x512xbf16>
    %c0_38 = arith.constant 0 : index
    %c0_39 = arith.constant 0 : index
    %106 = vector.load %arg4[%c0_38, %c0_39] : memref<512x128xbf16, #tpu.memory_space<vmem>>, vector<512x128xbf16>
    %cst_40 = arith.constant dense<0.000000e+00> : vector<64x128xf32>
    %107 = tpu.matmul %105, %106, %cst_40 {dimension_numbers = #tpu.dot_dimension_numbers<[1], [0], [0], [1], [0, 0, 1, 1], [], []>} : vector<64x512xbf16>, vector<512x128xbf16>, vector<64x128xf32> -> vector<64x128xf32>
    %c0_41 = arith.constant 0 : index
    %c0_42 = arith.constant 0 : index
    %108 = vector.load %arg5[%c0_41, %c0_42] : memref<1x128xf32, #tpu.memory_space<vmem>>, vector<1x128xf32>
    %109 = vector.broadcast %108 : vector<1x128xf32> to vector<64x128xf32>
    %110 = arith.addf %107, %109 : vector<64x128xf32>
    %c0_43 = arith.constant 0 : index
    %c0_44 = arith.constant 0 : index
    %111 = vector.load %arg6[%c0_43, %c0_44] : memref<64x128xf32, #tpu.memory_space<vmem>>, vector<64x128xf32>
    tpu.vector_store %arg6[%c0_43, %c0_44], %110 {strides = array<i32>} : memref<64x128xf32, #tpu.memory_space<vmem>>, vector<64x128xf32>,
    %112 = arith.subf %110, %0 : vector<64x128xf32>
    %c64_i32 = arith.constant 64 : i32
    %113 = arith.muli %arg0, %c64_i32 : i32
    %114 = tpu.iota {dimensions = array<i32: 0>} : vector<64x1xi32>
    %115 = vector.broadcast %113 : i32 to vector<64x1xi32>
    %116 = arith.addi %115, %114 : vector<64x1xi32>
    %c500_i32 = arith.constant 500 : i32
    %117 = vector.broadcast %c500_i32 : i32 to vector<64x1xi32>
    %118 = arith.cmpi slt, %116, %117 : vector<64x1xi32>
    %cst_45 = arith.constant 0.000000e+00 : f32
    %119 = vector.shape_cast %118 : vector<64x1xi1> to vector<64x1xi1>
    %120 = vector.broadcast %119 : vector<64x1xi1> to vector<64x128xi1>
    %121 = vector.broadcast %cst_45 : f32 to vector<64x128xf32>
    %122 = arith.select %120, %112, %121 : vector<64x128xi1>, vector<64x128xf32>
    %123 = arith.mulf %122, %122 : vector<64x128xf32>
    %cst_46 = arith.constant dense<0.000000e+00> : vector<128xf32>
    %124 = vector.multi_reduction <add>, %123, %cst_46 [0] : vector<64x128xf32> to vector<128xf32>
    %125 = vector.shape_cast %124 : vector<128xf32> to vector<1x128xf32>
    %126 = vector.shape_cast %125 : vector<1x128xf32> to vector<1x1x128xf32>
    %c0_47 = arith.constant 0 : index
    %c0_48 = arith.constant 0 : index
    %c0_49 = arith.constant 0 : index
    %127 = vector.load %arg7[%c0_47, %c0_48, %c0_49] : memref<1x1x128xf32, #tpu.memory_space<vmem>>, vector<1x1x128xf32>
    tpu.vector_store %arg7[%c0_47, %c0_48, %c0_49], %126 {strides = array<i32>} : memref<1x1x128xf32, #tpu.memory_space<vmem>>, vector<1x1x128xf32>,
    return
  }
  func.func @transform_0(%arg0: i32) -> (i32, i32) {
    %c0_i32 = arith.constant 0 : i32
    %c0_i32_0 = arith.constant 0 : i32
    return %arg0, %c0_i32 : i32, i32
  }
  func.func @transform_1(%arg0: i32) -> (i32, i32) {
    %c0_i32 = arith.constant 0 : i32
    %c0_i32_0 = arith.constant 0 : i32
    %c0_i32_1 = arith.constant 0 : i32
    return %c0_i32, %c0_i32_0 : i32, i32
  }
  func.func @transform_2(%arg0: i32) -> (i32, i32) {
    %c0_i32 = arith.constant 0 : i32
    %c0_i32_0 = arith.constant 0 : i32
    %c0_i32_1 = arith.constant 0 : i32
    return %c0_i32, %c0_i32_0 : i32, i32
  }
  func.func @transform_3(%arg0: i32) -> (i32, i32) {
    %c0_i32 = arith.constant 0 : i32
    %c0_i32_0 = arith.constant 0 : i32
    %c0_i32_1 = arith.constant 0 : i32
    return %c0_i32, %c0_i32_0 : i32, i32
  }
  func.func @transform_4(%arg0: i32) -> (i32, i32) {
    %c0_i32 = arith.constant 0 : i32
    %c0_i32_0 = arith.constant 0 : i32
    %c0_i32_1 = arith.constant 0 : i32
    return %c0_i32, %c0_i32_0 : i32, i32
  }
  func.func @transform_5(%arg0: i32) -> (i32, i32) {
    %c0_i32 = arith.constant 0 : i32
    %c0_i32_0 = arith.constant 0 : i32
    return %arg0, %c0_i32 : i32, i32
  }
  func.func @transform_6(%arg0: i32) -> (i32, i32, i32) {
    %c0_i32 = arith.constant 0 : i32
    %c0_i32_0 = arith.constant 0 : i32
    %c0_i32_1 = arith.constant 0 : i32
    return %arg0, %c0_i32, %c0_i32_0 : i32, i32, i32
  }
}

module attributes {stable_mosaic.version = 11 : i64} {
  func.func @_sae_kernel(%arg0: i32, %arg1: memref<64x128xf32, #tpu.memory_space<vmem>>, %arg2: memref<1x512xf32, #tpu.memory_space<vmem>>, %arg3: memref<128x512xbf16, #tpu.memory_space<vmem>>, %arg4: memref<512x128xbf16, #tpu.memory_space<vmem>>, %arg5: memref<1x128xf32, #tpu.memory_space<vmem>>, %arg6: memref<64x128xf32, #tpu.memory_space<vmem>>, %arg7: memref<1x1x128xf32, #tpu.memory_space<vmem>>) attributes {dimension_semantics = [#tpu.dimension_semantics<parallel>], iteration_bounds = array<i64: 8>, scalar_prefetch = 0 : i64, scratch_operands = 0 : i64, tpu.core_type = #tpu.core_type<tc>, window_params = [{transform_indices = @transform_0, window_bounds = array<i64: 64, 128>}, {pipeline_mode = #tpu.pipeline_mode<synchronous>, transform_indices = @transform_1, window_bounds = array<i64: 1, 512>}, {pipeline_mode = #tpu.pipeline_mode<synchronous>, transform_indices = @transform_2, window_bounds = array<i64: 128, 512>}, {pipeline_mode = #tpu.pipeline_mode<synchronous>, transform_indices = @transform_3, window_bounds = array<i64: 512, 128>}, {pipeline_mode = #tpu.pipeline_mode<synchronous>, transform_indices = @transform_4, window_bounds = array<i64: 1, 128>}, {transform_indices = @transform_5, window_bounds = array<i64: 64, 128>}, {transform_indices = @transform_6, window_bounds = array<i64: 1, 1, 128>}]} {
    %c0 = arith.constant 0 : index
    %c0_0 = arith.constant 0 : index
    %0 = vector.load %arg1[%c0, %c0_0] : memref<64x128xf32, #tpu.memory_space<vmem>>, vector<64x128xf32>
    %1 = arith.truncf %0 : vector<64x128xf32> to vector<64x128xbf16>
    %c0_1 = arith.constant 0 : index
    %c0_2 = arith.constant 0 : index
    %2 = vector.load %arg3[%c0_1, %c0_2] : memref<128x512xbf16, #tpu.memory_space<vmem>>, vector<128x512xbf16>
    %cst = arith.constant dense<0.000000e+00> : vector<64x512xf32>
    %3 = tpu.matmul %1, %2, %cst {dimension_numbers = #tpu.dot_dimension_numbers<[1], [0], [0], [1], [0, 0, 1, 1], [], []>} : vector<64x128xbf16>, vector<128x512xbf16>, vector<64x512xf32> -> vector<64x512xf32>
    %c0_3 = arith.constant 0 : index
    %c0_4 = arith.constant 0 : index
    %4 = vector.load %arg2[%c0_3, %c0_4] : memref<1x512xf32, #tpu.memory_space<vmem>>, vector<1x512xf32>
    %5 = vector.broadcast %4 : vector<1x512xf32> to vector<64x512xf32>
    %6 = arith.addf %3, %5 : vector<64x512xf32>
    %cst_5 = arith.constant 0.000000e+00 : f32
    %7 = vector.broadcast %cst_5 : f32 to vector<64x512xf32>
    %8 = arith.maximumf %6, %7 : vector<64x512xf32>
    %cst_6 = arith.constant dense<0xFF800000> : vector<64xf32>
    %9 = vector.multi_reduction <maximumf>, %8, %cst_6 [1] : vector<64x512xf32> to vector<64xf32>
    %10 = vector.shape_cast %9 : vector<64xf32> to vector<64x1xf32>
    %11 = vector.broadcast %10 : vector<64x1xf32> to vector<64x512xf32>
    %12 = arith.cmpf oge, %8, %11 : vector<64x512xf32>
    %cst_7 = arith.constant 0xFF800000 : f32
    %13 = vector.broadcast %cst_7 : f32 to vector<64x512xf32>
    %14 = arith.select %12, %13, %8 : vector<64x512xi1>, vector<64x512xf32>
    %cst_8 = arith.constant dense<0xFF800000> : vector<64xf32>
    %15 = vector.multi_reduction <maximumf>, %14, %cst_8 [1] : vector<64x512xf32> to vector<64xf32>
    %16 = vector.shape_cast %15 : vector<64xf32> to vector<64x1xf32>
    %17 = vector.broadcast %16 : vector<64x1xf32> to vector<64x512xf32>
    %18 = arith.cmpf oge, %8, %17 : vector<64x512xf32>
    %cst_9 = arith.constant 0xFF800000 : f32
    %19 = vector.broadcast %cst_9 : f32 to vector<64x512xf32>
    %20 = arith.select %18, %19, %8 : vector<64x512xi1>, vector<64x512xf32>
    %cst_10 = arith.constant dense<0xFF800000> : vector<64xf32>
    %21 = vector.multi_reduction <maximumf>, %20, %cst_10 [1] : vector<64x512xf32> to vector<64xf32>
    %22 = vector.shape_cast %21 : vector<64xf32> to vector<64x1xf32>
    %23 = vector.broadcast %22 : vector<64x1xf32> to vector<64x512xf32>
    %24 = arith.cmpf oge, %8, %23 : vector<64x512xf32>
    %cst_11 = arith.constant 0xFF800000 : f32
    %25 = vector.broadcast %cst_11 : f32 to vector<64x512xf32>
    %26 = arith.select %24, %25, %8 : vector<64x512xi1>, vector<64x512xf32>
    %cst_12 = arith.constant dense<0xFF800000> : vector<64xf32>
    %27 = vector.multi_reduction <maximumf>, %26, %cst_12 [1] : vector<64x512xf32> to vector<64xf32>
    %28 = vector.shape_cast %27 : vector<64xf32> to vector<64x1xf32>
    %29 = vector.broadcast %28 : vector<64x1xf32> to vector<64x512xf32>
    %30 = arith.cmpf oge, %8, %29 : vector<64x512xf32>
    %cst_13 = arith.constant 0xFF800000 : f32
    %31 = vector.broadcast %cst_13 : f32 to vector<64x512xf32>
    %32 = arith.select %30, %31, %8 : vector<64x512xi1>, vector<64x512xf32>
    %cst_14 = arith.constant dense<0xFF800000> : vector<64xf32>
    %33 = vector.multi_reduction <maximumf>, %32, %cst_14 [1] : vector<64x512xf32> to vector<64xf32>
    %34 = vector.shape_cast %33 : vector<64xf32> to vector<64x1xf32>
    %35 = vector.broadcast %34 : vector<64x1xf32> to vector<64x512xf32>
    %36 = arith.cmpf oge, %8, %35 : vector<64x512xf32>
    %cst_15 = arith.constant 0xFF800000 : f32
    %37 = vector.broadcast %cst_15 : f32 to vector<64x512xf32>
    %38 = arith.select %36, %37, %8 : vector<64x512xi1>, vector<64x512xf32>
    %cst_16 = arith.constant dense<0xFF800000> : vector<64xf32>
    %39 = vector.multi_reduction <maximumf>, %38, %cst_16 [1] : vector<64x512xf32> to vector<64xf32>
    %40 = vector.shape_cast %39 : vector<64xf32> to vector<64x1xf32>
    %41 = vector.broadcast %40 : vector<64x1xf32> to vector<64x512xf32>
    %42 = arith.cmpf oge, %8, %41 : vector<64x512xf32>
    %cst_17 = arith.constant 0xFF800000 : f32
    %43 = vector.broadcast %cst_17 : f32 to vector<64x512xf32>
    %44 = arith.select %42, %43, %8 : vector<64x512xi1>, vector<64x512xf32>
    %cst_18 = arith.constant dense<0xFF800000> : vector<64xf32>
    %45 = vector.multi_reduction <maximumf>, %44, %cst_18 [1] : vector<64x512xf32> to vector<64xf32>
    %46 = vector.shape_cast %45 : vector<64xf32> to vector<64x1xf32>
    %47 = vector.broadcast %46 : vector<64x1xf32> to vector<64x512xf32>
    %48 = arith.cmpf oge, %8, %47 : vector<64x512xf32>
    %cst_19 = arith.constant 0xFF800000 : f32
    %49 = vector.broadcast %cst_19 : f32 to vector<64x512xf32>
    %50 = arith.select %48, %49, %8 : vector<64x512xi1>, vector<64x512xf32>
    %cst_20 = arith.constant dense<0xFF800000> : vector<64xf32>
    %51 = vector.multi_reduction <maximumf>, %50, %cst_20 [1] : vector<64x512xf32> to vector<64xf32>
    %52 = vector.shape_cast %51 : vector<64xf32> to vector<64x1xf32>
    %53 = vector.broadcast %52 : vector<64x1xf32> to vector<64x512xf32>
    %54 = arith.cmpf oge, %8, %53 : vector<64x512xf32>
    %cst_21 = arith.constant 0xFF800000 : f32
    %55 = vector.broadcast %cst_21 : f32 to vector<64x512xf32>
    %56 = arith.select %54, %55, %8 : vector<64x512xi1>, vector<64x512xf32>
    %cst_22 = arith.constant dense<0xFF800000> : vector<64xf32>
    %57 = vector.multi_reduction <maximumf>, %56, %cst_22 [1] : vector<64x512xf32> to vector<64xf32>
    %58 = vector.shape_cast %57 : vector<64xf32> to vector<64x1xf32>
    %59 = vector.broadcast %58 : vector<64x1xf32> to vector<64x512xf32>
    %60 = arith.cmpf oge, %8, %59 : vector<64x512xf32>
    %cst_23 = arith.constant 0xFF800000 : f32
    %61 = vector.broadcast %cst_23 : f32 to vector<64x512xf32>
    %62 = arith.select %60, %61, %8 : vector<64x512xi1>, vector<64x512xf32>
    %cst_24 = arith.constant dense<0xFF800000> : vector<64xf32>
    %63 = vector.multi_reduction <maximumf>, %62, %cst_24 [1] : vector<64x512xf32> to vector<64xf32>
    %64 = vector.shape_cast %63 : vector<64xf32> to vector<64x1xf32>
    %65 = vector.broadcast %64 : vector<64x1xf32> to vector<64x512xf32>
    %66 = arith.cmpf oge, %8, %65 : vector<64x512xf32>
    %cst_25 = arith.constant 0xFF800000 : f32
    %67 = vector.broadcast %cst_25 : f32 to vector<64x512xf32>
    %68 = arith.select %66, %67, %8 : vector<64x512xi1>, vector<64x512xf32>
    %cst_26 = arith.constant dense<0xFF800000> : vector<64xf32>
    %69 = vector.multi_reduction <maximumf>, %68, %cst_26 [1] : vector<64x512xf32> to vector<64xf32>
    %70 = vector.shape_cast %69 : vector<64xf32> to vector<64x1xf32>
    %71 = vector.broadcast %70 : vector<64x1xf32> to vector<64x512xf32>
    %72 = arith.cmpf oge, %8, %71 : vector<64x512xf32>
    %cst_27 = arith.constant 0xFF800000 : f32
    %73 = vector.broadcast %cst_27 : f32 to vector<64x512xf32>
    %74 = arith.select %72, %73, %8 : vector<64x512xi1>, vector<64x512xf32>
    %cst_28 = arith.constant dense<0xFF800000> : vector<64xf32>
    %75 = vector.multi_reduction <maximumf>, %74, %cst_28 [1] : vector<64x512xf32> to vector<64xf32>
    %76 = vector.shape_cast %75 : vector<64xf32> to vector<64x1xf32>
    %77 = vector.broadcast %76 : vector<64x1xf32> to vector<64x512xf32>
    %78 = arith.cmpf oge, %8, %77 : vector<64x512xf32>
    %cst_29 = arith.constant 0xFF800000 : f32
    %79 = vector.broadcast %cst_29 : f32 to vector<64x512xf32>
    %80 = arith.select %78, %79, %8 : vector<64x512xi1>, vector<64x512xf32>
    %cst_30 = arith.constant dense<0xFF800000> : vector<64xf32>
    %81 = vector.multi_reduction <maximumf>, %80, %cst_30 [1] : vector<64x512xf32> to vector<64xf32>
    %82 = vector.shape_cast %81 : vector<64xf32> to vector<64x1xf32>
    %83 = vector.broadcast %82 : vector<64x1xf32> to vector<64x512xf32>
    %84 = arith.cmpf oge, %8, %83 : vector<64x512xf32>
    %cst_31 = arith.constant 0xFF800000 : f32
    %85 = vector.broadcast %cst_31 : f32 to vector<64x512xf32>
    %86 = arith.select %84, %85, %8 : vector<64x512xi1>, vector<64x512xf32>
    %cst_32 = arith.constant dense<0xFF800000> : vector<64xf32>
    %87 = vector.multi_reduction <maximumf>, %86, %cst_32 [1] : vector<64x512xf32> to vector<64xf32>
    %88 = vector.shape_cast %87 : vector<64xf32> to vector<64x1xf32>
    %89 = vector.broadcast %88 : vector<64x1xf32> to vector<64x512xf32>
    %90 = arith.cmpf oge, %8, %89 : vector<64x512xf32>
    %cst_33 = arith.constant 0xFF800000 : f32
    %91 = vector.broadcast %cst_33 : f32 to vector<64x512xf32>
    %92 = arith.select %90, %91, %8 : vector<64x512xi1>, vector<64x512xf32>
    %cst_34 = arith.constant dense<0xFF800000> : vector<64xf32>
    %93 = vector.multi_reduction <maximumf>, %92, %cst_34 [1] : vector<64x512xf32> to vector<64xf32>
    %94 = vector.shape_cast %93 : vector<64xf32> to vector<64x1xf32>
    %95 = vector.broadcast %94 : vector<64x1xf32> to vector<64x512xf32>
    %96 = arith.cmpf oge, %8, %95 : vector<64x512xf32>
    %cst_35 = arith.constant 0xFF800000 : f32
    %97 = vector.broadcast %cst_35 : f32 to vector<64x512xf32>
    %98 = arith.select %96, %97, %8 : vector<64x512xi1>, vector<64x512xf32>
    %cst_36 = arith.constant dense<0xFF800000> : vector<64xf32>
    %99 = vector.multi_reduction <maximumf>, %98, %cst_36 [1] : vector<64x512xf32> to vector<64xf32>
    %100 = vector.shape_cast %99 : vector<64xf32> to vector<64x1xf32>
    %101 = vector.broadcast %100 : vector<64x1xf32> to vector<64x512xf32>
    %102 = arith.cmpf oge, %8, %101 : vector<64x512xf32>
    %cst_37 = arith.constant 0.000000e+00 : f32
    %103 = vector.broadcast %cst_37 : f32 to vector<64x512xf32>
    %104 = arith.select %102, %8, %103 : vector<64x512xi1>, vector<64x512xf32>
    %105 = arith.truncf %104 : vector<64x512xf32> to vector<64x512xbf16>
    %c0_38 = arith.constant 0 : index
    %c0_39 = arith.constant 0 : index
    %106 = vector.load %arg4[%c0_38, %c0_39] : memref<512x128xbf16, #tpu.memory_space<vmem>>, vector<512x128xbf16>
    %cst_40 = arith.constant dense<0.000000e+00> : vector<64x128xf32>
    %107 = tpu.matmul %105, %106, %cst_40 {dimension_numbers = #tpu.dot_dimension_numbers<[1], [0], [0], [1], [0, 0, 1, 1], [], []>} : vector<64x512xbf16>, vector<512x128xbf16>, vector<64x128xf32> -> vector<64x128xf32>
    %c0_41 = arith.constant 0 : index
    %c0_42 = arith.constant 0 : index
    %108 = vector.load %arg5[%c0_41, %c0_42] : memref<1x128xf32, #tpu.memory_space<vmem>>, vector<1x128xf32>
    %109 = vector.broadcast %108 : vector<1x128xf32> to vector<64x128xf32>
    %110 = arith.addf %107, %109 : vector<64x128xf32>
    %c0_43 = arith.constant 0 : index
    %c0_44 = arith.constant 0 : index
    %111 = vector.load %arg6[%c0_43, %c0_44] : memref<64x128xf32, #tpu.memory_space<vmem>>, vector<64x128xf32>
    tpu.vector_store %arg6[%c0_43, %c0_44], %110 {strides = array<i32>} : memref<64x128xf32, #tpu.memory_space<vmem>>, vector<64x128xf32>,
    %112 = arith.subf %110, %0 : vector<64x128xf32>
    %c64_i32 = arith.constant 64 : i32
    %113 = arith.muli %arg0, %c64_i32 : i32
    %114 = tpu.iota {dimensions = array<i32: 0>} : vector<64x1xi32>
    %115 = vector.broadcast %113 : i32 to vector<64x1xi32>
    %116 = arith.addi %115, %114 : vector<64x1xi32>
    %c500_i32 = arith.constant 500 : i32
    %117 = vector.broadcast %c500_i32 : i32 to vector<64x1xi32>
    %118 = arith.cmpi slt, %116, %117 : vector<64x1xi32>
    %cst_45 = arith.constant 0.000000e+00 : f32
    %119 = vector.shape_cast %118 : vector<64x1xi1> to vector<64x1xi1>
    %120 = vector.broadcast %119 : vector<64x1xi1> to vector<64x128xi1>
    %121 = vector.broadcast %cst_45 : f32 to vector<64x128xf32>
    %122 = arith.select %120, %112, %121 : vector<64x128xi1>, vector<64x128xf32>
    %123 = arith.mulf %122, %122 : vector<64x128xf32>
    %cst_46 = arith.constant dense<0.000000e+00> : vector<128xf32>
    %124 = vector.multi_reduction <add>, %123, %cst_46 [0] : vector<64x128xf32> to vector<128xf32>
    %125 = vector.shape_cast %124 : vector<128xf32> to vector<1x128xf32>
    %126 = vector.shape_cast %125 : vector<1x128xf32> to vector<1x1x128xf32>
    %c0_47 = arith.constant 0 : index
    %c0_48 = arith.constant 0 : index
    %c0_49 = arith.constant 0 : index
    %127 = vector.load %arg7[%c0_47, %c0_48, %c0_49] : memref<1x1x128xf32, #tpu.memory_space<vmem>>, vector<1x1x128xf32>
    tpu.vector_store %arg7[%c0_47, %c0_48, %c0_49], %126 {strides = array<i32>} : memref<1x1x128xf32, #tpu.memory_space<vmem>>, vector<1x1x128xf32>,
    return
  }
  func.func @transform_0(%arg0: i32) -> (i32, i32) {
    %c0_i32 = arith.constant 0 : i32
    %c0_i32_0 = arith.constant 0 : i32
    return %arg0, %c0_i32 : i32, i32
  }
  func.func @transform_1(%arg0: i32) -> (i32, i32) {
    %c0_i32 = arith.constant 0 : i32
    %c0_i32_0 = arith.constant 0 : i32
    %c0_i32_1 = arith.constant 0 : i32
    return %c0_i32, %c0_i32_0 : i32, i32
  }
  func.func @transform_2(%arg0: i32) -> (i32, i32) {
    %c0_i32 = arith.constant 0 : i32
    %c0_i32_0 = arith.constant 0 : i32
    %c0_i32_1 = arith.constant 0 : i32
    return %c0_i32, %c0_i32_0 : i32, i32
  }
  func.func @transform_3(%arg0: i32) -> (i32, i32) {
    %c0_i32 = arith.constant 0 : i32
    %c0_i32_0 = arith.constant 0 : i32
    %c0_i32_1 = arith.constant 0 : i32
    return %c0_i32, %c0_i32_0 : i32, i32
  }
  func.func @transform_4(%arg0: i32) -> (i32, i32) {
    %c0_i32 = arith.constant 0 : i32
    %c0_i32_0 = arith.constant 0 : i32
    %c0_i32_1 = arith.constant 0 : i32
    return %c0_i32, %c0_i32_0 : i32, i32
  }
  func.func @transform_5(%arg0: i32) -> (i32, i32) {
    %c0_i32 = arith.constant 0 : i32
    %c0_i32_0 = arith.constant 0 : i32
    return %arg0, %c0_i32 : i32, i32
  }
  func.func @transform_6(%arg0: i32) -> (i32, i32, i32) {
    %c0_i32 = arith.constant 0 : i32
    %c0_i32_0 = arith.constant 0 : i32
    %c0_i32_1 = arith.constant 0 : i32
    return %arg0, %c0_i32, %c0_i32_0 : i32, i32, i32
  }
}

</mosaic_0001>

<llo_original>
// kernel: sae_forward.1
$region0: #{sae_forward.1}
  #allocation0 [shape = 'u32[]', space=smem, size = 0x4, offset = 0x4, fixed_abs, tag = 'smem constant byte address 0x4 - core index']
  #allocation1 [shape = 'u32[144,128]{1,0:T(1,128)}', space=vmem, size = 0x12000, scoped, tag = 'internal scratch']
  %s0 = inlined_call_operand.vmem [shape: f32[512,128], index: 0, kind: input, shape index: {}]
  %s1 = inlined_call_operand.vmem [shape: f32[1,512], index: 1, kind: input, shape index: {}]
  %s2 = inlined_call_operand.vmem [shape: bf16[128,512], index: 2, kind: input, shape index: {}]
  %s3 = inlined_call_operand.vmem [shape: bf16[512,128], index: 3, kind: input, shape index: {}]
  %s4 = inlined_call_operand.vmem [shape: f32[1,128], index: 4, kind: input, shape index: {}]
  %s5 = inlined_call_operand.vmem [shape: f32[512,128], index: 5, kind: output, shape index: {0}]
  %s6 = inlined_call_operand.vmem [shape: f32[8,1,128], index: 6, kind: output, shape index: {1}]
  %7 = xla_tuple %s5, %s6
  %s8 = sld [smem:[#allocation0]]
  $region61: #{sae_forward.1} parent=0
    _
  %s10 = ssub.s32 1, %s8
  %s11 = scalar_select 0, %s10, %s8
  loop: start=0, step=1, limit=10
  $region2: #{sae_forward.1} parent=0 // loop_pre_header
    _
  $region3: #{sae_forward.1} parent=0 // loop_header
    %s13 = sphi 0, %s17
    %p14 = scmp.ge.s32.totalorder %s13, 10
    %s23 = sphi 0, %s25
    %s26 = sphi 0, %s23
    %s27 = sphi 0, %s26
    %s43 = sphi 0, %s27
    %s47 = sphi 0, %s47
    %s49 = sphi 0, %s47
    %s50 = sphi 0, %s49
    %s64 = sphi 0, %s50
    %s68 = sphi 0, %s68
    %s70 = sphi 0, %s68
    %s71 = sphi 0, %s70
    %s85 = sphi 0, %s71
    %s89 = sphi 0, %s89
    %s91 = sphi 0, %s89
    %s92 = sphi 0, %s91
    %s106 = sphi 0, %s92
    %s110 = sphi 0, %s110
    %s112 = sphi 0, %s110
    %s113 = sphi 0, %s112
    %s127 = sphi 0, %s113
    %s133 = sphi 0, %s135
    %s136 = sphi 0, %s133
    %s137 = sphi 0, %s136
    %s153 = sphi 0, %s137
    %s159 = sphi 0, %s161
    %s162 = sphi 0, %s159
    %s163 = sphi 0, %s162
    %s179 = sphi 0, %s163
  $region4: #{sae_forward.1} parent=0 // loop_header_branch
    %16 = sbr.rel (%p14) target = $region8
  $region5: #{sae_forward.1} parent=0 // loop_body
    %s18 = ssub.s32 %s13, 1
    %s19 = ssub.s32 %s13, 2
    %s20 = sadd.s32 %s13, 1
    %s21 = ssub.s32 %s13, %s20
    %p22 = scmp.eq.s32.totalorder %s21, 0
    %s24 = sadd.s32 %s23, 1
    %s25 = scalar_select %p22, %s23, %s24
    %p28 = pneg %p22
    %p29 = scmp.eq.s32.totalorder %s13, 7
    %p30 = por %p28, %p29
    %p31 = scmp.ne.s32.totalorder %s23, %s26
    %p32 = scmp.eq.s32.totalorder %s13, 0
    %p33 = por %p31, %p32
    %p34 = scmp.ne.s32.totalorder %s23, %s26
    %p35 = scmp.eq.s32.totalorder %s18, 7
    %p36 = por %p34, %p35
    %p37 = scmp.ne.s32.totalorder %s26, %s27
    %p38 = scmp.eq.s32.totalorder %s18, 0
    %p39 = por %p37, %p38
    %p40 = scmp.ne.s32.totalorder %s26, %s27
    %p41 = scmp.eq.s32.totalorder %s19, 7
    %p42 = por %p40, %p41
    %p44 = scmp.ne.s32.totalorder %s27, %s43
    %p45 = scmp.eq.s32.totalorder %s19, 0
    %p46 = por %p44, %p45
    %s48 = sadd.s32 %s47, 1
    %p51 = scmp.eq.s32.totalorder %s13, 7
    %p52 = scmp.ne.s32.totalorder %s47, %s49
    %p53 = scmp.eq.s32.totalorder %s13, 0
    %p54 = por %p52, %p53
    %p55 = scmp.ne.s32.totalorder %s47, %s49
    %p56 = scmp.eq.s32.totalorder %s18, 7
    %p57 = por %p55, %p56
    %p58 = scmp.ne.s32.totalorder %s49, %s50
    %p59 = scmp.eq.s32.totalorder %s18, 0
    %p60 = por %p58, %p59
    %p61 = scmp.ne.s32.totalorder %s49, %s50
    %p62 = scmp.eq.s32.totalorder %s19, 7
    %p63 = por %p61, %p62
    %p65 = scmp.ne.s32.totalorder %s50, %s64
    %p66 = scmp.eq.s32.totalorder %s19, 0
    %p67 = por %p65, %p66
    %s69 = sadd.s32 %s68, 1
    %p72 = scmp.eq.s32.totalorder %s13, 7
    %p73 = scmp.ne.s32.totalorder %s68, %s70
    %p74 = scmp.eq.s32.totalorder %s13, 0
    %p75 = por %p73, %p74
    %p76 = scmp.ne.s32.totalorder %s68, %s70
    %p77 = scmp.eq.s32.totalorder %s18, 7
    %p78 = por %p76, %p77
    %p79 = scmp.ne.s32.totalorder %s70, %s71
    %p80 = scmp.eq.s32.totalorder %s18, 0
    %p81 = por %p79, %p80
    %p82 = scmp.ne.s32.totalorder %s70, %s71
    %p83 = scmp.eq.s32.totalorder %s19, 7
    %p84 = por %p82, %p83
    %p86 = scmp.ne.s32.totalorder %s71, %s85
    %p87 = scmp.eq.s32.totalorder %s19, 0
    %p88 = por %p86, %p87
    %s90 = sadd.s32 %s89, 1
    %p93 = scmp.eq.s32.totalorder %s13, 7
    %p94 = scmp.ne.s32.totalorder %s89, %s91
    %p95 = scmp.eq.s32.totalorder %s13, 0
    %p96 = por %p94, %p95
    %p97 = scmp.ne.s32.totalorder %s89, %s91
    %p98 = scmp.eq.s32.totalorder %s18, 7
    %p99 = por %p97, %p98
    %p100 = scmp.ne.s32.totalorder %s91, %s92
    %p101 = scmp.eq.s32.totalorder %s18, 0
    %p102 = por %p100, %p101
    %p103 = scmp.ne.s32.totalorder %s91, %s92
    %p104 = scmp.eq.s32.totalorder %s19, 7
    %p105 = por %p103, %p104
    %p107 = scmp.ne.s32.totalorder %s92, %s106
    %p108 = scmp.eq.s32.totalorder %s19, 0
    %p109 = por %p107, %p108
    %s111 = sadd.s32 %s110, 1
    %p114 = scmp.eq.s32.totalorder %s13, 7
    %p115 = scmp.ne.s32.totalorder %s110, %s112
    %p116 = scmp.eq.s32.totalorder %s13, 0
    %p117 = por %p115, %p116
    %p118 = scmp.ne.s32.totalorder %s110, %s112
    %p119 = scmp.eq.s32.totalorder %s18, 7
    %p120 = por %p118, %p119
    %p121 = scmp.ne.s32.totalorder %s112, %s113
    %p122 = scmp.eq.s32.totalorder %s18, 0
    %p123 = por %p121, %p122
    %p124 = scmp.ne.s32.totalorder %s112, %s113
    %p125 = scmp.eq.s32.totalorder %s19, 7
    %p126 = por %p124, %p125
    %p128 = scmp.ne.s32.totalorder %s113, %s127
    %p129 = scmp.eq.s32.totalorder %s19, 0
    %p130 = por %p128, %p129
    %s131 = ssub.s32 %s13, %s20
    %p132 = scmp.eq.s32.totalorder %s131, 0
    %s134 = sadd.s32 %s133, 1
    %s135 = scalar_select %p132, %s133, %s134
    %p138 = pneg %p132
    %p139 = scmp.eq.s32.totalorder %s13, 7
    %p140 = por %p138, %p139
    %p141 = scmp.ne.s32.totalorder %s133, %s136
    %p142 = scmp.eq.s32.totalorder %s13, 0
    %p143 = por %p141, %p142
    %p144 = scmp.ne.s32.totalorder %s133, %s136
    %p145 = scmp.eq.s32.totalorder %s18, 7
    %p146 = por %p144, %p145
    %p147 = scmp.ne.s32.totalorder %s136, %s137
    %p148 = scmp.eq.s32.totalorder %s18, 0
    %p149 = por %p147, %p148
    %p150 = scmp.ne.s32.totalorder %s136, %s137
    %p151 = scmp.eq.s32.totalorder %s19, 7
    %p152 = por %p150, %p151
    %p154 = scmp.ne.s32.totalorder %s137, %s153
    %p155 = scmp.eq.s32.totalorder %s19, 0
    %p156 = por %p154, %p155
    %s157 = ssub.s32 %s13, %s20
    %p158 = scmp.eq.s32.totalorder %s157, 0
    %s160 = sadd.s32 %s159, 1
    %s161 = scalar_select %p158, %s159, %s160
    %p164 = pneg %p158
    %p165 = scmp.eq.s32.totalorder %s13, 7
    %p166 = por %p164, %p165
    %p167 = scmp.ne.s32.totalorder %s159, %s162
    %p168 = scmp.eq.s32.totalorder %s13, 0
    %p169 = por %p167, %p168
    %p170 = scmp.ne.s32.totalorder %s159, %s162
    %p171 = scmp.eq.s32.totalorder %s18, 7
    %p172 = por %p170, %p171
    %p173 = scmp.ne.s32.totalorder %s162, %s163
    %p174 = scmp.eq.s32.totalorder %s18, 0
    %p175 = por %p173, %p174
    %p176 = scmp.ne.s32.totalorder %s162, %s163
    %p177 = scmp.eq.s32.totalorder %s19, 7
    %p178 = por %p176, %p177
    %p180 = scmp.ne.s32.totalorder %s163, %s179
    %p181 = scmp.eq.s32.totalorder %s19, 0
    %p182 = por %p180, %p181
    %p183 = scmp.le.s32.totalorder 1, %s13
    %p184 = scmp.lt.s32.totalorder %s13, 9
    %p185 = pnand %p183, %p184
    %p186 = pneg %p185
    // Predicated region
    $region9: #{sae_forward.1} parent=5 // pred_check
      _
    $region10: #{sae_forward.1} parent=5 // pred_check_branch
      %188 = sbr.rel (%p185) target = $region12
    $region11: #{sae_forward.1} parent=5 // pred_region
      %s189 = ssub.s32 %s13, 1
      // Predicated region
      $region13: #{sae_forward.1} parent=11 // pred_check
        %p190 = pneg %p60
      $region14: #{sae_forward.1} parent=11 // pred_check_branch
        %192 = sbr.rel (%p190) target = $region16
      $region15: #{sae_forward.1} parent=11 // pred_region
        _
      $region16: #{sae_forward.1} parent=11 // pred_fallthru
        _
      // Predicated region
      $region17: #{sae_forward.1} parent=11 // pred_check
        %p193 = pneg %p81
      $region18: #{sae_forward.1} parent=11 // pred_check_branch
        %195 = sbr.rel (%p193) target = $region20
      $region19: #{sae_forward.1} parent=11 // pred_region
        _
      $region20: #{sae_forward.1} parent=11 // pred_fallthru
        _
      // Predicated region
      $region21: #{sae_forward.1} parent=11 // pred_check
        %p196 = pneg %p102
      $region22: #{sae_forward.1} parent=11 // pred_check_branch
        %198 = sbr.rel (%p196) target = $region24
      $region23: #{sae_forward.1} parent=11 // pred_region
        _
      $region24: #{sae_forward.1} parent=11 // pred_fallthru
        _
      // Predicated region
      $region25: #{sae_forward.1} parent=11 // pred_check
        %p199 = pneg %p123
      $region26: #{sae_forward.1} parent=11 // pred_check_branch
        %201 = sbr.rel (%p199) target = $region28
      $region27: #{sae_forward.1} parent=11 // pred_region
        _
      $region28: #{sae_forward.1} parent=11 // pred_fallthru
        _
    $region12: #{sae_forward.1} parent=5 // pred_fallthru
      _
    %p202 = scmp.lt.s32.totalorder %s13, 8
    // Predicated region
    $region29: #{sae_forward.1} parent=5 // pred_check
      %p203 = pneg %p202
    $region30: #{sae_forward.1} parent=5 // pred_check_branch
      %205 = sbr.rel (%p203) target = $region32
    $region31: #{sae_forward.1} parent=5 // pred_region
      // Predicated region
      $region33: #{sae_forward.1} parent=31 // pred_check
        %p206 = pneg %p33
      $region34: #{sae_forward.1} parent=31 // pred_check_branch
        %208 = sbr.rel (%p206) target = $region36
      $region35: #{sae_forward.1} parent=31 // pred_region
        %s209 = smul.u32 8, %s13
        %p210 = scmp.lt.s32.totalorder %s209, 63
        %s211 = scalar_select %p210, %s209, 63
        %s212 = smul.addr %s211, 8
        %s213 = scalar_lea.vmem %s0, %s212
        %s214 = smul.u32 8, %s13
      $region36: #{sae_forward.1} parent=31 // pred_fallthru
        _
    $region32: #{sae_forward.1} parent=5 // pred_fallthru
      _
    %p215 = scmp.le.s32.totalorder 1, %s13
    %p216 = scmp.lt.s32.totalorder %s13, 9
    %p217 = pnand %p215, %p216
    %p218 = pneg %p217
    // Predicated region
    $region37: #{sae_forward.1} parent=5 // pred_check
      _
    $region38: #{sae_forward.1} parent=5 // pred_check_branch
      %220 = sbr.rel (%p217) target = $region40
    $region39: #{sae_forward.1} parent=5 // pred_region
      %s221 = ssub.s32 %s13, 1
      %s222 = smul.u32 8, %s18
      %p223 = scmp.lt.s32.totalorder %s222, 63
      %s224 = scalar_select %p223, %s222, 63
      %s225 = smul.addr %s224, 8
      %s226 = scalar_lea.vmem %s0, %s225
      %p227 = pneg %p39
      %p228 = pneg %p36
      %p229 = pneg %p60
      %p230 = pneg %p57
      %p231 = pneg %p81
      %p232 = pneg %p78
      %p233 = pneg %p102
      %p234 = pneg %p99
      %p235 = pneg %p123
      %p236 = pneg %p120
      %p237 = pneg %p149
      %p238 = pneg %p146
      %s239 = smul.u32 8, %s18
      %p240 = scmp.lt.s32.totalorder %s239, 63
      %s241 = scalar_select %p240, %s239, 63
      %s242 = smul.addr %s241, 8
      %s243 = scalar_lea.vmem %s5, %s242
      %p244 = pneg %p175
      %p245 = pneg %p172
      %p246 = scmp.lt.s32.totalorder %s18, 7
      %s247 = scalar_select %p246, %s18, 7
      %s248 = scalar_lea.vmem %s6, %s247
      %s249 = smul.u32 8, %s18
      %p250 = scmp.lt.s32.totalorder %s249, 63
      %s251 = scalar_select %p250, %s249, 63
      %s252 = smul.addr %s251, 8
      %s253 = scalar_lea.vmem %s0, %s252
      %s254 = smul.u32 8, %s18
      %s255 = smul.u32 8, %s18
      %p256 = scmp.lt.s32.totalorder %s255, 63
      %s257 = scalar_select %p256, %s255, 63
      %s258 = smul.addr %s257, 8
      %s259 = scalar_lea.vmem %s5, %s258
      %s260 = smul.u32 8, %s18
      %p261 = scmp.lt.s32.totalorder %s18, 7
      %s262 = scalar_select %p261, %s18, 7
      %s263 = scalar_lea.vmem %s6, %s262
      %v265 = vld [vmem:[%s253] sm:$0xff]
      %v266 = vld [vmem:[%s253 + $0x8] sm:$0xff]
      %v267 = vld [vmem:[%s253 + $0x10] sm:$0xff]
      %v268 = vld [vmem:[%s253 + $0x18] sm:$0xff]
      %v269 = vld [vmem:[%s253 + $0x20] sm:$0xff]
      %v270 = vld [vmem:[%s253 + $0x28] sm:$0xff]
      %v271 = vld [vmem:[%s253 + $0x30] sm:$0xff]
      %v272 = vld [vmem:[%s253 + $0x38] sm:$0xff]
      %v273 = vpack.c.bf16 %v266, %v265
      %v274 = vpack.c.bf16 %v268, %v267
      %v275 = vpack.c.bf16 %v270, %v269
      %v276 = vpack.c.bf16 %v272, %v271
      %v277 = vld [vmem:[%s2] sm:$0xff]
      %v278 = vld [vmem:[%s2 + $0x8] sm:$0xff]
      %v279 = vld [vmem:[%s2 + $0x10] sm:$0xff]
      %v280 = vld [vmem:[%s2 + $0x18] sm:$0xff]
      %v281 = vld [vmem:[%s2 + $0x20] sm:$0xff]
      %v282 = vld [vmem:[%s2 + $0x28] sm:$0xff]
      %v283 = vld [vmem:[%s2 + $0x30] sm:$0xff]
      %v284 = vld [vmem:[%s2 + $0x38] sm:$0xff]
      %v285 = vld [vmem:[%s2 + $0x40] sm:$0xff]
      %v286 = vld [vmem:[%s2 + $0x48] sm:$0xff]
      %v287 = vld [vmem:[%s2 + $0x50] sm:$0xff]
      %v288 = vld [vmem:[%s2 + $0x58] sm:$0xff]
      %v289 = vld [vmem:[%s2 + $0x60] sm:$0xff]
      %v290 = vld [vmem:[%s2 + $0x68] sm:$0xff]
      %v291 = vld [vmem:[%s2 + $0x70] sm:$0xff]
      %v292 = vld [vmem:[%s2 + $0x78] sm:$0xff]
      %v293 = vld [vmem:[%s2 + $0x80] sm:$0xff]
      %v294 = vld [vmem:[%s2 + $0x88] sm:$0xff]
      %v295 = vld [vmem:[%s2 + $0x90] sm:$0xff]
      %v296 = vld [vmem:[%s2 + $0x98] sm:$0xff]
      %v297 = vld [vmem:[%s2 + $0xa0] sm:$0xff]
      %v298 = vld [vmem:[%s2 + $0xa8] sm:$0xff]
      %v299 = vld [vmem:[%s2 + $0xb0] sm:$0xff]
      %v300 = vld [vmem:[%s2 + $0xb8] sm:$0xff]
      %v301 = vld [vmem:[%s2 + $0xc0] sm:$0xff]
      %v302 = vld [vmem:[%s2 + $0xc8] sm:$0xff]
      %v303 = vld [vmem:[%s2 + $0xd0] sm:$0xff]
      %v304 = vld [vmem:[%s2 + $0xd8] sm:$0xff]
      %v305 = vld [vmem:[%s2 + $0xe0] sm:$0xff]
      %v306 = vld [vmem:[%s2 + $0xe8] sm:$0xff]
      %v307 = vld [vmem:[%s2 + $0xf0] sm:$0xff]
      %v308 = vld [vmem:[%s2 + $0xf8] sm:$0xff]
      %v309 = vld [vmem:[%s1] sm:$0xf]
      %v311 = vlaneseq
      %v312 = vshrl.u32 %v311, 7
      %v313 = vsub.s32 0, %v312
      %v314 = vrot.slane %v309, %v313
      %v315 = vlaneseq
      %v316 = vshrl.u32 %v315, 7
      %v317 = vsub.s32 1, %v316
      %v318 = vrot.slane %v309, %v317
      %v319 = vlaneseq
      %v320 = vshrl.u32 %v319, 7
      %v321 = vsub.s32 2, %v320
      %v322 = vrot.slane %v309, %v321
      %v323 = vlaneseq
      %v324 = vshrl.u32 %v323, 7
      %v325 = vsub.s32 3, %v324
      %v326 = vrot.slane %v309, %v325
      %v363 = vunpack.c.l.b16 %v277
      %v364 = vunpack.c.h.b16 %v277
      %v365 = vunpack.c.l.b16 %v278
      %v366 = vunpack.c.h.b16 %v278
      %v367 = vunpack.c.l.b16 %v279
      %v368 = vunpack.c.h.b16 %v279
      %v369 = vunpack.c.l.b16 %v280
      %v370 = vunpack.c.h.b16 %v280
      %v371 = vunpack.c.l.b16 %v281
      %v372 = vunpack.c.h.b16 %v281
      %v373 = vunpack.c.l.b16 %v282
      %v374 = vunpack.c.h.b16 %v282
      %v375 = vunpack.c.l.b16 %v283
      %v376 = vunpack.c.h.b16 %v283
      %v377 = vunpack.c.l.b16 %v284
      %v378 = vunpack.c.h.b16 %v284
      %v379 = vunpack.c.l.b16 %v285
      %v380 = vunpack.c.h.b16 %v285
      %v381 = vunpack.c.l.b16 %v286
      %v382 = vunpack.c.h.b16 %v286
      %v383 = vunpack.c.l.b16 %v287
      %v384 = vunpack.c.h.b16 %v287
      %v385 = vunpack.c.l.b16 %v288
      %v386 = vunpack.c.h.b16 %v288
      %v387 = vunpack.c.l.b16 %v289
      %v388 = vunpack.c.h.b16 %v289
      %v389 = vunpack.c.l.b16 %v290
      %v390 = vunpack.c.h.b16 %v290
      %v391 = vunpack.c.l.b16 %v291
      %v392 = vunpack.c.h.b16 %v291
      %v393 = vunpack.c.l.b16 %v292
      %v394 = vunpack.c.h.b16 %v292
      %v395 = vunpack.c.l.b16 %v293
      %v396 = vunpack.c.h.b16 %v293
      %v397 = vunpack.c.l.b16 %v294
      %v398 = vunpack.c.h.b16 %v294
      %v399 = vunpack.c.l.b16 %v295
      %v400 = vunpack.c.h.b16 %v295
      %v401 = vunpack.c.l.b16 %v296
      %v402 = vunpack.c.h.b16 %v296
      %v403 = vunpack.c.l.b16 %v297
      %v404 = vunpack.c.h.b16 %v297
      %v405 = vunpack.c.l.b16 %v298
      %v406 = vunpack.c.h.b16 %v298
      %v407 = vunpack.c.l.b16 %v299
      %v408 = vunpack.c.h.b16 %v299
      %v409 = vunpack.c.l.b16 %v300
      %v410 = vunpack.c.h.b16 %v300
      %v411 = vunpack.c.l.b16 %v301
      %v412 = vunpack.c.h.b16 %v301
      %v413 = vunpack.c.l.b16 %v302
      %v414 = vunpack.c.h.b16 %v302
      %v415 = vunpack.c.l.b16 %v303
      %v416 = vunpack.c.h.b16 %v303
      %v417 = vunpack.c.l.b16 %v304
      %v418 = vunpack.c.h.b16 %v304
      %v419 = vunpack.c.l.b16 %v305
      %v420 = vunpack.c.h.b16 %v305
      %v421 = vunpack.c.l.b16 %v306
      %v422 = vunpack.c.h.b16 %v306
      %v423 = vunpack.c.l.b16 %v307
      %v424 = vunpack.c.h.b16 %v307
      %v425 = vunpack.c.l.b16 %v308
      %v426 = vunpack.c.h.b16 %v308
      %v427 = vpack.c.b16 %v367, %v363
      %v428 = vpack.c.b16 %v368, %v364
      %v429 = vpack.c.b16 %v369, %v365
      %v430 = vpack.c.b16 %v370, %v366
      %v431 = vpack.c.b16 %v375, %v371
      %v432 = vpack.c.b16 %v376, %v372
      %v433 = vpack.c.b16 %v377, %v373
      %v434 = vpack.c.b16 %v378, %v374
      %v435 = vpack.c.b16 %v383, %v379
      %v436 = vpack.c.b16 %v384, %v380
      %v437 = vpack.c.b16 %v385, %v381
      %v438 = vpack.c.b16 %v386, %v382
      %v439 = vpack.c.b16 %v391, %v387
      %v440 = vpack.c.b16 %v392, %v388
      %v441 = vpack.c.b16 %v393, %v389
      %v442 = vpack.c.b16 %v394, %v390
      %v443 = vpack.c.b16 %v399, %v395
      %v444 = vpack.c.b16 %v400, %v396
      %v445 = vpack.c.b16 %v401, %v397
      %v446 = vpack.c.b16 %v402, %v398
      %v447 = vpack.c.b16 %v407, %v403
      %v448 = vpack.c.b16 %v408, %v404
      %v449 = vpack.c.b16 %v409, %v405
      %v450 = vpack.c.b16 %v410, %v406
      %v451 = vpack.c.b16 %v415, %v411
      %v452 = vpack.c.b16 %v416, %v412
      %v453 = vpack.c.b16 %v417, %v413
      %v454 = vpack.c.b16 %v418, %v414
      %v455 = vpack.c.b16 %v423, %v419
      %v456 = vpack.c.b16 %v424, %v420
      %v457 = vpack.c.b16 %v425, %v421
      %v458 = vpack.c.b16 %v426, %v422
      %491 = vmatprep.subr.bf16.mxu0 %v428
      %492 = vmatpush1.bf16.msra.mxu0 %v427
      %493 = vmatprep.subr.bf16.mxu0 %v432
      %494 = vmatpush1.bf16.msra.mxu0 %v431
      %495 = vmatprep.subr.bf16.mxu0 %v436
      %496 = vmatpush1.bf16.msra.mxu0 %v435
      %497 = vmatprep.subr.bf16.mxu0 %v440
      %498 = vmatpush1.bf16.msra.mxu0 %v439
      %499 = vmatprep.subr.bf16.mxu0 %v444
      %500 = vmatpush1.bf16.msra.mxu0 %v443
      %501 = vmatprep.subr.bf16.mxu0 %v448
      %502 = vmatpush1.bf16.msra.mxu0 %v447
      %503 = vmatprep.subr.bf16.mxu0 %v452
      %504 = vmatpush1.bf16.msra.mxu0 %v451
      %505 = vmatprep.subr.bf16.mxu0 %v456
      %506 = vmatpush1.bf16.msra.mxu0 %v455
      %507 = vmatprep.subr.bf16.mxu0 0
      %508 = vmatpush1.bf16.msra.mxu0 0
      %509 = vmatprep.subr.bf16.mxu0 0
      %510 = vmatpush1.bf16.msra.mxu0 0
      %511 = vmatprep.subr.bf16.mxu0 0
      %512 = vmatpush1.bf16.msra.mxu0 0
      %513 = vmatprep.subr.bf16.mxu0 0
      %514 = vmatpush1.bf16.msra.mxu0 0
      %515 = vmatprep.subr.bf16.mxu0 0
      %516 = vmatpush1.bf16.msra.mxu0 0
      %517 = vmatprep.subr.bf16.mxu0 0
      %518 = vmatpush1.bf16.msra.mxu0 0
      %519 = vmatprep.subr.bf16.mxu0 0
      %520 = vmatpush1.bf16.msra.mxu0 0
      %521 = vmatprep.subr.bf16.mxu0 0
      %522 = vmatpush1.bf16.msra.mxu0 0
      %523 = vmatprep.mubr.bf16.mxu0 0
      %524 = vmatmul.mubr.bf16.gmra.mrb[0].mxu0 %v273
      %v525 = vpop.f32.mrb[0].mxu0
      %v526 = vadd.f32 %v314, %v525
      %v527 = vpop.f32.mrb[0].mxu0
      %v528 = vadd.f32 %v318, %v527
      %v529 = vpop.f32.mrb[0].mxu0
      %v530 = vadd.f32 %v314, %v529
      %v531 = vpop.f32.mrb[0].mxu0
      %v532 = vadd.f32 %v318, %v531
      %533 = vmatprep.mubr.bf16.mxu0 0
      %534 = vmatmul.mubr.bf16.gmra.mrb[0].mxu0 %v274
      %v535 = vpop.f32.mrb[0].mxu0
      %v536 = vadd.f32 %v314, %v535
      %v537 = vpop.f32.mrb[0].mxu0
      %v538 = vadd.f32 %v318, %v537
      %v539 = vpop.f32.mrb[0].mxu0
      %v540 = vadd.f32 %v314, %v539
      %v541 = vpop.f32.mrb[0].mxu0
      %v542 = vadd.f32 %v318, %v541
      %543 = vmatprep.mubr.bf16.mxu0 0
      %544 = vmatmul.mubr.bf16.gmra.mrb[0].mxu0 %v275
      %v545 = vpop.f32.mrb[0].mxu0
      %v546 = vadd.f32 %v314, %v545
      %v547 = vpop.f32.mrb[0].mxu0
      %v548 = vadd.f32 %v318, %v547
      %v549 = vpop.f32.mrb[0].mxu0
      %v550 = vadd.f32 %v314, %v549
      %v551 = vpop.f32.mrb[0].mxu0
      %v552 = vadd.f32 %v318, %v551
      %553 = vmatprep.mubr.bf16.mxu0 0
      %554 = vmatmul.mubr.bf16.gmra.mrb[0].mxu0 %v276
      %v555 = vpop.f32.mrb[0].mxu0
      %v556 = vadd.f32 %v314, %v555
      %v557 = vpop.f32.mrb[0].mxu0
      %v558 = vadd.f32 %v318, %v557
      %v559 = vpop.f32.mrb[0].mxu0
      %v560 = vadd.f32 %v314, %v559
      %v561 = vpop.f32.mrb[0].mxu0
      %v562 = vadd.f32 %v318, %v561
      %563 = vdwg.mxu0
      %564 = vmatprep.subr.bf16.mxu0 %v430
      %565 = vmatpush1.bf16.msra.mxu0 %v429
      %566 = vmatprep.subr.bf16.mxu0 %v434
      %567 = vmatpush1.bf16.msra.mxu0 %v433
      %568 = vmatprep.subr.bf16.mxu0 %v438
      %569 = vmatpush1.bf16.msra.mxu0 %v437
      %570 = vmatprep.subr.bf16.mxu0 %v442
      %571 = vmatpush1.bf16.msra.mxu0 %v441
      %572 = vmatprep.subr.bf16.mxu0 %v446
      %573 = vmatpush1.bf16.msra.mxu0 %v445
      %574 = vmatprep.subr.bf16.mxu0 %v450
      %575 = vmatpush1.bf16.msra.mxu0 %v449
      %576 = vmatprep.subr.bf16.mxu0 %v454
      %577 = vmatpush1.bf16.msra.mxu0 %v453
      %578 = vmatprep.subr.bf16.mxu0 %v458
      %579 = vmatpush1.bf16.msra.mxu0 %v457
      %580 = vmatprep.subr.bf16.mxu0 0
      %581 = vmatpush1.bf16.msra.mxu0 0
      %582 = vmatprep.subr.bf16.mxu0 0
      %583 = vmatpush1.bf16.msra.mxu0 0
      %584 = vmatprep.subr.bf16.mxu0 0
      %585 = vmatpush1.bf16.msra.mxu0 0
      %586 = vmatprep.subr.bf16.mxu0 0
      %587 = vmatpush1.bf16.msra.mxu0 0
      %588 = vmatprep.subr.bf16.mxu0 0
      %589 = vmatpush1.bf16.msra.mxu0 0
      %590 = vmatprep.subr.bf16.mxu0 0
      %591 = vmatpush1.bf16.msra.mxu0 0
      %592 = vmatprep.subr.bf16.mxu0 0
      %593 = vmatpush1.bf16.msra.mxu0 0
      %594 = vmatprep.subr.bf16.mxu0 0
      %595 = vmatpush1.bf16.msra.mxu0 0
      %596 = vmatprep.mubr.bf16.mxu0 0
      %597 = vmatmul.mubr.bf16.gmra.mrb[0].mxu0 %v273
      %v598 = vpop.f32.mrb[0].mxu0
      %v599 = vadd.f32 %v322, %v598
      %v600 = vpop.f32.mrb[0].mxu0
      %v601 = vadd.f32 %v326, %v600
      %v602 = vpop.f32.mrb[0].mxu0
      %v603 = vadd.f32 %v322, %v602
      %v604 = vpop.f32.mrb[0].mxu0
      %v605 = vadd.f32 %v326, %v604
      %606 = vmatprep.mubr.bf16.mxu0 0
      %607 = vmatmul.mubr.bf16.gmra.mrb[0].mxu0 %v274
      %v608 = vpop.f32.mrb[0].mxu0
      %v609 = vadd.f32 %v322, %v608
      %v610 = vpop.f32.mrb[0].mxu0
      %v611 = vadd.f32 %v326, %v610
      %v612 = vpop.f32.mrb[0].mxu0
      %v613 = vadd.f32 %v322, %v612
      %v614 = vpop.f32.mrb[0].mxu0
      %v615 = vadd.f32 %v326, %v614
      %616 = vmatprep.mubr.bf16.mxu0 0
      %617 = vmatmul.mubr.bf16.gmra.mrb[0].mxu0 %v275
      %v618 = vpop.f32.mrb[0].mxu0
      %v619 = vadd.f32 %v322, %v618
      %v620 = vpop.f32.mrb[0].mxu0
      %v621 = vadd.f32 %v326, %v620
      %v622 = vpop.f32.mrb[0].mxu0
      %v623 = vadd.f32 %v322, %v622
      %v624 = vpop.f32.mrb[0].mxu0
      %v625 = vadd.f32 %v326, %v624
      %626 = vmatprep.mubr.bf16.mxu0 0
      %627 = vmatmul.mubr.bf16.gmra.mrb[0].mxu0 %v276
      %v628 = vpop.f32.mrb[0].mxu0
      %v629 = vadd.f32 %v322, %v628
      %v630 = vpop.f32.mrb[0].mxu0
      %v631 = vadd.f32 %v326, %v630
      %v632 = vpop.f32.mrb[0].mxu0
      %v633 = vadd.f32 %v322, %v632
      %v634 = vpop.f32.mrb[0].mxu0
      %v635 = vadd.f32 %v326, %v634
      %636 = vdwg.mxu0
      %v637 = vmax.f32 %v526, 0.0
      %v638 = vmax.f32 %v528, 0.0
      %v639 = vmax.f32 %v599, 0.0
      %v640 = vmax.f32 %v601, 0.0
      %v641 = vmax.f32 %v530, 0.0
      %v642 = vmax.f32 %v532, 0.0
      %v643 = vmax.f32 %v603, 0.0
      %v644 = vmax.f32 %v605, 0.0
      %v645 = vmax.f32 %v536, 0.0
      %v646 = vmax.f32 %v538, 0.0
      %v647 = vmax.f32 %v609, 0.0
      %v648 = vmax.f32 %v611, 0.0
      %v649 = vmax.f32 %v540, 0.0
      %v650 = vmax.f32 %v542, 0.0
      %v651 = vmax.f32 %v613, 0.0
      %v652 = vmax.f32 %v615, 0.0
      %v653 = vmax.f32 %v546, 0.0
      %v654 = vmax.f32 %v548, 0.0
      %v655 = vmax.f32 %v619, 0.0
      %v656 = vmax.f32 %v621, 0.0
      %v657 = vmax.f32 %v550, 0.0
      %v658 = vmax.f32 %v552, 0.0
      %v659 = vmax.f32 %v623, 0.0
      %v660 = vmax.f32 %v625, 0.0
      %v661 = vmax.f32 %v556, 0.0
      %v662 = vmax.f32 %v558, 0.0
      %v663 = vmax.f32 %v629, 0.0
      %v664 = vmax.f32 %v631, 0.0
      %v665 = vmax.f32 %v560, 0.0
      %v666 = vmax.f32 %v562, 0.0
      %v667 = vmax.f32 %v633, 0.0
      %v668 = vmax.f32 %v635, 0.0
      %v669 = vmax.f32 %v637, %v638
      %v670 = vmax.f32 %v669, %v639
      %v671 = vmax.f32 %v670, %v640
      %672 = vmax.xlane.f32.xlu0 %v671
      %v673 = vpop.xlane.xlu0 %672
      %v674 = vmax.f32 %v641, %v642
      %v675 = vmax.f32 %v674, %v643
      %v676 = vmax.f32 %v675, %v644
      %677 = vmax.xlane.f32.xlu0 %v676
      %v678 = vpop.xlane.xlu0 %677
      %v679 = vmax.f32 %v645, %v646
      %v680 = vmax.f32 %v679, %v647
      %v681 = vmax.f32 %v680, %v648
      %682 = vmax.xlane.f32.xlu0 %v681
      %v683 = vpop.xlane.xlu0 %682
      %v684 = vmax.f32 %v649, %v650
      %v685 = vmax.f32 %v684, %v651
      %v686 = vmax.f32 %v685, %v652
      %687 = vmax.xlane.f32.xlu0 %v686
      %v688 = vpop.xlane.xlu0 %687
      %v689 = vmax.f32 %v653, %v654
      %v690 = vmax.f32 %v689, %v655
      %v691 = vmax.f32 %v690, %v656
      %692 = vmax.xlane.f32.xlu0 %v691
      %v693 = vpop.xlane.xlu0 %692
      %v694 = vmax.f32 %v657, %v658
      %v695 = vmax.f32 %v694, %v659
      %v696 = vmax.f32 %v695, %v660
      %697 = vmax.xlane.f32.xlu0 %v696
      %v698 = vpop.xlane.xlu0 %697
      %v699 = vmax.f32 %v661, %v662
      %v700 = vmax.f32 %v699, %v663
      %v701 = vmax.f32 %v700, %v664
      %702 = vmax.xlane.f32.xlu0 %v701
      %v703 = vpop.xlane.xlu0 %702
      %v704 = vmax.f32 %v665, %v666
      %v705 = vmax.f32 %v704, %v667
      %v706 = vmax.f32 %v705, %v668
      %707 = vmax.xlane.f32.xlu0 %v706
      %v708 = vpop.xlane.xlu0 %707
      %vm709 = vcmp.ge.f32.partialorder %v637, %v673
      %vm710 = vcmp.ge.f32.partialorder %v638, %v673
      %vm711 = vcmp.ge.f32.partialorder %v639, %v673
      %vm712 = vcmp.ge.f32.partialorder %v640, %v673
      %vm713 = vcmp.ge.f32.partialorder %v641, %v678
      %vm714 = vcmp.ge.f32.partialorder %v642, %v678
      %vm715 = vcmp.ge.f32.partialorder %v643, %v678
      %vm716 = vcmp.ge.f32.partialorder %v644, %v678
      %vm717 = vcmp.ge.f32.partialorder %v645, %v683
      %vm718 = vcmp.ge.f32.partialorder %v646, %v683
      %vm719 = vcmp.ge.f32.partialorder %v647, %v683
      %vm720 = vcmp.ge.f32.partialorder %v648, %v683
      %vm721 = vcmp.ge.f32.partialorder %v649, %v688
      %vm722 = vcmp.ge.f32.partialorder %v650, %v688
      %vm723 = vcmp.ge.f32.partialorder %v651, %v688
      %vm724 = vcmp.ge.f32.partialorder %v652, %v688
      %vm725 = vcmp.ge.f32.partialorder %v653, %v693
      %vm726 = vcmp.ge.f32.partialorder %v654, %v693
      %vm727 = vcmp.ge.f32.partialorder %v655, %v693
      %vm728 = vcmp.ge.f32.partialorder %v656, %v693
      %vm729 = vcmp.ge.f32.partialorder %v657, %v698
      %vm730 = vcmp.ge.f32.partialorder %v658, %v698
      %vm731 = vcmp.ge.f32.partialorder %v659, %v698
      %vm732 = vcmp.ge.f32.partialorder %v660, %v698
      %vm733 = vcmp.ge.f32.partialorder %v661, %v703
      %vm734 = vcmp.ge.f32.partialorder %v662, %v703
      %vm735 = vcmp.ge.f32.partialorder %v663, %v703
      %vm736 = vcmp.ge.f32.partialorder %v664, %v703
      %vm737 = vcmp.ge.f32.partialorder %v665, %v708
      %vm738 = vcmp.ge.f32.partialorder %v666, %v708
      %vm739 = vcmp.ge.f32.partialorder %v667, %v708
      %vm740 = vcmp.ge.f32.partialorder %v668, %v708
      %v741 = vsel %vm709, -inf, %v637
      %v742 = vsel %vm710, -inf, %v638
      %v743 = vsel %vm711, -inf, %v639
      %v744 = vsel %vm712, -inf, %v640
      %v745 = vsel %vm713, -inf, %v641
      %v746 = vsel %vm714, -inf, %v642
      %v747 = vsel %vm715, -inf, %v643
      %v748 = vsel %vm716, -inf, %v644
      %v749 = vsel %vm717, -inf, %v645
      %v750 = vsel %vm718, -inf, %v646
      %v751 = vsel %vm719, -inf, %v647
      %v752 = vsel %vm720, -inf, %v648
      %v753 = vsel %vm721, -inf, %v649
      %v754 = vsel %vm722, -inf, %v650
      %v755 = vsel %vm723, -inf, %v651
      %v756 = vsel %vm724, -inf, %v652
      %v757 = vsel %vm725, -inf, %v653
      %v758 = vsel %vm726, -inf, %v654
      %v759 = vsel %vm727, -inf, %v655
      %v760 = vsel %vm728, -inf, %v656
      %v761 = vsel %vm729, -inf, %v657
      %v762 = vsel %vm730, -inf, %v658
      %v763 = vsel %vm731, -inf, %v659
      %v764 = vsel %vm732, -inf, %v660
      %v765 = vsel %vm733, -inf, %v661
      %v766 = vsel %vm734, -inf, %v662
      %v767 = vsel %vm735, -inf, %v663
      %v768 = vsel %vm736, -inf, %v664
      %v769 = vsel %vm737, -inf, %v665
      %v770 = vsel %vm738, -inf, %v666
      %v771 = vsel %vm739, -inf, %v667
      %v772 = vsel %vm740, -inf, %v668
      %v773 = vmax.f32 %v741, %v742
      %v774 = vmax.f32 %v773, %v743
      %v775 = vmax.f32 %v774, %v744
      %776 = vmax.xlane.f32.xlu0 %v775
      %v777 = vpop.xlane.xlu0 %776
      %v778 = vmax.f32 %v745, %v746
      %v779 = vmax.f32 %v778, %v747
      %v780 = vmax.f32 %v779, %v748
      %781 = vmax.xlane.f32.xlu0 %v780
      %v782 = vpop.xlane.xlu0 %781
      %v783 = vmax.f32 %v749, %v750
      %v784 = vmax.f32 %v783, %v751
      %v785 = vmax.f32 %v784, %v752
      %786 = vmax.xlane.f32.xlu0 %v785
      %v787 = vpop.xlane.xlu0 %786
      %v788 = vmax.f32 %v753, %v754
      %v789 = vmax.f32 %v788, %v755
      %v790 = vmax.f32 %v789, %v756
      %791 = vmax.xlane.f32.xlu0 %v790
      %v792 = vpop.xlane.xlu0 %791
      %v793 = vmax.f32 %v757, %v758
      %v794 = vmax.f32 %v793, %v759
      %v795 = vmax.f32 %v794, %v760
      %796 = vmax.xlane.f32.xlu0 %v795
      %v797 = vpop.xlane.xlu0 %796
      %v798 = vmax.f32 %v761, %v762
      %v799 = vmax.f32 %v798, %v763
      %v800 = vmax.f32 %v799, %v764
      %801 = vmax.xlane.f32.xlu0 %v800
      %v802 = vpop.xlane.xlu0 %801
      %v803 = vmax.f32 %v765, %v766
      %v804 = vmax.f32 %v803, %v767
      %v805 = vmax.f32 %v804, %v768
      %806 = vmax.xlane.f32.xlu0 %v805
      %v807 = vpop.xlane.xlu0 %806
      %v808 = vmax.f32 %v769, %v770
      %v809 = vmax.f32 %v808, %v771
      %v810 = vmax.f32 %v809, %v772
      %811 = vmax.xlane.f32.xlu0 %v810
      %v812 = vpop.xlane.xlu0 %811
      %vm813 = vcmp.ge.f32.partialorder %v637, %v777
      %vm814 = vcmp.ge.f32.partialorder %v638, %v777
      %vm815 = vcmp.ge.f32.partialorder %v639, %v777
      %vm816 = vcmp.ge.f32.partialorder %v640, %v777
      %vm817 = vcmp.ge.f32.partialorder %v641, %v782
      %vm818 = vcmp.ge.f32.partialorder %v642, %v782
      %vm819 = vcmp.ge.f32.partialorder %v643, %v782
      %vm820 = vcmp.ge.f32.partialorder %v644, %v782
      %vm821 = vcmp.ge.f32.partialorder %v645, %v787
      %vm822 = vcmp.ge.f32.partialorder %v646, %v787
      %vm823 = vcmp.ge.f32.partialorder %v647, %v787
      %vm824 = vcmp.ge.f32.partialorder %v648, %v787
      %vm825 = vcmp.ge.f32.partialorder %v649, %v792
      %vm826 = vcmp.ge.f32.partialorder %v650, %v792
      %vm827 = vcmp.ge.f32.partialorder %v651, %v792
      %vm828 = vcmp.ge.f32.partialorder %v652, %v792
      %vm829 = vcmp.ge.f32.partialorder %v653, %v797
      %vm830 = vcmp.ge.f32.partialorder %v654, %v797
      %vm831 = vcmp.ge.f32.partialorder %v655, %v797
      %vm832 = vcmp.ge.f32.partialorder %v656, %v797
      %vm833 = vcmp.ge.f32.partialorder %v657, %v802
      %vm834 = vcmp.ge.f32.partialorder %v658, %v802
      %vm835 = vcmp.ge.f32.partialorder %v659, %v802
      %vm836 = vcmp.ge.f32.partialorder %v660, %v802
      %vm837 = vcmp.ge.f32.partialorder %v661, %v807
      %vm838 = vcmp.ge.f32.partialorder %v662, %v807
      %vm839 = vcmp.ge.f32.partialorder %v663, %v807
      %vm840 = vcmp.ge.f32.partialorder %v664, %v807
      %vm841 = vcmp.ge.f32.partialorder %v665, %v812
      %vm842 = vcmp.ge.f32.partialorder %v666, %v812
      %vm843 = vcmp.ge.f32.partialorder %v667, %v812
      %vm844 = vcmp.ge.f32.partialorder %v668, %v812
      %v845 = vsel %vm813, -inf, %v637
      %v846 = vsel %vm814, -inf, %v638
      %v847 = vsel %vm815, -inf, %v639
      %v848 = vsel %vm816, -inf, %v640
      %v849 = vsel %vm817, -inf, %v641
      %v850 = vsel %vm818, -inf, %v642
      %v851 = vsel %vm819, -inf, %v643
      %v852 = vsel %vm820, -inf, %v644
      %v853 = vsel %vm821, -inf, %v645
      %v854 = vsel %vm822, -inf, %v646
      %v855 = vsel %vm823, -inf, %v647
      %v856 = vsel %vm824, -inf, %v648
      %v857 = vsel %vm825, -inf, %v649
      %v858 = vsel %vm826, -inf, %v650
      %v859 = vsel %vm827, -inf, %v651
      %v860 = vsel %vm828, -inf, %v652
      %v861 = vsel %vm829, -inf, %v653
      %v862 = vsel %vm830, -inf, %v654
      %v863 = vsel %vm831, -inf, %v655
      %v864 = vsel %vm832, -inf, %v656
      %v865 = vsel %vm833, -inf, %v657
      %v866 = vsel %vm834, -inf, %v658
      %v867 = vsel %vm835, -inf, %v659
      %v868 = vsel %vm836, -inf, %v660
      %v869 = vsel %vm837, -inf, %v661
      %v870 = vsel %vm838, -inf, %v662
      %v871 = vsel %vm839, -inf, %v663
      %v872 = vsel %vm840, -inf, %v664
      %v873 = vsel %vm841, -inf, %v665
      %v874 = vsel %vm842, -inf, %v666
      %v875 = vsel %vm843, -inf, %v667
      %v876 = vsel %vm844, -inf, %v668
      %v877 = vmax.f32 %v845, %v846
      %v878 = vmax.f32 %v877, %v847
      %v879 = vmax.f32 %v878, %v848
      %880 = vmax.xlane.f32.xlu0 %v879
      %v881 = vpop.xlane.xlu0 %880
      %v882 = vmax.f32 %v849, %v850
      %v883 = vmax.f32 %v882, %v851
      %v884 = vmax.f32 %v883, %v852
      %885 = vmax.xlane.f32.xlu0 %v884
      %v886 = vpop.xlane.xlu0 %885
      %v887 = vmax.f32 %v853, %v854
      %v888 = vmax.f32 %v887, %v855
      %v889 = vmax.f32 %v888, %v856
      %890 = vmax.xlane.f32.xlu0 %v889
      %v891 = vpop.xlane.xlu0 %890
      %v892 = vmax.f32 %v857, %v858
      %v893 = vmax.f32 %v892, %v859
      %v894 = vmax.f32 %v893, %v860
      %895 = vmax.xlane.f32.xlu0 %v894
      %v896 = vpop.xlane.xlu0 %895
      %v897 = vmax.f32 %v861, %v862
      %v898 = vmax.f32 %v897, %v863
      %v899 = vmax.f32 %v898, %v864
      %900 = vmax.xlane.f32.xlu0 %v899
      %v901 = vpop.xlane.xlu0 %900
      %v902 = vmax.f32 %v865, %v866
      %v903 = vmax.f32 %v902, %v867
      %v904 = vmax.f32 %v903, %v868
      %905 = vmax.xlane.f32.xlu0 %v904
      %v906 = vpop.xlane.xlu0 %905
      %v907 = vmax.f32 %v869, %v870
      %v908 = vmax.f32 %v907, %v871
      %v909 = vmax.f32 %v908, %v872
      %910 = vmax.xlane.f32.xlu0 %v909
      %v911 = vpop.xlane.xlu0 %910
      %v912 = vmax.f32 %v873, %v874
      %v913 = vmax.f32 %v912, %v875
      %v914 = vmax.f32 %v913, %v876
      %915 = vmax.xlane.f32.xlu0 %v914
      %v916 = vpop.xlane.xlu0 %915
      %vm917 = vcmp.ge.f32.partialorder %v637, %v881
      %vm918 = vcmp.ge.f32.partialorder %v638, %v881
      %vm919 = vcmp.ge.f32.partialorder %v639, %v881
      %vm920 = vcmp.ge.f32.partialorder %v640, %v881
      %vm921 = vcmp.ge.f32.partialorder %v641, %v886
      %vm922 = vcmp.ge.f32.partialorder %v642, %v886
      %vm923 = vcmp.ge.f32.partialorder %v643, %v886
      %vm924 = vcmp.ge.f32.partialorder %v644, %v886
      %vm925 = vcmp.ge.f32.partialorder %v645, %v891
      %vm926 = vcmp.ge.f32.partialorder %v646, %v891
      %vm927 = vcmp.ge.f32.partialorder %v647, %v891
      %vm928 = vcmp.ge.f32.partialorder %v648, %v891
      %vm929 = vcmp.ge.f32.partialorder %v649, %v896
      %vm930 = vcmp.ge.f32.partialorder %v650, %v896
      %vm931 = vcmp.ge.f32.partialorder %v651, %v896
      %vm932 = vcmp.ge.f32.partialorder %v652, %v896
      %vm933 = vcmp.ge.f32.partialorder %v653, %v901
      %vm934 = vcmp.ge.f32.partialorder %v654, %v901
      %vm935 = vcmp.ge.f32.partialorder %v655, %v901
      %vm936 = vcmp.ge.f32.partialorder %v656, %v901
      %vm937 = vcmp.ge.f32.partialorder %v657, %v906
      %vm938 = vcmp.ge.f32.partialorder %v658, %v906
      %vm939 = vcmp.ge.f32.partialorder %v659, %v906
      %vm940 = vcmp.ge.f32.partialorder %v660, %v906
      %vm941 = vcmp.ge.f32.partialorder %v661, %v911
      %vm942 = vcmp.ge.f32.partialorder %v662, %v911
      %vm943 = vcmp.ge.f32.partialorder %v663, %v911
      %vm944 = vcmp.ge.f32.partialorder %v664, %v911
      %vm945 = vcmp.ge.f32.partialorder %v665, %v916
      %vm946 = vcmp.ge.f32.partialorder %v666, %v916
      %vm947 = vcmp.ge.f32.partialorder %v667, %v916
      %vm948 = vcmp.ge.f32.partialorder %v668, %v916
      %v949 = vsel %vm917, -inf, %v637
      %v950 = vsel %vm918, -inf, %v638
      %v951 = vsel %vm919, -inf, %v639
      %v952 = vsel %vm920, -inf, %v640
      %v953 = vsel %vm921, -inf, %v641
      %v954 = vsel %vm922, -inf, %v642
      %v955 = vsel %vm923, -inf, %v643
      %v956 = vsel %vm924, -inf, %v644
      %v957 = vsel %vm925, -inf, %v645
      %v958 = vsel %vm926, -inf, %v646
      %v959 = vsel %vm927, -inf, %v647
      %v960 = vsel %vm928, -inf, %v648
      %v961 = vsel %vm929, -inf, %v649
      %v962 = vsel %vm930, -inf, %v650
      %v963 = vsel %vm931, -inf, %v651
      %v964 = vsel %vm932, -inf, %v652
      %v965 = vsel %vm933, -inf, %v653
      %v966 = vsel %vm934, -inf, %v654
      %v967 = vsel %vm935, -inf, %v655
      %v968 = vsel %vm936, -inf, %v656
      %v969 = vsel %vm937, -inf, %v657
      %v970 = vsel %vm938, -inf, %v658
      %v971 = vsel %vm939, -inf, %v659
      %v972 = vsel %vm940, -inf, %v660
      %v973 = vsel %vm941, -inf, %v661
      %v974 = vsel %vm942, -inf, %v662
      %v975 = vsel %vm943, -inf, %v663
      %v976 = vsel %vm944, -inf, %v664
      %v977 = vsel %vm945, -inf, %v665
      %v978 = vsel %vm946, -inf, %v666
      %v979 = vsel %vm947, -inf, %v667
      %v980 = vsel %vm948, -inf, %v668
      %v981 = vmax.f32 %v949, %v950
      %v982 = vmax.f32 %v981, %v951
      %v983 = vmax.f32 %v982, %v952
      %984 = vmax.xlane.f32.xlu0 %v983
      %v985 = vpop.xlane.xlu0 %984
      %v986 = vmax.f32 %v953, %v954
      %v987 = vmax.f32 %v986, %v955
      %v988 = vmax.f32 %v987, %v956
      %989 = vmax.xlane.f32.xlu0 %v988
      %v990 = vpop.xlane.xlu0 %989
      %v991 = vmax.f32 %v957, %v958
      %v992 = vmax.f32 %v991, %v959
      %v993 = vmax.f32 %v992, %v960
      %994 = vmax.xlane.f32.xlu0 %v993
      %v995 = vpop.xlane.xlu0 %994
      %v996 = vmax.f32 %v961, %v962
      %v997 = vmax.f32 %v996, %v963
      %v998 = vmax.f32 %v997, %v964
      %999 = vmax.xlane.f32.xlu0 %v998
      %v1000 = vpop.xlane.xlu0 %999
      %v1001 = vmax.f32 %v965, %v966
      %v1002 = vmax.f32 %v1001, %v967
      %v1003 = vmax.f32 %v1002, %v968
      %1004 = vmax.xlane.f32.xlu0 %v1003
      %v1005 = vpop.xlane.xlu0 %1004
      %v1006 = vmax.f32 %v969, %v970
      %v1007 = vmax.f32 %v1006, %v971
      %v1008 = vmax.f32 %v1007, %v972
      %1009 = vmax.xlane.f32.xlu0 %v1008
      %v1010 = vpop.xlane.xlu0 %1009
      %v1011 = vmax.f32 %v973, %v974
      %v1012 = vmax.f32 %v1011, %v975
      %v1013 = vmax.f32 %v1012, %v976
      %1014 = vmax.xlane.f32.xlu0 %v1013
      %v1015 = vpop.xlane.xlu0 %1014
      %v1016 = vmax.f32 %v977, %v978
      %v1017 = vmax.f32 %v1016, %v979
      %v1018 = vmax.f32 %v1017, %v980
      %1019 = vmax.xlane.f32.xlu0 %v1018
      %v1020 = vpop.xlane.xlu0 %1019
      %vm1021 = vcmp.ge.f32.partialorder %v637, %v985
      %vm1022 = vcmp.ge.f32.partialorder %v638, %v985
      %vm1023 = vcmp.ge.f32.partialorder %v639, %v985
      %vm1024 = vcmp.ge.f32.partialorder %v640, %v985
      %vm1025 = vcmp.ge.f32.partialorder %v641, %v990
      %vm1026 = vcmp.ge.f32.partialorder %v642, %v990
      %vm1027 = vcmp.ge.f32.partialorder %v643, %v990
      %vm1028 = vcmp.ge.f32.partialorder %v644, %v990
      %vm1029 = vcmp.ge.f32.partialorder %v645, %v995
      %vm1030 = vcmp.ge.f32.partialorder %v646, %v995
      %vm1031 = vcmp.ge.f32.partialorder %v647, %v995
      %vm1032 = vcmp.ge.f32.partialorder %v648, %v995
      %vm1033 = vcmp.ge.f32.partialorder %v649, %v1000
      %vm1034 = vcmp.ge.f32.partialorder %v650, %v1000
      %vm1035 = vcmp.ge.f32.partialorder %v651, %v1000
      %vm1036 = vcmp.ge.f32.partialorder %v652, %v1000
      %vm1037 = vcmp.ge.f32.partialorder %v653, %v1005
      %vm1038 = vcmp.ge.f32.partialorder %v654, %v1005
      %vm1039 = vcmp.ge.f32.partialorder %v655, %v1005
      %vm1040 = vcmp.ge.f32.partialorder %v656, %v1005
      %vm1041 = vcmp.ge.f32.partialorder %v657, %v1010
      %vm1042 = vcmp.ge.f32.partialorder %v658, %v1010
      %vm1043 = vcmp.ge.f32.partialorder %v659, %v1010
      %vm1044 = vcmp.ge.f32.partialorder %v660, %v1010
      %vm1045 = vcmp.ge.f32.partialorder %v661, %v1015
      %vm1046 = vcmp.ge.f32.partialorder %v662, %v1015
      %vm1047 = vcmp.ge.f32.partialorder %v663, %v1015
      %vm1048 = vcmp.ge.f32.partialorder %v664, %v1015
      %vm1049 = vcmp.ge.f32.partialorder %v665, %v1020
      %vm1050 = vcmp.ge.f32.partialorder %v666, %v1020
      %vm1051 = vcmp.ge.f32.partialorder %v667, %v1020
      %vm1052 = vcmp.ge.f32.partialorder %v668, %v1020
      %v1053 = vsel %vm1021, -inf, %v637
      %v1054 = vsel %vm1022, -inf, %v638
      %v1055 = vsel %vm1023, -inf, %v639
      %v1056 = vsel %vm1024, -inf, %v640
      %v1057 = vsel %vm1025, -inf, %v641
      %v1058 = vsel %vm1026, -inf, %v642
      %v1059 = vsel %vm1027, -inf, %v643
      %v1060 = vsel %vm1028, -inf, %v644
      %v1061 = vsel %vm1029, -inf, %v645
      %v1062 = vsel %vm1030, -inf, %v646
      %v1063 = vsel %vm1031, -inf, %v647
      %v1064 = vsel %vm1032, -inf, %v648
      %v1065 = vsel %vm1033, -inf, %v649
      %v1066 = vsel %vm1034, -inf, %v650
      %v1067 = vsel %vm1035, -inf, %v651
      %v1068 = vsel %vm1036, -inf, %v652
      %v1069 = vsel %vm1037, -inf, %v653
      %v1070 = vsel %vm1038, -inf, %v654
      %v1071 = vsel %vm1039, -inf, %v655
      %v1072 = vsel %vm1040, -inf, %v656
      %v1073 = vsel %vm1041, -inf, %v657
      %v1074 = vsel %vm1042, -inf, %v658
      %v1075 = vsel %vm1043, -inf, %v659
      %v1076 = vsel %vm1044, -inf, %v660
      %v1077 = vsel %vm1045, -inf, %v661
      %v1078 = vsel %vm1046, -inf, %v662
      %v1079 = vsel %vm1047, -inf, %v663
      %v1080 = vsel %vm1048, -inf, %v664
      %v1081 = vsel %vm1049, -inf, %v665
      %v1082 = vsel %vm1050, -inf, %v666
      %v1083 = vsel %vm1051, -inf, %v667
      %v1084 = vsel %vm1052, -inf, %v668
      %v1085 = vmax.f32 %v1053, %v1054
      %v1086 = vmax.f32 %v1085, %v1055
      %v1087 = vmax.f32 %v1086, %v1056
      %1088 = vmax.xlane.f32.xlu0 %v1087
      %v1089 = vpop.xlane.xlu0 %1088
      %v1090 = vmax.f32 %v1057, %v1058
      %v1091 = vmax.f32 %v1090, %v1059
      %v1092 = vmax.f32 %v1091, %v1060
      %1093 = vmax.xlane.f32.xlu0 %v1092
      %v1094 = vpop.xlane.xlu0 %1093
      %v1095 = vmax.f32 %v1061, %v1062
      %v1096 = vmax.f32 %v1095, %v1063
      %v1097 = vmax.f32 %v1096, %v1064
      %1098 = vmax.xlane.f32.xlu0 %v1097
      %v1099 = vpop.xlane.xlu0 %1098
      %v1100 = vmax.f32 %v1065, %v1066
      %v1101 = vmax.f32 %v1100, %v1067
      %v1102 = vmax.f32 %v1101, %v1068
      %1103 = vmax.xlane.f32.xlu0 %v1102
      %v1104 = vpop.xlane.xlu0 %1103
      %v1105 = vmax.f32 %v1069, %v1070
      %v1106 = vmax.f32 %v1105, %v1071
      %v1107 = vmax.f32 %v1106, %v1072
      %1108 = vmax.xlane.f32.xlu0 %v1107
      %v1109 = vpop.xlane.xlu0 %1108
      %v1110 = vmax.f32 %v1073, %v1074
      %v1111 = vmax.f32 %v1110, %v1075
      %v1112 = vmax.f32 %v1111, %v1076
      %1113 = vmax.xlane.f32.xlu0 %v1112
      %v1114 = vpop.xlane.xlu0 %1113
      %v1115 = vmax.f32 %v1077, %v1078
      %v1116 = vmax.f32 %v1115, %v1079
      %v1117 = vmax.f32 %v1116, %v1080
      %1118 = vmax.xlane.f32.xlu0 %v1117
      %v1119 = vpop.xlane.xlu0 %1118
      %v1120 = vmax.f32 %v1081, %v1082
      %v1121 = vmax.f32 %v1120, %v1083
      %v1122 = vmax.f32 %v1121, %v1084
      %1123 = vmax.xlane.f32.xlu0 %v1122
      %v1124 = vpop.xlane.xlu0 %1123
      %vm1125 = vcmp.ge.f32.partialorder %v637, %v1089
      %vm1126 = vcmp.ge.f32.partialorder %v638, %v1089
      %vm1127 = vcmp.ge.f32.partialorder %v639, %v1089
      %vm1128 = vcmp.ge.f32.partialorder %v640, %v1089
      %vm1129 = vcmp.ge.f32.partialorder %v641, %v1094
      %vm1130 = vcmp.ge.f32.partialorder %v642, %v1094
      %vm1131 = vcmp.ge.f32.partialorder %v643, %v1094
      %vm1132 = vcmp.ge.f32.partialorder %v644, %v1094
      %vm1133 = vcmp.ge.f32.partialorder %v645, %v1099
      %vm1134 = vcmp.ge.f32.partialorder %v646, %v1099
      %vm1135 = vcmp.ge.f32.partialorder %v647, %v1099
      %vm1136 = vcmp.ge.f32.partialorder %v648, %v1099
      %vm1137 = vcmp.ge.f32.partialorder %v649, %v1104
      %vm1138 = vcmp.ge.f32.partialorder %v650, %v1104
      %vm1139 = vcmp.ge.f32.partialorder %v651, %v1104
      %vm1140 = vcmp.ge.f32.partialorder %v652, %v1104
      %vm1141 = vcmp.ge.f32.partialorder %v653, %v1109
      %vm1142 = vcmp.ge.f32.partialorder %v654, %v1109
      %vm1143 = vcmp.ge.f32.partialorder %v655, %v1109
      %vm1144 = vcmp.ge.f32.partialorder %v656, %v1109
      %vm1145 = vcmp.ge.f32.partialorder %v657, %v1114
      %vm1146 = vcmp.ge.f32.partialorder %v658, %v1114
      %vm1147 = vcmp.ge.f32.partialorder %v659, %v1114
      %vm1148 = vcmp.ge.f32.partialorder %v660, %v1114
      %vm1149 = vcmp.ge.f32.partialorder %v661, %v1119
      %vm1150 = vcmp.ge.f32.partialorder %v662, %v1119
      %vm1151 = vcmp.ge.f32.partialorder %v663, %v1119
      %vm1152 = vcmp.ge.f32.partialorder %v664, %v1119
      %vm1153 = vcmp.ge.f32.partialorder %v665, %v1124
      %vm1154 = vcmp.ge.f32.partialorder %v666, %v1124
      %vm1155 = vcmp.ge.f32.partialorder %v667, %v1124
      %vm1156 = vcmp.ge.f32.partialorder %v668, %v1124
      %v1157 = vsel %vm1125, -inf, %v637
      %v1158 = vsel %vm1126, -inf, %v638
      %v1159 = vsel %vm1127, -inf, %v639
      %v1160 = vsel %vm1128, -inf, %v640
      %v1161 = vsel %vm1129, -inf, %v641
      %v1162 = vsel %vm1130, -inf, %v642
      %v1163 = vsel %vm1131, -inf, %v643
      %v1164 = vsel %vm1132, -inf, %v644
      %v1165 = vsel %vm1133, -inf, %v645
      %v1166 = vsel %vm1134, -inf, %v646
      %v1167 = vsel %vm1135, -inf, %v647
      %v1168 = vsel %vm1136, -inf, %v648
      %v1169 = vsel %vm1137, -inf, %v649
      %v1170 = vsel %vm1138, -inf, %v650
      %v1171 = vsel %vm1139, -inf, %v651
      %v1172 = vsel %vm1140, -inf, %v652
      %v1173 = vsel %vm1141, -inf, %v653
      %v1174 = vsel %vm1142, -inf, %v654
      %v1175 = vsel %vm1143, -inf, %v655
      %v1176 = vsel %vm1144, -inf, %v656
      %v1177 = vsel %vm1145, -inf, %v657
      %v1178 = vsel %vm1146, -inf, %v658
      %v1179 = vsel %vm1147, -inf, %v659
      %v1180 = vsel %vm1148, -inf, %v660
      %v1181 = vsel %vm1149, -inf, %v661
      %v1182 = vsel %vm1150, -inf, %v662
      %v1183 = vsel %vm1151, -inf, %v663
      %v1184 = vsel %vm1152, -inf, %v664
      %v1185 = vsel %vm1153, -inf, %v665
      %v1186 = vsel %vm1154, -inf, %v666
      %v1187 = vsel %vm1155, -inf, %v667
      %v1188 = vsel %vm1156, -inf, %v668
      %v1189 = vmax.f32 %v1157, %v1158
      %v1190 = vmax.f32 %v1189, %v1159
      %v1191 = vmax.f32 %v1190, %v1160
      %1192 = vmax.xlane.f32.xlu0 %v1191
      %v1193 = vpop.xlane.xlu0 %1192
      %v1194 = vmax.f32 %v1161, %v1162
      %v1195 = vmax.f32 %v1194, %v1163
      %v1196 = vmax.f32 %v1195, %v1164
      %1197 = vmax.xlane.f32.xlu0 %v1196
      %v1198 = vpop.xlane.xlu0 %1197
      %v1199 = vmax.f32 %v1165, %v1166
      %v1200 = vmax.f32 %v1199, %v1167
      %v1201 = vmax.f32 %v1200, %v1168
      %1202 = vmax.xlane.f32.xlu0 %v1201
      %v1203 = vpop.xlane.xlu0 %1202
      %v1204 = vmax.f32 %v1169, %v1170
      %v1205 = vmax.f32 %v1204, %v1171
      %v1206 = vmax.f32 %v1205, %v1172
      %1207 = vmax.xlane.f32.xlu0 %v1206
      %v1208 = vpop.xlane.xlu0 %1207
      %v1209 = vmax.f32 %v1173, %v1174
      %v1210 = vmax.f32 %v1209, %v1175
      %v1211 = vmax.f32 %v1210, %v1176
      %1212 = vmax.xlane.f32.xlu0 %v1211
      %v1213 = vpop.xlane.xlu0 %1212
      %v1214 = vmax.f32 %v1177, %v1178
      %v1215 = vmax.f32 %v1214, %v1179
      %v1216 = vmax.f32 %v1215, %v1180
      %1217 = vmax.xlane.f32.xlu0 %v1216
      %v1218 = vpop.xlane.xlu0 %1217
      %v1219 = vmax.f32 %v1181, %v1182
      %v1220 = vmax.f32 %v1219, %v1183
      %v1221 = vmax.f32 %v1220, %v1184
      %1222 = vmax.xlane.f32.xlu0 %v1221
      %v1223 = vpop.xlane.xlu0 %1222
      %v1224 = vmax.f32 %v1185, %v1186
      %v1225 = vmax.f32 %v1224, %v1187
      %v1226 = vmax.f32 %v1225, %v1188
      %1227 = vmax.xlane.f32.xlu0 %v1226
      %v1228 = vpop.xlane.xlu0 %1227
      %vm1229 = vcmp.ge.f32.partialorder %v637, %v1193
      %vm1230 = vcmp.ge.f32.partialorder %v638, %v1193
      %vm1231 = vcmp.ge.f32.partialorder %v639, %v1193
      %vm1232 = vcmp.ge.f32.partialorder %v640, %v1193
      %vm1233 = vcmp.ge.f32.partialorder %v641, %v1198
      %vm1234 = vcmp.ge.f32.partialorder %v642, %v1198
      %vm1235 = vcmp.ge.f32.partialorder %v643, %v1198
      %vm1236 = vcmp.ge.f32.partialorder %v644, %v1198
      %vm1237 = vcmp.ge.f32.partialorder %v645, %v1203
      %vm1238 = vcmp.ge.f32.partialorder %v646, %v1203
      %vm1239 = vcmp.ge.f32.partialorder %v647, %v1203
      %vm1240 = vcmp.ge.f32.partialorder %v648, %v1203
      %vm1241 = vcmp.ge.f32.partialorder %v649, %v1208
      %vm1242 = vcmp.ge.f32.partialorder %v650, %v1208
      %vm1243 = vcmp.ge.f32.partialorder %v651, %v1208
      %vm1244 = vcmp.ge.f32.partialorder %v652, %v1208
      %vm1245 = vcmp.ge.f32.partialorder %v653, %v1213
      %vm1246 = vcmp.ge.f32.partialorder %v654, %v1213
      %vm1247 = vcmp.ge.f32.partialorder %v655, %v1213
      %vm1248 = vcmp.ge.f32.partialorder %v656, %v1213
      %vm1249 = vcmp.ge.f32.partialorder %v657, %v1218
      %vm1250 = vcmp.ge.f32.partialorder %v658, %v1218
      %vm1251 = vcmp.ge.f32.partialorder %v659, %v1218
      %vm1252 = vcmp.ge.f32.partialorder %v660, %v1218
      %vm1253 = vcmp.ge.f32.partialorder %v661, %v1223
      %vm1254 = vcmp.ge.f32.partialorder %v662, %v1223
      %vm1255 = vcmp.ge.f32.partialorder %v663, %v1223
      %vm1256 = vcmp.ge.f32.partialorder %v664, %v1223
      %vm1257 = vcmp.ge.f32.partialorder %v665, %v1228
      %vm1258 = vcmp.ge.f32.partialorder %v666, %v1228
      %vm1259 = vcmp.ge.f32.partialorder %v667, %v1228
      %vm1260 = vcmp.ge.f32.partialorder %v668, %v1228
      %v1261 = vsel %vm1229, -inf, %v637
      %v1262 = vsel %vm1230, -inf, %v638
      %v1263 = vsel %vm1231, -inf, %v639
      %v1264 = vsel %vm1232, -inf, %v640
      %v1265 = vsel %vm1233, -inf, %v641
      %v1266 = vsel %vm1234, -inf, %v642
      %v1267 = vsel %vm1235, -inf, %v643
      %v1268 = vsel %vm1236, -inf, %v644
      %v1269 = vsel %vm1237, -inf, %v645
      %v1270 = vsel %vm1238, -inf, %v646
      %v1271 = vsel %vm1239, -inf, %v647
      %v1272 = vsel %vm1240, -inf, %v648
      %v1273 = vsel %vm1241, -inf, %v649
      %v1274 = vsel %vm1242, -inf, %v650
      %v1275 = vsel %vm1243, -inf, %v651
      %v1276 = vsel %vm1244, -inf, %v652
      %v1277 = vsel %vm1245, -inf, %v653
      %v1278 = vsel %vm1246, -inf, %v654
      %v1279 = vsel %vm1247, -inf, %v655
      %v1280 = vsel %vm1248, -inf, %v656
      %v1281 = vsel %vm1249, -inf, %v657
      %v1282 = vsel %vm1250, -inf, %v658
      %v1283 = vsel %vm1251, -inf, %v659
      %v1284 = vsel %vm1252, -inf, %v660
      %v1285 = vsel %vm1253, -inf, %v661
      %v1286 = vsel %vm1254, -inf, %v662
      %v1287 = vsel %vm1255, -inf, %v663
      %v1288 = vsel %vm1256, -inf, %v664
      %v1289 = vsel %vm1257, -inf, %v665
      %v1290 = vsel %vm1258, -inf, %v666
      %v1291 = vsel %vm1259, -inf, %v667
      %v1292 = vsel %vm1260, -inf, %v668
      %v1293 = vmax.f32 %v1261, %v1262
      %v1294 = vmax.f32 %v1293, %v1263
      %v1295 = vmax.f32 %v1294, %v1264
      %1296 = vmax.xlane.f32.xlu0 %v1295
      %v1297 = vpop.xlane.xlu0 %1296
      %v1298 = vmax.f32 %v1265, %v1266
      %v1299 = vmax.f32 %v1298, %v1267
      %v1300 = vmax.f32 %v1299, %v1268
      %1301 = vmax.xlane.f32.xlu0 %v1300
      %v1302 = vpop.xlane.xlu0 %1301
      %v1303 = vmax.f32 %v1269, %v1270
      %v1304 = vmax.f32 %v1303, %v1271
      %v1305 = vmax.f32 %v1304, %v1272
      %1306 = vmax.xlane.f32.xlu0 %v1305
      %v1307 = vpop.xlane.xlu0 %1306
      %v1308 = vmax.f32 %v1273, %v1274
      %v1309 = vmax.f32 %v1308, %v1275
      %v1310 = vmax.f32 %v1309, %v1276
      %1311 = vmax.xlane.f32.xlu0 %v1310
      %v1312 = vpop.xlane.xlu0 %1311
      %v1313 = vmax.f32 %v1277, %v1278
      %v1314 = vmax.f32 %v1313, %v1279
      %v1315 = vmax.f32 %v1314, %v1280
      %1316 = vmax.xlane.f32.xlu0 %v1315
      %v1317 = vpop.xlane.xlu0 %1316
      %v1318 = vmax.f32 %v1281, %v1282
      %v1319 = vmax.f32 %v1318, %v1283
      %v1320 = vmax.f32 %v1319, %v1284
      %1321 = vmax.xlane.f32.xlu0 %v1320
      %v1322 = vpop.xlane.xlu0 %1321
      %v1323 = vmax.f32 %v1285, %v1286
      %v1324 = vmax.f32 %v1323, %v1287
      %v1325 = vmax.f32 %v1324, %v1288
      %1326 = vmax.xlane.f32.xlu0 %v1325
      %v1327 = vpop.xlane.xlu0 %1326
      %v1328 = vmax.f32 %v1289, %v1290
      %v1329 = vmax.f32 %v1328, %v1291
      %v1330 = vmax.f32 %v1329, %v1292
      %1331 = vmax.xlane.f32.xlu0 %v1330
      %v1332 = vpop.xlane.xlu0 %1331
      %vm1333 = vcmp.ge.f32.partialorder %v637, %v1297
      %vm1334 = vcmp.ge.f32.partialorder %v638, %v1297
      %vm1335 = vcmp.ge.f32.partialorder %v639, %v1297
      %vm1336 = vcmp.ge.f32.partialorder %v640, %v1297
      %vm1337 = vcmp.ge.f32.partialorder %v641, %v1302
      %vm1338 = vcmp.ge.f32.partialorder %v642, %v1302
      %vm1339 = vcmp.ge.f32.partialorder %v643, %v1302
      %vm1340 = vcmp.ge.f32.partialorder %v644, %v1302
      %vm1341 = vcmp.ge.f32.partialorder %v645, %v1307
      %vm1342 = vcmp.ge.f32.partialorder %v646, %v1307
      %vm1343 = vcmp.ge.f32.partialorder %v647, %v1307
      %vm1344 = vcmp.ge.f32.partialorder %v648, %v1307
      %vm1345 = vcmp.ge.f32.partialorder %v649, %v1312
      %vm1346 = vcmp.ge.f32.partialorder %v650, %v1312
      %vm1347 = vcmp.ge.f32.partialorder %v651, %v1312
      %vm1348 = vcmp.ge.f32.partialorder %v652, %v1312
      %vm1349 = vcmp.ge.f32.partialorder %v653, %v1317
      %vm1350 = vcmp.ge.f32.partialorder %v654, %v1317
      %vm1351 = vcmp.ge.f32.partialorder %v655, %v1317
      %vm1352 = vcmp.ge.f32.partialorder %v656, %v1317
      %vm1353 = vcmp.ge.f32.partialorder %v657, %v1322
      %vm1354 = vcmp.ge.f32.partialorder %v658, %v1322
      %vm1355 = vcmp.ge.f32.partialorder %v659, %v1322
      %vm1356 = vcmp.ge.f32.partialorder %v660, %v1322
      %vm1357 = vcmp.ge.f32.partialorder %v661, %v1327
      %vm1358 = vcmp.ge.f32.partialorder %v662, %v1327
      %vm1359 = vcmp.ge.f32.partialorder %v663, %v1327
      %vm1360 = vcmp.ge.f32.partialorder %v664, %v1327
      %vm1361 = vcmp.ge.f32.partialorder %v665, %v1332
      %vm1362 = vcmp.ge.f32.partialorder %v666, %v1332
      %vm1363 = vcmp.ge.f32.partialorder %v667, %v1332
      %vm1364 = vcmp.ge.f32.partialorder %v668, %v1332
      %v1365 = vsel %vm1333, -inf, %v637
      %v1366 = vsel %vm1334, -inf, %v638
      %v1367 = vsel %vm1335, -inf, %v639
      %v1368 = vsel %vm1336, -inf, %v640
      %v1369 = vsel %vm1337, -inf, %v641
      %v1370 = vsel %vm1338, -inf, %v642
      %v1371 = vsel %vm1339, -inf, %v643
      %v1372 = vsel %vm1340, -inf, %v644
      %v1373 = vsel %vm1341, -inf, %v645
      %v1374 = vsel %vm1342, -inf, %v646
      %v1375 = vsel %vm1343, -inf, %v647
      %v1376 = vsel %vm1344, -inf, %v648
      %v1377 = vsel %vm1345, -inf, %v649
      %v1378 = vsel %vm1346, -inf, %v650
      %v1379 = vsel %vm1347, -inf, %v651
      %v1380 = vsel %vm1348, -inf, %v652
      %v1381 = vsel %vm1349, -inf, %v653
      %v1382 = vsel %vm1350, -inf, %v654
      %v1383 = vsel %vm1351, -inf, %v655
      %v1384 = vsel %vm1352, -inf, %v656
      %v1385 = vsel %vm1353, -inf, %v657
      %v1386 = vsel %vm1354, -inf, %v658
      %v1387 = vsel %vm1355, -inf, %v659
      %v1388 = vsel %vm1356, -inf, %v660
      %v1389 = vsel %vm1357, -inf, %v661
      %v1390 = vsel %vm1358, -inf, %v662
      %v1391 = vsel %vm1359, -inf, %v663
      %v1392 = vsel %vm1360, -inf, %v664
      %v1393 = vsel %vm1361, -inf, %v665
      %v1394 = vsel %vm1362, -inf, %v666
      %v1395 = vsel %vm1363, -inf, %v667
      %v1396 = vsel %vm1364, -inf, %v668
      %v1397 = vmax.f32 %v1365, %v1366
      %v1398 = vmax.f32 %v1397, %v1367
      %v1399 = vmax.f32 %v1398, %v1368
      %1400 = vmax.xlane.f32.xlu0 %v1399
      %v1401 = vpop.xlane.xlu0 %1400
      %v1402 = vmax.f32 %v1369, %v1370
      %v1403 = vmax.f32 %v1402, %v1371
      %v1404 = vmax.f32 %v1403, %v1372
      %1405 = vmax.xlane.f32.xlu0 %v1404
      %v1406 = vpop.xlane.xlu0 %1405
      %v1407 = vmax.f32 %v1373, %v1374
      %v1408 = vmax.f32 %v1407, %v1375
      %v1409 = vmax.f32 %v1408, %v1376
      %1410 = vmax.xlane.f32.xlu0 %v1409
      %v1411 = vpop.xlane.xlu0 %1410
      %v1412 = vmax.f32 %v1377, %v1378
      %v1413 = vmax.f32 %v1412, %v1379
      %v1414 = vmax.f32 %v1413, %v1380
      %1415 = vmax.xlane.f32.xlu0 %v1414
      %v1416 = vpop.xlane.xlu0 %1415
      %v1417 = vmax.f32 %v1381, %v1382
      %v1418 = vmax.f32 %v1417, %v1383
      %v1419 = vmax.f32 %v1418, %v1384
      %1420 = vmax.xlane.f32.xlu0 %v1419
      %v1421 = vpop.xlane.xlu0 %1420
      %v1422 = vmax.f32 %v1385, %v1386
      %v1423 = vmax.f32 %v1422, %v1387
      %v1424 = vmax.f32 %v1423, %v1388
      %1425 = vmax.xlane.f32.xlu0 %v1424
      %v1426 = vpop.xlane.xlu0 %1425
      %v1427 = vmax.f32 %v1389, %v1390
      %v1428 = vmax.f32 %v1427, %v1391
      %v1429 = vmax.f32 %v1428, %v1392
      %1430 = vmax.xlane.f32.xlu0 %v1429
      %v1431 = vpop.xlane.xlu0 %1430
      %v1432 = vmax.f32 %v1393, %v1394
      %v1433 = vmax.f32 %v1432, %v1395
      %v1434 = vmax.f32 %v1433, %v1396
      %1435 = vmax.xlane.f32.xlu0 %v1434
      %v1436 = vpop.xlane.xlu0 %1435
      %vm1437 = vcmp.ge.f32.partialorder %v637, %v1401
      %vm1438 = vcmp.ge.f32.partialorder %v638, %v1401
      %vm1439 = vcmp.ge.f32.partialorder %v639, %v1401
      %vm1440 = vcmp.ge.f32.partialorder %v640, %v1401
      %vm1441 = vcmp.ge.f32.partialorder %v641, %v1406
      %vm1442 = vcmp.ge.f32.partialorder %v642, %v1406
      %vm1443 = vcmp.ge.f32.partialorder %v643, %v1406
      %vm1444 = vcmp.ge.f32.partialorder %v644, %v1406
      %vm1445 = vcmp.ge.f32.partialorder %v645, %v1411
      %vm1446 = vcmp.ge.f32.partialorder %v646, %v1411
      %vm1447 = vcmp.ge.f32.partialorder %v647, %v1411
      %vm1448 = vcmp.ge.f32.partialorder %v648, %v1411
      %vm1449 = vcmp.ge.f32.partialorder %v649, %v1416
      %vm1450 = vcmp.ge.f32.partialorder %v650, %v1416
      %vm1451 = vcmp.ge.f32.partialorder %v651, %v1416
      %vm1452 = vcmp.ge.f32.partialorder %v652, %v1416
      %vm1453 = vcmp.ge.f32.partialorder %v653, %v1421
      %vm1454 = vcmp.ge.f32.partialorder %v654, %v1421
      %vm1455 = vcmp.ge.f32.partialorder %v655, %v1421
      %vm1456 = vcmp.ge.f32.partialorder %v656, %v1421
      %vm1457 = vcmp.ge.f32.partialorder %v657, %v1426
      %vm1458 = vcmp.ge.f32.partialorder %v658, %v1426
      %vm1459 = vcmp.ge.f32.partialorder %v659, %v1426
      %vm1460 = vcmp.ge.f32.partialorder %v660, %v1426
      %vm1461 = vcmp.ge.f32.partialorder %v661, %v1431
      %vm1462 = vcmp.ge.f32.partialorder %v662, %v1431
      %vm1463 = vcmp.ge.f32.partialorder %v663, %v1431
      %vm1464 = vcmp.ge.f32.partialorder %v664, %v1431
      %vm1465 = vcmp.ge.f32.partialorder %v665, %v1436
      %vm1466 = vcmp.ge.f32.partialorder %v666, %v1436
      %vm1467 = vcmp.ge.f32.partialorder %v667, %v1436
      %vm1468 = vcmp.ge.f32.partialorder %v668, %v1436
      %v1469 = vsel %vm1437, -inf, %v637
      %v1470 = vsel %vm1438, -inf, %v638
      %v1471 = vsel %vm1439, -inf, %v639
      %v1472 = vsel %vm1440, -inf, %v640
      %v1473 = vsel %vm1441, -inf, %v641
      %v1474 = vsel %vm1442, -inf, %v642
      %v1475 = vsel %vm1443, -inf, %v643
      %v1476 = vsel %vm1444, -inf, %v644
      %v1477 = vsel %vm1445, -inf, %v645
      %v1478 = vsel %vm1446, -inf, %v646
      %v1479 = vsel %vm1447, -inf, %v647
      %v1480 = vsel %vm1448, -inf, %v648
      %v1481 = vsel %vm1449, -inf, %v649
      %v1482 = vsel %vm1450, -inf, %v650
      %v1483 = vsel %vm1451, -inf, %v651
      %v1484 = vsel %vm1452, -inf, %v652
      %v1485 = vsel %vm1453, -inf, %v653
      %v1486 = vsel %vm1454, -inf, %v654
      %v1487 = vsel %vm1455, -inf, %v655
      %v1488 = vsel %vm1456, -inf, %v656
      %v1489 = vsel %vm1457, -inf, %v657
      %v1490 = vsel %vm1458, -inf, %v658
      %v1491 = vsel %vm1459, -inf, %v659
      %v1492 = vsel %vm1460, -inf, %v660
      %v1493 = vsel %vm1461, -inf, %v661
      %v1494 = vsel %vm1462, -inf, %v662
      %v1495 = vsel %vm1463, -inf, %v663
      %v1496 = vsel %vm1464, -inf, %v664
      %v1497 = vsel %vm1465, -inf, %v665
      %v1498 = vsel %vm1466, -inf, %v666
      %v1499 = vsel %vm1467, -inf, %v667
      %v1500 = vsel %vm1468, -inf, %v668
      %v1501 = vmax.f32 %v1469, %v1470
      %v1502 = vmax.f32 %v1501, %v1471
      %v1503 = vmax.f32 %v1502, %v1472
      %1504 = vmax.xlane.f32.xlu0 %v1503
      %v1505 = vpop.xlane.xlu0 %1504
      %v1506 = vmax.f32 %v1473, %v1474
      %v1507 = vmax.f32 %v1506, %v1475
      %v1508 = vmax.f32 %v1507, %v1476
      %1509 = vmax.xlane.f32.xlu0 %v1508
      %v1510 = vpop.xlane.xlu0 %1509
      %v1511 = vmax.f32 %v1477, %v1478
      %v1512 = vmax.f32 %v1511, %v1479
      %v1513 = vmax.f32 %v1512, %v1480
      %1514 = vmax.xlane.f32.xlu0 %v1513
      %v1515 = vpop.xlane.xlu0 %1514
      %v1516 = vmax.f32 %v1481, %v1482
      %v1517 = vmax.f32 %v1516, %v1483
      %v1518 = vmax.f32 %v1517, %v1484
      %1519 = vmax.xlane.f32.xlu0 %v1518
      %v1520 = vpop.xlane.xlu0 %1519
      %v1521 = vmax.f32 %v1485, %v1486
      %v1522 = vmax.f32 %v1521, %v1487
      %v1523 = vmax.f32 %v1522, %v1488
      %1524 = vmax.xlane.f32.xlu0 %v1523
      %v1525 = vpop.xlane.xlu0 %1524
      %v1526 = vmax.f32 %v1489, %v1490
      %v1527 = vmax.f32 %v1526, %v1491
      %v1528 = vmax.f32 %v1527, %v1492
      %1529 = vmax.xlane.f32.xlu0 %v1528
      %v1530 = vpop.xlane.xlu0 %1529
      %v1531 = vmax.f32 %v1493, %v1494
      %v1532 = vmax.f32 %v1531, %v1495
      %v1533 = vmax.f32 %v1532, %v1496
      %1534 = vmax.xlane.f32.xlu0 %v1533
      %v1535 = vpop.xlane.xlu0 %1534
      %v1536 = vmax.f32 %v1497, %v1498
      %v1537 = vmax.f32 %v1536, %v1499
      %v1538 = vmax.f32 %v1537, %v1500
      %1539 = vmax.xlane.f32.xlu0 %v1538
      %v1540 = vpop.xlane.xlu0 %1539
      %vm1541 = vcmp.ge.f32.partialorder %v637, %v1505
      %vm1542 = vcmp.ge.f32.partialorder %v638, %v1505
      %vm1543 = vcmp.ge.f32.partialorder %v639, %v1505
      %vm1544 = vcmp.ge.f32.partialorder %v640, %v1505
      %vm1545 = vcmp.ge.f32.partialorder %v641, %v1510
      %vm1546 = vcmp.ge.f32.partialorder %v642, %v1510
      %vm1547 = vcmp.ge.f32.partialorder %v643, %v1510
      %vm1548 = vcmp.ge.f32.partialorder %v644, %v1510
      %vm1549 = vcmp.ge.f32.partialorder %v645, %v1515
      %vm1550 = vcmp.ge.f32.partialorder %v646, %v1515
      %vm1551 = vcmp.ge.f32.partialorder %v647, %v1515
      %vm1552 = vcmp.ge.f32.partialorder %v648, %v1515
      %vm1553 = vcmp.ge.f32.partialorder %v649, %v1520
      %vm1554 = vcmp.ge.f32.partialorder %v650, %v1520
      %vm1555 = vcmp.ge.f32.partialorder %v651, %v1520
      %vm1556 = vcmp.ge.f32.partialorder %v652, %v1520
      %vm1557 = vcmp.ge.f32.partialorder %v653, %v1525
      %vm1558 = vcmp.ge.f32.partialorder %v654, %v1525
      %vm1559 = vcmp.ge.f32.partialorder %v655, %v1525
      %vm1560 = vcmp.ge.f32.partialorder %v656, %v1525
      %vm1561 = vcmp.ge.f32.partialorder %v657, %v1530
      %vm1562 = vcmp.ge.f32.partialorder %v658, %v1530
      %vm1563 = vcmp.ge.f32.partialorder %v659, %v1530
      %vm1564 = vcmp.ge.f32.partialorder %v660, %v1530
      %vm1565 = vcmp.ge.f32.partialorder %v661, %v1535
      %vm1566 = vcmp.ge.f32.partialorder %v662, %v1535
      %vm1567 = vcmp.ge.f32.partialorder %v663, %v1535
      %vm1568 = vcmp.ge.f32.partialorder %v664, %v1535
      %vm1569 = vcmp.ge.f32.partialorder %v665, %v1540
      %vm1570 = vcmp.ge.f32.partialorder %v666, %v1540
      %vm1571 = vcmp.ge.f32.partialorder %v667, %v1540
      %vm1572 = vcmp.ge.f32.partialorder %v668, %v1540
      %v1573 = vsel %vm1541, -inf, %v637
      %v1574 = vsel %vm1542, -inf, %v638
      %v1575 = vsel %vm1543, -inf, %v639
      %v1576 = vsel %vm1544, -inf, %v640
      %v1577 = vsel %vm1545, -inf, %v641
      %v1578 = vsel %vm1546, -inf, %v642
      %v1579 = vsel %vm1547, -inf, %v643
      %v1580 = vsel %vm1548, -inf, %v644
      %v1581 = vsel %vm1549, -inf, %v645
      %v1582 = vsel %vm1550, -inf, %v646
      %v1583 = vsel %vm1551, -inf, %v647
      %v1584 = vsel %vm1552, -inf, %v648
      %v1585 = vsel %vm1553, -inf, %v649
      %v1586 = vsel %vm1554, -inf, %v650
      %v1587 = vsel %vm1555, -inf, %v651
      %v1588 = vsel %vm1556, -inf, %v652
      %v1589 = vsel %vm1557, -inf, %v653
      %v1590 = vsel %vm1558, -inf, %v654
      %v1591 = vsel %vm1559, -inf, %v655
      %v1592 = vsel %vm1560, -inf, %v656
      %v1593 = vsel %vm1561, -inf, %v657
      %v1594 = vsel %vm1562, -inf, %v658
      %v1595 = vsel %vm1563, -inf, %v659
      %v1596 = vsel %vm1564, -inf, %v660
      %v1597 = vsel %vm1565, -inf, %v661
      %v1598 = vsel %vm1566, -inf, %v662
      %v1599 = vsel %vm1567, -inf, %v663
      %v1600 = vsel %vm1568, -inf, %v664
      %v1601 = vsel %vm1569, -inf, %v665
      %v1602 = vsel %vm1570, -inf, %v666
      %v1603 = vsel %vm1571, -inf, %v667
      %v1604 = vsel %vm1572, -inf, %v668
      %v1605 = vmax.f32 %v1573, %v1574
      %v1606 = vmax.f32 %v1605, %v1575
      %v1607 = vmax.f32 %v1606, %v1576
      %1608 = vmax.xlane.f32.xlu0 %v1607
      %v1609 = vpop.xlane.xlu0 %1608
      %v1610 = vmax.f32 %v1577, %v1578
      %v1611 = vmax.f32 %v1610, %v1579
      %v1612 = vmax.f32 %v1611, %v1580
      %1613 = vmax.xlane.f32.xlu0 %v1612
      %v1614 = vpop.xlane.xlu0 %1613
      %v1615 = vmax.f32 %v1581, %v1582
      %v1616 = vmax.f32 %v1615, %v1583
      %v1617 = vmax.f32 %v1616, %v1584
      %1618 = vmax.xlane.f32.xlu0 %v1617
      %v1619 = vpop.xlane.xlu0 %1618
      %v1620 = vmax.f32 %v1585, %v1586
      %v1621 = vmax.f32 %v1620, %v1587
      %v1622 = vmax.f32 %v1621, %v1588
      %1623 = vmax.xlane.f32.xlu0 %v1622
      %v1624 = vpop.xlane.xlu0 %1623
      %v1625 = vmax.f32 %v1589, %v1590
      %v1626 = vmax.f32 %v1625, %v1591
      %v1627 = vmax.f32 %v1626, %v1592
      %1628 = vmax.xlane.f32.xlu0 %v1627
      %v1629 = vpop.xlane.xlu0 %1628
      %v1630 = vmax.f32 %v1593, %v1594
      %v1631 = vmax.f32 %v1630, %v1595
      %v1632 = vmax.f32 %v1631, %v1596
      %1633 = vmax.xlane.f32.xlu0 %v1632
      %v1634 = vpop.xlane.xlu0 %1633
      %v1635 = vmax.f32 %v1597, %v1598
      %v1636 = vmax.f32 %v1635, %v1599
      %v1637 = vmax.f32 %v1636, %v1600
      %1638 = vmax.xlane.f32.xlu0 %v1637
      %v1639 = vpop.xlane.xlu0 %1638
      %v1640 = vmax.f32 %v1601, %v1602
      %v1641 = vmax.f32 %v1640, %v1603
      %v1642 = vmax.f32 %v1641, %v1604
      %1643 = vmax.xlane.f32.xlu0 %v1642
      %v1644 = vpop.xlane.xlu0 %1643
      %vm1645 = vcmp.ge.f32.partialorder %v637, %v1609
      %vm1646 = vcmp.ge.f32.partialorder %v638, %v1609
      %vm1647 = vcmp.ge.f32.partialorder %v639, %v1609
      %vm1648 = vcmp.ge.f32.partialorder %v640, %v1609
      %vm1649 = vcmp.ge.f32.partialorder %v641, %v1614
      %vm1650 = vcmp.ge.f32.partialorder %v642, %v1614
      %vm1651 = vcmp.ge.f32.partialorder %v643, %v1614
      %vm1652 = vcmp.ge.f32.partialorder %v644, %v1614
      %vm1653 = vcmp.ge.f32.partialorder %v645, %v1619
      %vm1654 = vcmp.ge.f32.partialorder %v646, %v1619
      %vm1655 = vcmp.ge.f32.partialorder %v647, %v1619
      %vm1656 = vcmp.ge.f32.partialorder %v648, %v1619
      %vm1657 = vcmp.ge.f32.partialorder %v649, %v1624
      %vm1658 = vcmp.ge.f32.partialorder %v650, %v1624
      %vm1659 = vcmp.ge.f32.partialorder %v651, %v1624
      %vm1660 = vcmp.ge.f32.partialorder %v652, %v1624
      %vm1661 = vcmp.ge.f32.partialorder %v653, %v1629
      %vm1662 = vcmp.ge.f32.partialorder %v654, %v1629
      %vm1663 = vcmp.ge.f32.partialorder %v655, %v1629
      %vm1664 = vcmp.ge.f32.partialorder %v656, %v1629
      %vm1665 = vcmp.ge.f32.partialorder %v657, %v1634
      %vm1666 = vcmp.ge.f32.partialorder %v658, %v1634
      %vm1667 = vcmp.ge.f32.partialorder %v659, %v1634
      %vm1668 = vcmp.ge.f32.partialorder %v660, %v1634
      %vm1669 = vcmp.ge.f32.partialorder %v661, %v1639
      %vm1670 = vcmp.ge.f32.partialorder %v662, %v1639
      %vm1671 = vcmp.ge.f32.partialorder %v663, %v1639
      %vm1672 = vcmp.ge.f32.partialorder %v664, %v1639
      %vm1673 = vcmp.ge.f32.partialorder %v665, %v1644
      %vm1674 = vcmp.ge.f32.partialorder %v666, %v1644
      %vm1675 = vcmp.ge.f32.partialorder %v667, %v1644
      %vm1676 = vcmp.ge.f32.partialorder %v668, %v1644
      %v1677 = vsel %vm1645, -inf, %v637
      %v1678 = vsel %vm1646, -inf, %v638
      %v1679 = vsel %vm1647, -inf, %v639
      %v1680 = vsel %vm1648, -inf, %v640
      %v1681 = vsel %vm1649, -inf, %v641
      %v1682 = vsel %vm1650, -inf, %v642
      %v1683 = vsel %vm1651, -inf, %v643
      %v1684 = vsel %vm1652, -inf, %v644
      %v1685 = vsel %vm1653, -inf, %v645
      %v1686 = vsel %vm1654, -inf, %v646
      %v1687 = vsel %vm1655, -inf, %v647
      %v1688 = vsel %vm1656, -inf, %v648
      %v1689 = vsel %vm1657, -inf, %v649
      %v1690 = vsel %vm1658, -inf, %v650
      %v1691 = vsel %vm1659, -inf, %v651
      %v1692 = vsel %vm1660, -inf, %v652
      %v1693 = vsel %vm1661, -inf, %v653
      %v1694 = vsel %vm1662, -inf, %v654
      %v1695 = vsel %vm1663, -inf, %v655
      %v1696 = vsel %vm1664, -inf, %v656
      %v1697 = vsel %vm1665, -inf, %v657
      %v1698 = vsel %vm1666, -inf, %v658
      %v1699 = vsel %vm1667, -inf, %v659
      %v1700 = vsel %vm1668, -inf, %v660
      %v1701 = vsel %vm1669, -inf, %v661
      %v1702 = vsel %vm1670, -inf, %v662
      %v1703 = vsel %vm1671, -inf, %v663
      %v1704 = vsel %vm1672, -inf, %v664
      %v1705 = vsel %vm1673, -inf, %v665
      %v1706 = vsel %vm1674, -inf, %v666
      %v1707 = vsel %vm1675, -inf, %v667
      %v1708 = vsel %vm1676, -inf, %v668
      %v1709 = vmax.f32 %v1677, %v1678
      %v1710 = vmax.f32 %v1709, %v1679
      %v1711 = vmax.f32 %v1710, %v1680
      %1712 = vmax.xlane.f32.xlu0 %v1711
      %v1713 = vpop.xlane.xlu0 %1712
      %v1714 = vmax.f32 %v1681, %v1682
      %v1715 = vmax.f32 %v1714, %v1683
      %v1716 = vmax.f32 %v1715, %v1684
      %1717 = vmax.xlane.f32.xlu0 %v1716
      %v1718 = vpop.xlane.xlu0 %1717
      %v1719 = vmax.f32 %v1685, %v1686
      %v1720 = vmax.f32 %v1719, %v1687
      %v1721 = vmax.f32 %v1720, %v1688
      %1722 = vmax.xlane.f32.xlu0 %v1721
      %v1723 = vpop.xlane.xlu0 %1722
      %v1724 = vmax.f32 %v1689, %v1690
      %v1725 = vmax.f32 %v1724, %v1691
      %v1726 = vmax.f32 %v1725, %v1692
      %1727 = vmax.xlane.f32.xlu0 %v1726
      %v1728 = vpop.xlane.xlu0 %1727
      %v1729 = vmax.f32 %v1693, %v1694
      %v1730 = vmax.f32 %v1729, %v1695
      %v1731 = vmax.f32 %v1730, %v1696
      %1732 = vmax.xlane.f32.xlu0 %v1731
      %v1733 = vpop.xlane.xlu0 %1732
      %v1734 = vmax.f32 %v1697, %v1698
      %v1735 = vmax.f32 %v1734, %v1699
      %v1736 = vmax.f32 %v1735, %v1700
      %1737 = vmax.xlane.f32.xlu0 %v1736
      %v1738 = vpop.xlane.xlu0 %1737
      %v1739 = vmax.f32 %v1701, %v1702
      %v1740 = vmax.f32 %v1739, %v1703
      %v1741 = vmax.f32 %v1740, %v1704
      %1742 = vmax.xlane.f32.xlu0 %v1741
      %v1743 = vpop.xlane.xlu0 %1742
      %v1744 = vmax.f32 %v1705, %v1706
      %v1745 = vmax.f32 %v1744, %v1707
      %v1746 = vmax.f32 %v1745, %v1708
      %1747 = vmax.xlane.f32.xlu0 %v1746
      %v1748 = vpop.xlane.xlu0 %1747
      %vm1749 = vcmp.ge.f32.partialorder %v637, %v1713
      %vm1750 = vcmp.ge.f32.partialorder %v638, %v1713
      %vm1751 = vcmp.ge.f32.partialorder %v639, %v1713
      %vm1752 = vcmp.ge.f32.partialorder %v640, %v1713
      %vm1753 = vcmp.ge.f32.partialorder %v641, %v1718
      %vm1754 = vcmp.ge.f32.partialorder %v642, %v1718
      %vm1755 = vcmp.ge.f32.partialorder %v643, %v1718
      %vm1756 = vcmp.ge.f32.partialorder %v644, %v1718
      %vm1757 = vcmp.ge.f32.partialorder %v645, %v1723
      %vm1758 = vcmp.ge.f32.partialorder %v646, %v1723
      %vm1759 = vcmp.ge.f32.partialorder %v647, %v1723
      %vm1760 = vcmp.ge.f32.partialorder %v648, %v1723
      %vm1761 = vcmp.ge.f32.partialorder %v649, %v1728
      %vm1762 = vcmp.ge.f32.partialorder %v650, %v1728
      %vm1763 = vcmp.ge.f32.partialorder %v651, %v1728
      %vm1764 = vcmp.ge.f32.partialorder %v652, %v1728
      %vm1765 = vcmp.ge.f32.partialorder %v653, %v1733
      %vm1766 = vcmp.ge.f32.partialorder %v654, %v1733
      %vm1767 = vcmp.ge.f32.partialorder %v655, %v1733
      %vm1768 = vcmp.ge.f32.partialorder %v656, %v1733
      %vm1769 = vcmp.ge.f32.partialorder %v657, %v1738
      %vm1770 = vcmp.ge.f32.partialorder %v658, %v1738
      %vm1771 = vcmp.ge.f32.partialorder %v659, %v1738
      %vm1772 = vcmp.ge.f32.partialorder %v660, %v1738
      %vm1773 = vcmp.ge.f32.partialorder %v661, %v1743
      %vm1774 = vcmp.ge.f32.partialorder %v662, %v1743
      %vm1775 = vcmp.ge.f32.partialorder %v663, %v1743
      %vm1776 = vcmp.ge.f32.partialorder %v664, %v1743
      %vm1777 = vcmp.ge.f32.partialorder %v665, %v1748
      %vm1778 = vcmp.ge.f32.partialorder %v666, %v1748
      %vm1779 = vcmp.ge.f32.partialorder %v667, %v1748
      %vm1780 = vcmp.ge.f32.partialorder %v668, %v1748
      %v1781 = vsel %vm1749, -inf, %v637
      %v1782 = vsel %vm1750, -inf, %v638
      %v1783 = vsel %vm1751, -inf, %v639
      %v1784 = vsel %vm1752, -inf, %v640
      %v1785 = vsel %vm1753, -inf, %v641
      %v1786 = vsel %vm1754, -inf, %v642
      %v1787 = vsel %vm1755, -inf, %v643
      %v1788 = vsel %vm1756, -inf, %v644
      %v1789 = vsel %vm1757, -inf, %v645
      %v1790 = vsel %vm1758, -inf, %v646
      %v1791 = vsel %vm1759, -inf, %v647
      %v1792 = vsel %vm1760, -inf, %v648
      %v1793 = vsel %vm1761, -inf, %v649
      %v1794 = vsel %vm1762, -inf, %v650
      %v1795 = vsel %vm1763, -inf, %v651
      %v1796 = vsel %vm1764, -inf, %v652
      %v1797 = vsel %vm1765, -inf, %v653
      %v1798 = vsel %vm1766, -inf, %v654
      %v1799 = vsel %vm1767, -inf, %v655
      %v1800 = vsel %vm1768, -inf, %v656
      %v1801 = vsel %vm1769, -inf, %v657
      %v1802 = vsel %vm1770, -inf, %v658
      %v1803 = vsel %vm1771, -inf, %v659
      %v1804 = vsel %vm1772, -inf, %v660
      %v1805 = vsel %vm1773, -inf, %v661
      %v1806 = vsel %vm1774, -inf, %v662
      %v1807 = vsel %vm1775, -inf, %v663
      %v1808 = vsel %vm1776, -inf, %v664
      %v1809 = vsel %vm1777, -inf, %v665
      %v1810 = vsel %vm1778, -inf, %v666
      %v1811 = vsel %vm1779, -inf, %v667
      %v1812 = vsel %vm1780, -inf, %v668
      %v1813 = vmax.f32 %v1781, %v1782
      %v1814 = vmax.f32 %v1813, %v1783
      %v1815 = vmax.f32 %v1814, %v1784
      %1816 = vmax.xlane.f32.xlu0 %v1815
      %v1817 = vpop.xlane.xlu0 %1816
      %v1818 = vmax.f32 %v1785, %v1786
      %v1819 = vmax.f32 %v1818, %v1787
      %v1820 = vmax.f32 %v1819, %v1788
      %1821 = vmax.xlane.f32.xlu0 %v1820
      %v1822 = vpop.xlane.xlu0 %1821
      %v1823 = vmax.f32 %v1789, %v1790
      %v1824 = vmax.f32 %v1823, %v1791
      %v1825 = vmax.f32 %v1824, %v1792
      %1826 = vmax.xlane.f32.xlu0 %v1825
      %v1827 = vpop.xlane.xlu0 %1826
      %v1828 = vmax.f32 %v1793, %v1794
      %v1829 = vmax.f32 %v1828, %v1795
      %v1830 = vmax.f32 %v1829, %v1796
      %1831 = vmax.xlane.f32.xlu0 %v1830
      %v1832 = vpop.xlane.xlu0 %1831
      %v1833 = vmax.f32 %v1797, %v1798
      %v1834 = vmax.f32 %v1833, %v1799
      %v1835 = vmax.f32 %v1834, %v1800
      %1836 = vmax.xlane.f32.xlu0 %v1835
      %v1837 = vpop.xlane.xlu0 %1836
      %v1838 = vmax.f32 %v1801, %v1802
      %v1839 = vmax.f32 %v1838, %v1803
      %v1840 = vmax.f32 %v1839, %v1804
      %1841 = vmax.xlane.f32.xlu0 %v1840
      %v1842 = vpop.xlane.xlu0 %1841
      %v1843 = vmax.f32 %v1805, %v1806
      %v1844 = vmax.f32 %v1843, %v1807
      %v1845 = vmax.f32 %v1844, %v1808
      %1846 = vmax.xlane.f32.xlu0 %v1845
      %v1847 = vpop.xlane.xlu0 %1846
      %v1848 = vmax.f32 %v1809, %v1810
      %v1849 = vmax.f32 %v1848, %v1811
      %v1850 = vmax.f32 %v1849, %v1812
      %1851 = vmax.xlane.f32.xlu0 %v1850
      %v1852 = vpop.xlane.xlu0 %1851
      %vm1853 = vcmp.ge.f32.partialorder %v637, %v1817
      %vm1854 = vcmp.ge.f32.partialorder %v638, %v1817
      %vm1855 = vcmp.ge.f32.partialorder %v639, %v1817
      %vm1856 = vcmp.ge.f32.partialorder %v640, %v1817
      %vm1857 = vcmp.ge.f32.partialorder %v641, %v1822
      %vm1858 = vcmp.ge.f32.partialorder %v642, %v1822
      %vm1859 = vcmp.ge.f32.partialorder %v643, %v1822
      %vm1860 = vcmp.ge.f32.partialorder %v644, %v1822
      %vm1861 = vcmp.ge.f32.partialorder %v645, %v1827
      %vm1862 = vcmp.ge.f32.partialorder %v646, %v1827
      %vm1863 = vcmp.ge.f32.partialorder %v647, %v1827
      %vm1864 = vcmp.ge.f32.partialorder %v648, %v1827
      %vm1865 = vcmp.ge.f32.partialorder %v649, %v1832
      %vm1866 = vcmp.ge.f32.partialorder %v650, %v1832
      %vm1867 = vcmp.ge.f32.partialorder %v651, %v1832
      %vm1868 = vcmp.ge.f32.partialorder %v652, %v1832
      %vm1869 = vcmp.ge.f32.partialorder %v653, %v1837
      %vm1870 = vcmp.ge.f32.partialorder %v654, %v1837
      %vm1871 = vcmp.ge.f32.partialorder %v655, %v1837
      %vm1872 = vcmp.ge.f32.partialorder %v656, %v1837
      %vm1873 = vcmp.ge.f32.partialorder %v657, %v1842
      %vm1874 = vcmp.ge.f32.partialorder %v658, %v1842
      %vm1875 = vcmp.ge.f32.partialorder %v659, %v1842
      %vm1876 = vcmp.ge.f32.partialorder %v660, %v1842
      %vm1877 = vcmp.ge.f32.partialorder %v661, %v1847
      %vm1878 = vcmp.ge.f32.partialorder %v662, %v1847
      %vm1879 = vcmp.ge.f32.partialorder %v663, %v1847
      %vm1880 = vcmp.ge.f32.partialorder %v664, %v1847
      %vm1881 = vcmp.ge.f32.partialorder %v665, %v1852
      %vm1882 = vcmp.ge.f32.partialorder %v666, %v1852
      %vm1883 = vcmp.ge.f32.partialorder %v667, %v1852
      %vm1884 = vcmp.ge.f32.partialorder %v668, %v1852
      %v1885 = vsel %vm1853, -inf, %v637
      %v1886 = vsel %vm1854, -inf, %v638
      %v1887 = vsel %vm1855, -inf, %v639
      %v1888 = vsel %vm1856, -inf, %v640
      %v1889 = vsel %vm1857, -inf, %v641
      %v1890 = vsel %vm1858, -inf, %v642
      %v1891 = vsel %vm1859, -inf, %v643
      %v1892 = vsel %vm1860, -inf, %v644
      %v1893 = vsel %vm1861, -inf, %v645
      %v1894 = vsel %vm1862, -inf, %v646
      %v1895 = vsel %vm1863, -inf, %v647
      %v1896 = vsel %vm1864, -inf, %v648
      %v1897 = vsel %vm1865, -inf, %v649
      %v1898 = vsel %vm1866, -inf, %v650
      %v1899 = vsel %vm1867, -inf, %v651
      %v1900 = vsel %vm1868, -inf, %v652
      %v1901 = vsel %vm1869, -inf, %v653
      %v1902 = vsel %vm1870, -inf, %v654
      %v1903 = vsel %vm1871, -inf, %v655
      %v1904 = vsel %vm1872, -inf, %v656
      %v1905 = vsel %vm1873, -inf, %v657
      %v1906 = vsel %vm1874, -inf, %v658
      %v1907 = vsel %vm1875, -inf, %v659
      %v1908 = vsel %vm1876, -inf, %v660
      %v1909 = vsel %vm1877, -inf, %v661
      %v1910 = vsel %vm1878, -inf, %v662
      %v1911 = vsel %vm1879, -inf, %v663
      %v1912 = vsel %vm1880, -inf, %v664
      %v1913 = vsel %vm1881, -inf, %v665
      %v1914 = vsel %vm1882, -inf, %v666
      %v1915 = vsel %vm1883, -inf, %v667
      %v1916 = vsel %vm1884, -inf, %v668
      %v1917 = vmax.f32 %v1885, %v1886
      %v1918 = vmax.f32 %v1917, %v1887
      %v1919 = vmax.f32 %v1918, %v1888
      %1920 = vmax.xlane.f32.xlu0 %v1919
      %v1921 = vpop.xlane.xlu0 %1920
      %v1922 = vmax.f32 %v1889, %v1890
      %v1923 = vmax.f32 %v1922, %v1891
      %v1924 = vmax.f32 %v1923, %v1892
      %1925 = vmax.xlane.f32.xlu0 %v1924
      %v1926 = vpop.xlane.xlu0 %1925
      %v1927 = vmax.f32 %v1893, %v1894
      %v1928 = vmax.f32 %v1927, %v1895
      %v1929 = vmax.f32 %v1928, %v1896
      %1930 = vmax.xlane.f32.xlu0 %v1929
      %v1931 = vpop.xlane.xlu0 %1930
      %v1932 = vmax.f32 %v1897, %v1898
      %v1933 = vmax.f32 %v1932, %v1899
      %v1934 = vmax.f32 %v1933, %v1900
      %1935 = vmax.xlane.f32.xlu0 %v1934
      %v1936 = vpop.xlane.xlu0 %1935
      %v1937 = vmax.f32 %v1901, %v1902
      %v1938 = vmax.f32 %v1937, %v1903
      %v1939 = vmax.f32 %v1938, %v1904
      %1940 = vmax.xlane.f32.xlu0 %v1939
      %v1941 = vpop.xlane.xlu0 %1940
      %v1942 = vmax.f32 %v1905, %v1906
      %v1943 = vmax.f32 %v1942, %v1907
      %v1944 = vmax.f32 %v1943, %v1908
      %1945 = vmax.xlane.f32.xlu0 %v1944
      %v1946 = vpop.xlane.xlu0 %1945
      %v1947 = vmax.f32 %v1909, %v1910
      %v1948 = vmax.f32 %v1947, %v1911
      %v1949 = vmax.f32 %v1948, %v1912
      %1950 = vmax.xlane.f32.xlu0 %v1949
      %v1951 = vpop.xlane.xlu0 %1950
      %v1952 = vmax.f32 %v1913, %v1914
      %v1953 = vmax.f32 %v1952, %v1915
      %v1954 = vmax.f32 %v1953, %v1916
      %1955 = vmax.xlane.f32.xlu0 %v1954
      %v1956 = vpop.xlane.xlu0 %1955
      %vm1957 = vcmp.ge.f32.partialorder %v637, %v1921
      %vm1958 = vcmp.ge.f32.partialorder %v638, %v1921
      %vm1959 = vcmp.ge.f32.partialorder %v639, %v1921
      %vm1960 = vcmp.ge.f32.partialorder %v640, %v1921
      %vm1961 = vcmp.ge.f32.partialorder %v641, %v1926
      %vm1962 = vcmp.ge.f32.partialorder %v642, %v1926
      %vm1963 = vcmp.ge.f32.partialorder %v643, %v1926
      %vm1964 = vcmp.ge.f32.partialorder %v644, %v1926
      %vm1965 = vcmp.ge.f32.partialorder %v645, %v1931
      %vm1966 = vcmp.ge.f32.partialorder %v646, %v1931
      %vm1967 = vcmp.ge.f32.partialorder %v647, %v1931
      %vm1968 = vcmp.ge.f32.partialorder %v648, %v1931
      %vm1969 = vcmp.ge.f32.partialorder %v649, %v1936
      %vm1970 = vcmp.ge.f32.partialorder %v650, %v1936
      %vm1971 = vcmp.ge.f32.partialorder %v651, %v1936
      %vm1972 = vcmp.ge.f32.partialorder %v652, %v1936
      %vm1973 = vcmp.ge.f32.partialorder %v653, %v1941
      %vm1974 = vcmp.ge.f32.partialorder %v654, %v1941
      %vm1975 = vcmp.ge.f32.partialorder %v655, %v1941
      %vm1976 = vcmp.ge.f32.partialorder %v656, %v1941
      %vm1977 = vcmp.ge.f32.partialorder %v657, %v1946
      %vm1978 = vcmp.ge.f32.partialorder %v658, %v1946
      %vm1979 = vcmp.ge.f32.partialorder %v659, %v1946
      %vm1980 = vcmp.ge.f32.partialorder %v660, %v1946
      %vm1981 = vcmp.ge.f32.partialorder %v661, %v1951
      %vm1982 = vcmp.ge.f32.partialorder %v662, %v1951
      %vm1983 = vcmp.ge.f32.partialorder %v663, %v1951
      %vm1984 = vcmp.ge.f32.partialorder %v664, %v1951
      %vm1985 = vcmp.ge.f32.partialorder %v665, %v1956
      %vm1986 = vcmp.ge.f32.partialorder %v666, %v1956
      %vm1987 = vcmp.ge.f32.partialorder %v667, %v1956
      %vm1988 = vcmp.ge.f32.partialorder %v668, %v1956
      %v1989 = vsel %vm1957, -inf, %v637
      %v1990 = vsel %vm1958, -inf, %v638
      %v1991 = vsel %vm1959, -inf, %v639
      %v1992 = vsel %vm1960, -inf, %v640
      %v1993 = vsel %vm1961, -inf, %v641
      %v1994 = vsel %vm1962, -inf, %v642
      %v1995 = vsel %vm1963, -inf, %v643
      %v1996 = vsel %vm1964, -inf, %v644
      %v1997 = vsel %vm1965, -inf, %v645
      %v1998 = vsel %vm1966, -inf, %v646
      %v1999 = vsel %vm1967, -inf, %v647
      %v2000 = vsel %vm1968, -inf, %v648
      %v2001 = vsel %vm1969, -inf, %v649
      %v2002 = vsel %vm1970, -inf, %v650
      %v2003 = vsel %vm1971, -inf, %v651
      %v2004 = vsel %vm1972, -inf, %v652
      %v2005 = vsel %vm1973, -inf, %v653
      %v2006 = vsel %vm1974, -inf, %v654
      %v2007 = vsel %vm1975, -inf, %v655
      %v2008 = vsel %vm1976, -inf, %v656
      %v2009 = vsel %vm1977, -inf, %v657
      %v2010 = vsel %vm1978, -inf, %v658
      %v2011 = vsel %vm1979, -inf, %v659
      %v2012 = vsel %vm1980, -inf, %v660
      %v2013 = vsel %vm1981, -inf, %v661
      %v2014 = vsel %vm1982, -inf, %v662
      %v2015 = vsel %vm1983, -inf, %v663
      %v2016 = vsel %vm1984, -inf, %v664
      %v2017 = vsel %vm1985, -inf, %v665
      %v2018 = vsel %vm1986, -inf, %v666
      %v2019 = vsel %vm1987, -inf, %v667
      %v2020 = vsel %vm1988, -inf, %v668
      %v2021 = vmax.f32 %v1989, %v1990
      %v2022 = vmax.f32 %v2021, %v1991
      %v2023 = vmax.f32 %v2022, %v1992
      %2024 = vmax.xlane.f32.xlu0 %v2023
      %v2025 = vpop.xlane.xlu0 %2024
      %v2026 = vmax.f32 %v1993, %v1994
      %v2027 = vmax.f32 %v2026, %v1995
      %v2028 = vmax.f32 %v2027, %v1996
      %2029 = vmax.xlane.f32.xlu0 %v2028
      %v2030 = vpop.xlane.xlu0 %2029
      %v2031 = vmax.f32 %v1997, %v1998
      %v2032 = vmax.f32 %v2031, %v1999
      %v2033 = vmax.f32 %v2032, %v2000
      %2034 = vmax.xlane.f32.xlu0 %v2033
      %v2035 = vpop.xlane.xlu0 %2034
      %v2036 = vmax.f32 %v2001, %v2002
      %v2037 = vmax.f32 %v2036, %v2003
      %v2038 = vmax.f32 %v2037, %v2004
      %2039 = vmax.xlane.f32.xlu0 %v2038
      %v2040 = vpop.xlane.xlu0 %2039
      %v2041 = vmax.f32 %v2005, %v2006
      %v2042 = vmax.f32 %v2041, %v2007
      %v2043 = vmax.f32 %v2042, %v2008
      %2044 = vmax.xlane.f32.xlu0 %v2043
      %v2045 = vpop.xlane.xlu0 %2044
      %v2046 = vmax.f32 %v2009, %v2010
      %v2047 = vmax.f32 %v2046, %v2011
      %v2048 = vmax.f32 %v2047, %v2012
      %2049 = vmax.xlane.f32.xlu0 %v2048
      %v2050 = vpop.xlane.xlu0 %2049
      %v2051 = vmax.f32 %v2013, %v2014
      %v2052 = vmax.f32 %v2051, %v2015
      %v2053 = vmax.f32 %v2052, %v2016
      %2054 = vmax.xlane.f32.xlu0 %v2053
      %v2055 = vpop.xlane.xlu0 %2054
      %v2056 = vmax.f32 %v2017, %v2018
      %v2057 = vmax.f32 %v2056, %v2019
      %v2058 = vmax.f32 %v2057, %v2020
      %2059 = vmax.xlane.f32.xlu0 %v2058
      %v2060 = vpop.xlane.xlu0 %2059
      %vm2061 = vcmp.ge.f32.partialorder %v637, %v2025
      %vm2062 = vcmp.ge.f32.partialorder %v638, %v2025
      %vm2063 = vcmp.ge.f32.partialorder %v639, %v2025
      %vm2064 = vcmp.ge.f32.partialorder %v640, %v2025
      %vm2065 = vcmp.ge.f32.partialorder %v641, %v2030
      %vm2066 = vcmp.ge.f32.partialorder %v642, %v2030
      %vm2067 = vcmp.ge.f32.partialorder %v643, %v2030
      %vm2068 = vcmp.ge.f32.partialorder %v644, %v2030
      %vm2069 = vcmp.ge.f32.partialorder %v645, %v2035
      %vm2070 = vcmp.ge.f32.partialorder %v646, %v2035
      %vm2071 = vcmp.ge.f32.partialorder %v647, %v2035
      %vm2072 = vcmp.ge.f32.partialorder %v648, %v2035
      %vm2073 = vcmp.ge.f32.partialorder %v649, %v2040
      %vm2074 = vcmp.ge.f32.partialorder %v650, %v2040
      %vm2075 = vcmp.ge.f32.partialorder %v651, %v2040
      %vm2076 = vcmp.ge.f32.partialorder %v652, %v2040
      %vm2077 = vcmp.ge.f32.partialorder %v653, %v2045
      %vm2078 = vcmp.ge.f32.partialorder %v654, %v2045
      %vm2079 = vcmp.ge.f32.partialorder %v655, %v2045
      %vm2080 = vcmp.ge.f32.partialorder %v656, %v2045
      %vm2081 = vcmp.ge.f32.partialorder %v657, %v2050
      %vm2082 = vcmp.ge.f32.partialorder %v658, %v2050
      %vm2083 = vcmp.ge.f32.partialorder %v659, %v2050
      %vm2084 = vcmp.ge.f32.partialorder %v660, %v2050
      %vm2085 = vcmp.ge.f32.partialorder %v661, %v2055
      %vm2086 = vcmp.ge.f32.partialorder %v662, %v2055
      %vm2087 = vcmp.ge.f32.partialorder %v663, %v2055
      %vm2088 = vcmp.ge.f32.partialorder %v664, %v2055
      %vm2089 = vcmp.ge.f32.partialorder %v665, %v2060
      %vm2090 = vcmp.ge.f32.partialorder %v666, %v2060
      %vm2091 = vcmp.ge.f32.partialorder %v667, %v2060
      %vm2092 = vcmp.ge.f32.partialorder %v668, %v2060
      %v2093 = vsel %vm2061, -inf, %v637
      %v2094 = vsel %vm2062, -inf, %v638
      %v2095 = vsel %vm2063, -inf, %v639
      %v2096 = vsel %vm2064, -inf, %v640
      %v2097 = vsel %vm2065, -inf, %v641
      %v2098 = vsel %vm2066, -inf, %v642
      %v2099 = vsel %vm2067, -inf, %v643
      %v2100 = vsel %vm2068, -inf, %v644
      %v2101 = vsel %vm2069, -inf, %v645
      %v2102 = vsel %vm2070, -inf, %v646
      %v2103 = vsel %vm2071, -inf, %v647
      %v2104 = vsel %vm2072, -inf, %v648
      %v2105 = vsel %vm2073, -inf, %v649
      %v2106 = vsel %vm2074, -inf, %v650
      %v2107 = vsel %vm2075, -inf, %v651
      %v2108 = vsel %vm2076, -inf, %v652
      %v2109 = vsel %vm2077, -inf, %v653
      %v2110 = vsel %vm2078, -inf, %v654
      %v2111 = vsel %vm2079, -inf, %v655
      %v2112 = vsel %vm2080, -inf, %v656
      %v2113 = vsel %vm2081, -inf, %v657
      %v2114 = vsel %vm2082, -inf, %v658
      %v2115 = vsel %vm2083, -inf, %v659
      %v2116 = vsel %vm2084, -inf, %v660
      %v2117 = vsel %vm2085, -inf, %v661
      %v2118 = vsel %vm2086, -inf, %v662
      %v2119 = vsel %vm2087, -inf, %v663
      %v2120 = vsel %vm2088, -inf, %v664
      %v2121 = vsel %vm2089, -inf, %v665
      %v2122 = vsel %vm2090, -inf, %v666
      %v2123 = vsel %vm2091, -inf, %v667
      %v2124 = vsel %vm2092, -inf, %v668
      %v2125 = vmax.f32 %v2093, %v2094
      %v2126 = vmax.f32 %v2125, %v2095
      %v2127 = vmax.f32 %v2126, %v2096
      %2128 = vmax.xlane.f32.xlu0 %v2127
      %v2129 = vpop.xlane.xlu0 %2128
      %v2130 = vmax.f32 %v2097, %v2098
      %v2131 = vmax.f32 %v2130, %v2099
      %v2132 = vmax.f32 %v2131, %v2100
      %2133 = vmax.xlane.f32.xlu0 %v2132
      %v2134 = vpop.xlane.xlu0 %2133
      %v2135 = vmax.f32 %v2101, %v2102
      %v2136 = vmax.f32 %v2135, %v2103
      %v2137 = vmax.f32 %v2136, %v2104
      %2138 = vmax.xlane.f32.xlu0 %v2137
      %v2139 = vpop.xlane.xlu0 %2138
      %v2140 = vmax.f32 %v2105, %v2106
      %v2141 = vmax.f32 %v2140, %v2107
      %v2142 = vmax.f32 %v2141, %v2108
      %2143 = vmax.xlane.f32.xlu0 %v2142
      %v2144 = vpop.xlane.xlu0 %2143
      %v2145 = vmax.f32 %v2109, %v2110
      %v2146 = vmax.f32 %v2145, %v2111
      %v2147 = vmax.f32 %v2146, %v2112
      %2148 = vmax.xlane.f32.xlu0 %v2147
      %v2149 = vpop.xlane.xlu0 %2148
      %v2150 = vmax.f32 %v2113, %v2114
      %v2151 = vmax.f32 %v2150, %v2115
      %v2152 = vmax.f32 %v2151, %v2116
      %2153 = vmax.xlane.f32.xlu0 %v2152
      %v2154 = vpop.xlane.xlu0 %2153
      %v2155 = vmax.f32 %v2117, %v2118
      %v2156 = vmax.f32 %v2155, %v2119
      %v2157 = vmax.f32 %v2156, %v2120
      %2158 = vmax.xlane.f32.xlu0 %v2157
      %v2159 = vpop.xlane.xlu0 %2158
      %v2160 = vmax.f32 %v2121, %v2122
      %v2161 = vmax.f32 %v2160, %v2123
      %v2162 = vmax.f32 %v2161, %v2124
      %2163 = vmax.xlane.f32.xlu0 %v2162
      %v2164 = vpop.xlane.xlu0 %2163
      %vm2165 = vcmp.ge.f32.partialorder %v637, %v2129
      %vm2166 = vcmp.ge.f32.partialorder %v638, %v2129
      %vm2167 = vcmp.ge.f32.partialorder %v639, %v2129
      %vm2168 = vcmp.ge.f32.partialorder %v640, %v2129
      %vm2169 = vcmp.ge.f32.partialorder %v641, %v2134
      %vm2170 = vcmp.ge.f32.partialorder %v642, %v2134
      %vm2171 = vcmp.ge.f32.partialorder %v643, %v2134
      %vm2172 = vcmp.ge.f32.partialorder %v644, %v2134
      %vm2173 = vcmp.ge.f32.partialorder %v645, %v2139
      %vm2174 = vcmp.ge.f32.partialorder %v646, %v2139
      %vm2175 = vcmp.ge.f32.partialorder %v647, %v2139
      %vm2176 = vcmp.ge.f32.partialorder %v648, %v2139
      %vm2177 = vcmp.ge.f32.partialorder %v649, %v2144
      %vm2178 = vcmp.ge.f32.partialorder %v650, %v2144
      %vm2179 = vcmp.ge.f32.partialorder %v651, %v2144
      %vm2180 = vcmp.ge.f32.partialorder %v652, %v2144
      %vm2181 = vcmp.ge.f32.partialorder %v653, %v2149
      %vm2182 = vcmp.ge.f32.partialorder %v654, %v2149
      %vm2183 = vcmp.ge.f32.partialorder %v655, %v2149
      %vm2184 = vcmp.ge.f32.partialorder %v656, %v2149
      %vm2185 = vcmp.ge.f32.partialorder %v657, %v2154
      %vm2186 = vcmp.ge.f32.partialorder %v658, %v2154
      %vm2187 = vcmp.ge.f32.partialorder %v659, %v2154
      %vm2188 = vcmp.ge.f32.partialorder %v660, %v2154
      %vm2189 = vcmp.ge.f32.partialorder %v661, %v2159
      %vm2190 = vcmp.ge.f32.partialorder %v662, %v2159
      %vm2191 = vcmp.ge.f32.partialorder %v663, %v2159
      %vm2192 = vcmp.ge.f32.partialorder %v664, %v2159
      %vm2193 = vcmp.ge.f32.partialorder %v665, %v2164
      %vm2194 = vcmp.ge.f32.partialorder %v666, %v2164
      %vm2195 = vcmp.ge.f32.partialorder %v667, %v2164
      %vm2196 = vcmp.ge.f32.partialorder %v668, %v2164
      %v2197 = vsel %vm2165, -inf, %v637
      %v2198 = vsel %vm2166, -inf, %v638
      %v2199 = vsel %vm2167, -inf, %v639
      %v2200 = vsel %vm2168, -inf, %v640
      %v2201 = vsel %vm2169, -inf, %v641
      %v2202 = vsel %vm2170, -inf, %v642
      %v2203 = vsel %vm2171, -inf, %v643
      %v2204 = vsel %vm2172, -inf, %v644
      %v2205 = vsel %vm2173, -inf, %v645
      %v2206 = vsel %vm2174, -inf, %v646
      %v2207 = vsel %vm2175, -inf, %v647
      %v2208 = vsel %vm2176, -inf, %v648
      %v2209 = vsel %vm2177, -inf, %v649
      %v2210 = vsel %vm2178, -inf, %v650
      %v2211 = vsel %vm2179, -inf, %v651
      %v2212 = vsel %vm2180, -inf, %v652
      %v2213 = vsel %vm2181, -inf, %v653
      %v2214 = vsel %vm2182, -inf, %v654
      %v2215 = vsel %vm2183, -inf, %v655
      %v2216 = vsel %vm2184, -inf, %v656
      %v2217 = vsel %vm2185, -inf, %v657
      %v2218 = vsel %vm2186, -inf, %v658
      %v2219 = vsel %vm2187, -inf, %v659
      %v2220 = vsel %vm2188, -inf, %v660
      %v2221 = vsel %vm2189, -inf, %v661
      %v2222 = vsel %vm2190, -inf, %v662
      %v2223 = vsel %vm2191, -inf, %v663
      %v2224 = vsel %vm2192, -inf, %v664
      %v2225 = vsel %vm2193, -inf, %v665
      %v2226 = vsel %vm2194, -inf, %v666
      %v2227 = vsel %vm2195, -inf, %v667
      %v2228 = vsel %vm2196, -inf, %v668
      %v2229 = vmax.f32 %v2197, %v2198
      %v2230 = vmax.f32 %v2229, %v2199
      %v2231 = vmax.f32 %v2230, %v2200
      %2232 = vmax.xlane.f32.xlu0 %v2231
      %v2233 = vpop.xlane.xlu0 %2232
      %v2234 = vmax.f32 %v2201, %v2202
      %v2235 = vmax.f32 %v2234, %v2203
      %v2236 = vmax.f32 %v2235, %v2204
      %2237 = vmax.xlane.f32.xlu0 %v2236
      %v2238 = vpop.xlane.xlu0 %2237
      %v2239 = vmax.f32 %v2205, %v2206
      %v2240 = vmax.f32 %v2239, %v2207
      %v2241 = vmax.f32 %v2240, %v2208
      %2242 = vmax.xlane.f32.xlu0 %v2241
      %v2243 = vpop.xlane.xlu0 %2242
      %v2244 = vmax.f32 %v2209, %v2210
      %v2245 = vmax.f32 %v2244, %v2211
      %v2246 = vmax.f32 %v2245, %v2212
      %2247 = vmax.xlane.f32.xlu0 %v2246
      %v2248 = vpop.xlane.xlu0 %2247
      %v2249 = vmax.f32 %v2213, %v2214
      %v2250 = vmax.f32 %v2249, %v2215
      %v2251 = vmax.f32 %v2250, %v2216
      %2252 = vmax.xlane.f32.xlu0 %v2251
      %v2253 = vpop.xlane.xlu0 %2252
      %v2254 = vmax.f32 %v2217, %v2218
      %v2255 = vmax.f32 %v2254, %v2219
      %v2256 = vmax.f32 %v2255, %v2220
      %2257 = vmax.xlane.f32.xlu0 %v2256
      %v2258 = vpop.xlane.xlu0 %2257
      %v2259 = vmax.f32 %v2221, %v2222
      %v2260 = vmax.f32 %v2259, %v2223
      %v2261 = vmax.f32 %v2260, %v2224
      %2262 = vmax.xlane.f32.xlu0 %v2261
      %v2263 = vpop.xlane.xlu0 %2262
      %v2264 = vmax.f32 %v2225, %v2226
      %v2265 = vmax.f32 %v2264, %v2227
      %v2266 = vmax.f32 %v2265, %v2228
      %2267 = vmax.xlane.f32.xlu0 %v2266
      %v2268 = vpop.xlane.xlu0 %2267
      %vm2269 = vcmp.ge.f32.partialorder %v637, %v2233
      %vm2270 = vcmp.ge.f32.partialorder %v638, %v2233
      %vm2271 = vcmp.ge.f32.partialorder %v639, %v2233
      %vm2272 = vcmp.ge.f32.partialorder %v640, %v2233
      %vm2273 = vcmp.ge.f32.partialorder %v641, %v2238
      %vm2274 = vcmp.ge.f32.partialorder %v642, %v2238
      %vm2275 = vcmp.ge.f32.partialorder %v643, %v2238
      %vm2276 = vcmp.ge.f32.partialorder %v644, %v2238
      %vm2277 = vcmp.ge.f32.partialorder %v645, %v2243
      %vm2278 = vcmp.ge.f32.partialorder %v646, %v2243
      %vm2279 = vcmp.ge.f32.partialorder %v647, %v2243
      %vm2280 = vcmp.ge.f32.partialorder %v648, %v2243
      %vm2281 = vcmp.ge.f32.partialorder %v649, %v2248
      %vm2282 = vcmp.ge.f32.partialorder %v650, %v2248
      %vm2283 = vcmp.ge.f32.partialorder %v651, %v2248
      %vm2284 = vcmp.ge.f32.partialorder %v652, %v2248
      %vm2285 = vcmp.ge.f32.partialorder %v653, %v2253
      %vm2286 = vcmp.ge.f32.partialorder %v654, %v2253
      %vm2287 = vcmp.ge.f32.partialorder %v655, %v2253
      %vm2288 = vcmp.ge.f32.partialorder %v656, %v2253
      %vm2289 = vcmp.ge.f32.partialorder %v657, %v2258
      %vm2290 = vcmp.ge.f32.partialorder %v658, %v2258
      %vm2291 = vcmp.ge.f32.partialorder %v659, %v2258
      %vm2292 = vcmp.ge.f32.partialorder %v660, %v2258
      %vm2293 = vcmp.ge.f32.partialorder %v661, %v2263
      %vm2294 = vcmp.ge.f32.partialorder %v662, %v2263
      %vm2295 = vcmp.ge.f32.partialorder %v663, %v2263
      %vm2296 = vcmp.ge.f32.partialorder %v664, %v2263
      %vm2297 = vcmp.ge.f32.partialorder %v665, %v2268
      %vm2298 = vcmp.ge.f32.partialorder %v666, %v2268
      %vm2299 = vcmp.ge.f32.partialorder %v667, %v2268
      %vm2300 = vcmp.ge.f32.partialorder %v668, %v2268
      %v2301 = vsel %vm2269, %v637, 0.0
      %v2302 = vsel %vm2270, %v638, 0.0
      %v2303 = vsel %vm2271, %v639, 0.0
      %v2304 = vsel %vm2272, %v640, 0.0
      %v2305 = vsel %vm2273, %v641, 0.0
      %v2306 = vsel %vm2274, %v642, 0.0
      %v2307 = vsel %vm2275, %v643, 0.0
      %v2308 = vsel %vm2276, %v644, 0.0
      %v2309 = vsel %vm2277, %v645, 0.0
      %v2310 = vsel %vm2278, %v646, 0.0
      %v2311 = vsel %vm2279, %v647, 0.0
      %v2312 = vsel %vm2280, %v648, 0.0
      %v2313 = vsel %vm2281, %v649, 0.0
      %v2314 = vsel %vm2282, %v650, 0.0
      %v2315 = vsel %vm2283, %v651, 0.0
      %v2316 = vsel %vm2284, %v652, 0.0
      %v2317 = vsel %vm2285, %v653, 0.0
      %v2318 = vsel %vm2286, %v654, 0.0
      %v2319 = vsel %vm2287, %v655, 0.0
      %v2320 = vsel %vm2288, %v656, 0.0
      %v2321 = vsel %vm2289, %v657, 0.0
      %v2322 = vsel %vm2290, %v658, 0.0
      %v2323 = vsel %vm2291, %v659, 0.0
      %v2324 = vsel %vm2292, %v660, 0.0
      %v2325 = vsel %vm2293, %v661, 0.0
      %v2326 = vsel %vm2294, %v662, 0.0
      %v2327 = vsel %vm2295, %v663, 0.0
      %v2328 = vsel %vm2296, %v664, 0.0
      %v2329 = vsel %vm2297, %v665, 0.0
      %v2330 = vsel %vm2298, %v666, 0.0
      %v2331 = vsel %vm2299, %v667, 0.0
      %v2332 = vsel %vm2300, %v668, 0.0
      %v2333 = vpack.c.bf16 %v2305, %v2301
      %v2334 = vpack.c.bf16 %v2306, %v2302
      %v2335 = vpack.c.bf16 %v2307, %v2303
      %v2336 = vpack.c.bf16 %v2308, %v2304
      %v2337 = vpack.c.bf16 %v2313, %v2309
      %v2338 = vpack.c.bf16 %v2314, %v2310
      %v2339 = vpack.c.bf16 %v2315, %v2311
      %v2340 = vpack.c.bf16 %v2316, %v2312
      %v2341 = vpack.c.bf16 %v2321, %v2317
      %v2342 = vpack.c.bf16 %v2322, %v2318
      %v2343 = vpack.c.bf16 %v2323, %v2319
      %v2344 = vpack.c.bf16 %v2324, %v2320
      %v2345 = vpack.c.bf16 %v2329, %v2325
      %v2346 = vpack.c.bf16 %v2330, %v2326
      %v2347 = vpack.c.bf16 %v2331, %v2327
      %v2348 = vpack.c.bf16 %v2332, %v2328
      %v2349 = vld [vmem:[%s3] sm:$0xf]
      %v2350 = vld [vmem:[%s3 + $0x4] sm:$0xf]
      %v2351 = vld [vmem:[%s3 + $0x8] sm:$0xf]
      %v2352 = vld [vmem:[%s3 + $0xc] sm:$0xf]
      %v2353 = vld [vmem:[%s3 + $0x10] sm:$0xf]
      %v2354 = vld [vmem:[%s3 + $0x14] sm:$0xf]
      %v2355 = vld [vmem:[%s3 + $0x18] sm:$0xf]
      %v2356 = vld [vmem:[%s3 + $0x1c] sm:$0xf]
      %v2357 = vld [vmem:[%s3 + $0x20] sm:$0xf]
      %v2358 = vld [vmem:[%s3 + $0x24] sm:$0xf]
      %v2359 = vld [vmem:[%s3 + $0x28] sm:$0xf]
      %v2360 = vld [vmem:[%s3 + $0x2c] sm:$0xf]
      %v2361 = vld [vmem:[%s3 + $0x30] sm:$0xf]
      %v2362 = vld [vmem:[%s3 + $0x34] sm:$0xf]
      %v2363 = vld [vmem:[%s3 + $0x38] sm:$0xf]
      %v2364 = vld [vmem:[%s3 + $0x3c] sm:$0xf]
      %v2365 = vld [vmem:[%s3 + $0x40] sm:$0xf]
      %v2366 = vld [vmem:[%s3 + $0x44] sm:$0xf]
      %v2367 = vld [vmem:[%s3 + $0x48] sm:$0xf]
      %v2368 = vld [vmem:[%s3 + $0x4c] sm:$0xf]
      %v2369 = vld [vmem:[%s3 + $0x50] sm:$0xf]
      %v2370 = vld [vmem:[%s3 + $0x54] sm:$0xf]
      %v2371 = vld [vmem:[%s3 + $0x58] sm:$0xf]
      %v2372 = vld [vmem:[%s3 + $0x5c] sm:$0xf]
      %v2373 = vld [vmem:[%s3 + $0x60] sm:$0xf]
      %v2374 = vld [vmem:[%s3 + $0x64] sm:$0xf]
      %v2375 = vld [vmem:[%s3 + $0x68] sm:$0xf]
      %v2376 = vld [vmem:[%s3 + $0x6c] sm:$0xf]
      %v2377 = vld [vmem:[%s3 + $0x70] sm:$0xf]
      %v2378 = vld [vmem:[%s3 + $0x74] sm:$0xf]
      %v2379 = vld [vmem:[%s3 + $0x78] sm:$0xf]
      %v2380 = vld [vmem:[%s3 + $0x7c] sm:$0xf]
      %v2381 = vld [vmem:[%s3 + $0x80] sm:$0xf]
      %v2382 = vld [vmem:[%s3 + $0x84] sm:$0xf]
      %v2383 = vld [vmem:[%s3 + $0x88] sm:$0xf]
      %v2384 = vld [vmem:[%s3 + $0x8c] sm:$0xf]
      %v2385 = vld [vmem:[%s3 + $0x90] sm:$0xf]
      %v2386 = vld [vmem:[%s3 + $0x94] sm:$0xf]
      %v2387 = vld [vmem:[%s3 + $0x98] sm:$0xf]
      %v2388 = vld [vmem:[%s3 + $0x9c] sm:$0xf]
      %v2389 = vld [vmem:[%s3 + $0xa0] sm:$0xf]
      %v2390 = vld [vmem:[%s3 + $0xa4] sm:$0xf]
      %v2391 = vld [vmem:[%s3 + $0xa8] sm:$0xf]
      %v2392 = vld [vmem:[%s3 + $0xac] sm:$0xf]
      %v2393 = vld [vmem:[%s3 + $0xb0] sm:$0xf]
      %v2394 = vld [vmem:[%s3 + $0xb4] sm:$0xf]
      %v2395 = vld [vmem:[%s3 + $0xb8] sm:$0xf]
      %v2396 = vld [vmem:[%s3 + $0xbc] sm:$0xf]
      %v2397 = vld [vmem:[%s3 + $0xc0] sm:$0xf]
      %v2398 = vld [vmem:[%s3 + $0xc4] sm:$0xf]
      %v2399 = vld [vmem:[%s3 + $0xc8] sm:$0xf]
      %v2400 = vld [vmem:[%s3 + $0xcc] sm:$0xf]
      %v2401 = vld [vmem:[%s3 + $0xd0] sm:$0xf]
      %v2402 = vld [vmem:[%s3 + $0xd4] sm:$0xf]
      %v2403 = vld [vmem:[%s3 + $0xd8] sm:$0xf]
      %v2404 = vld [vmem:[%s3 + $0xdc] sm:$0xf]
      %v2405 = vld [vmem:[%s3 + $0xe0] sm:$0xf]
      %v2406 = vld [vmem:[%s3 + $0xe4] sm:$0xf]
      %v2407 = vld [vmem:[%s3 + $0xe8] sm:$0xf]
      %v2408 = vld [vmem:[%s3 + $0xec] sm:$0xf]
      %v2409 = vld [vmem:[%s3 + $0xf0] sm:$0xf]
      %v2410 = vld [vmem:[%s3 + $0xf4] sm:$0xf]
      %v2411 = vld [vmem:[%s3 + $0xf8] sm:$0xf]
      %v2412 = vld [vmem:[%s3 + $0xfc] sm:$0xf]
      %v2413 = vld [vmem:[%s4] sm:$0x1]
      %v2415 = vlaneseq
      %v2416 = vshrl.u32 %v2415, 7
      %v2417 = vsub.s32 0, %v2416
      %v2418 = vrot.slane %v2413, %v2417
      %v2484 = vunpack.c.l.b16 %v2349
      %v2485 = vunpack.c.l.b16 %v2350
      %v2486 = vunpack.c.l.b16 %v2351
      %v2487 = vunpack.c.l.b16 %v2352
      %v2488 = vunpack.c.l.b16 %v2353
      %v2489 = vunpack.c.l.b16 %v2354
      %v2490 = vunpack.c.l.b16 %v2355
      %v2491 = vunpack.c.l.b16 %v2356
      %v2492 = vunpack.c.l.b16 %v2357
      %v2493 = vunpack.c.l.b16 %v2358
      %v2494 = vunpack.c.l.b16 %v2359
      %v2495 = vunpack.c.l.b16 %v2360
      %v2496 = vunpack.c.l.b16 %v2361
      %v2497 = vunpack.c.l.b16 %v2362
      %v2498 = vunpack.c.l.b16 %v2363
      %v2499 = vunpack.c.l.b16 %v2364
      %v2500 = vunpack.c.l.b16 %v2365
      %v2501 = vunpack.c.l.b16 %v2366
      %v2502 = vunpack.c.l.b16 %v2367
      %v2503 = vunpack.c.l.b16 %v2368
      %v2504 = vunpack.c.l.b16 %v2369
      %v2505 = vunpack.c.l.b16 %v2370
      %v2506 = vunpack.c.l.b16 %v2371
      %v2507 = vunpack.c.l.b16 %v2372
      %v2508 = vunpack.c.l.b16 %v2373
      %v2509 = vunpack.c.l.b16 %v2374
      %v2510 = vunpack.c.l.b16 %v2375
      %v2511 = vunpack.c.l.b16 %v2376
      %v2512 = vunpack.c.l.b16 %v2377
      %v2513 = vunpack.c.l.b16 %v2378
      %v2514 = vunpack.c.l.b16 %v2379
      %v2515 = vunpack.c.l.b16 %v2380
      %v2516 = vunpack.c.l.b16 %v2381
      %v2517 = vunpack.c.l.b16 %v2382
      %v2518 = vunpack.c.l.b16 %v2383
      %v2519 = vunpack.c.l.b16 %v2384
      %v2520 = vunpack.c.l.b16 %v2385
      %v2521 = vunpack.c.l.b16 %v2386
      %v2522 = vunpack.c.l.b16 %v2387
      %v2523 = vunpack.c.l.b16 %v2388
      %v2524 = vunpack.c.l.b16 %v2389
      %v2525 = vunpack.c.l.b16 %v2390
      %v2526 = vunpack.c.l.b16 %v2391
      %v2527 = vunpack.c.l.b16 %v2392
      %v2528 = vunpack.c.l.b16 %v2393
      %v2529 = vunpack.c.l.b16 %v2394
      %v2530 = vunpack.c.l.b16 %v2395
      %v2531 = vunpack.c.l.b16 %v2396
      %v2532 = vunpack.c.l.b16 %v2397
      %v2533 = vunpack.c.l.b16 %v2398
      %v2534 = vunpack.c.l.b16 %v2399
      %v2535 = vunpack.c.l.b16 %v2400
      %v2536 = vunpack.c.l.b16 %v2401
      %v2537 = vunpack.c.l.b16 %v2402
      %v2538 = vunpack.c.l.b16 %v2403
      %v2539 = vunpack.c.l.b16 %v2404
      %v2540 = vunpack.c.l.b16 %v2405
      %v2541 = vunpack.c.l.b16 %v2406
      %v2542 = vunpack.c.l.b16 %v2407
      %v2543 = vunpack.c.l.b16 %v2408
      %v2544 = vunpack.c.l.b16 %v2409
      %v2545 = vunpack.c.l.b16 %v2410
      %v2546 = vunpack.c.l.b16 %v2411
      %v2547 = vunpack.c.l.b16 %v2412
      %v2548 = vpack.c.b16 %v2485, %v2484
      %v2549 = vpack.c.b16 %v2487, %v2486
      %v2550 = vpack.c.b16 %v2489, %v2488
      %v2551 = vpack.c.b16 %v2491, %v2490
      %v2552 = vpack.c.b16 %v2493, %v2492
      %v2553 = vpack.c.b16 %v2495, %v2494
      %v2554 = vpack.c.b16 %v2497, %v2496
      %v2555 = vpack.c.b16 %v2499, %v2498
      %v2556 = vpack.c.b16 %v2501, %v2500
      %v2557 = vpack.c.b16 %v2503, %v2502
      %v2558 = vpack.c.b16 %v2505, %v2504
      %v2559 = vpack.c.b16 %v2507, %v2506
      %v2560 = vpack.c.b16 %v2509, %v2508
      %v2561 = vpack.c.b16 %v2511, %v2510
      %v2562 = vpack.c.b16 %v2513, %v2512
      %v2563 = vpack.c.b16 %v2515, %v2514
      %v2564 = vpack.c.b16 %v2517, %v2516
      %v2565 = vpack.c.b16 %v2519, %v2518
      %v2566 = vpack.c.b16 %v2521, %v2520
      %v2567 = vpack.c.b16 %v2523, %v2522
      %v2568 = vpack.c.b16 %v2525, %v2524
      %v2569 = vpack.c.b16 %v2527, %v2526
      %v2570 = vpack.c.b16 %v2529, %v2528
      %v2571 = vpack.c.b16 %v2531, %v2530
      %v2572 = vpack.c.b16 %v2533, %v2532
      %v2573 = vpack.c.b16 %v2535, %v2534
      %v2574 = vpack.c.b16 %v2537, %v2536
      %v2575 = vpack.c.b16 %v2539, %v2538
      %v2576 = vpack.c.b16 %v2541, %v2540
      %v2577 = vpack.c.b16 %v2543, %v2542
      %v2578 = vpack.c.b16 %v2545, %v2544
      %v2579 = vpack.c.b16 %v2547, %v2546
      %2612 = vmatprep.subr.bf16.mxu0 0
      %2613 = vmatpush1.bf16.msra.mxu0 %v2548
      %2614 = vmatprep.subr.bf16.mxu0 0
      %2615 = vmatpush1.bf16.msra.mxu0 %v2549
      %2616 = vmatprep.subr.bf16.mxu0 0
      %2617 = vmatpush1.bf16.msra.mxu0 %v2550
      %2618 = vmatprep.subr.bf16.mxu0 0
      %2619 = vmatpush1.bf16.msra.mxu0 %v2551
      %2620 = vmatprep.subr.bf16.mxu0 0
      %2621 = vmatpush1.bf16.msra.mxu0 %v2552
      %2622 = vmatprep.subr.bf16.mxu0 0
      %2623 = vmatpush1.bf16.msra.mxu0 %v2553
      %2624 = vmatprep.subr.bf16.mxu0 0
      %2625 = vmatpush1.bf16.msra.mxu0 %v2554
      %2626 = vmatprep.subr.bf16.mxu0 0
      %2627 = vmatpush1.bf16.msra.mxu0 %v2555
      %2628 = vmatprep.subr.bf16.mxu0 0
      %2629 = vmatpush1.bf16.msra.mxu0 %v2556
      %2630 = vmatprep.subr.bf16.mxu0 0
      %2631 = vmatpush1.bf16.msra.mxu0 %v2557
      %2632 = vmatprep.subr.bf16.mxu0 0
      %2633 = vmatpush1.bf16.msra.mxu0 %v2558
      %2634 = vmatprep.subr.bf16.mxu0 0
      %2635 = vmatpush1.bf16.msra.mxu0 %v2559
      %2636 = vmatprep.subr.bf16.mxu0 0
      %2637 = vmatpush1.bf16.msra.mxu0 %v2560
      %2638 = vmatprep.subr.bf16.mxu0 0
      %2639 = vmatpush1.bf16.msra.mxu0 %v2561
      %2640 = vmatprep.subr.bf16.mxu0 0
      %2641 = vmatpush1.bf16.msra.mxu0 %v2562
      %2642 = vmatprep.subr.bf16.mxu0 0
      %2643 = vmatpush1.bf16.msra.mxu0 %v2563
      %2644 = vmatprep.mubr.bf16.mxu0 %v2334
      %2645 = vmatmul.mubr.bf16.gmra.mrb[0].mxu0 %v2333
      %v2646 = vpop.f32.mrb[0].mxu0
      %v2647 = vadd.f32 %v2418, %v2646
      %v2648 = vpop.f32.mrb[0].mxu0
      %v2649 = vpop.f32.mrb[0].mxu0
      %v2650 = vadd.f32 %v2418, %v2649
      %v2651 = vpop.f32.mrb[0].mxu0
      %2652 = vmatprep.mubr.bf16.mxu0 %v2338
      %2653 = vmatmul.mubr.bf16.gmra.mrb[0].mxu0 %v2337
      %v2654 = vpop.f32.mrb[0].mxu0
      %v2655 = vadd.f32 %v2418, %v2654
      %v2656 = vpop.f32.mrb[0].mxu0
      %v2657 = vpop.f32.mrb[0].mxu0
      %v2658 = vadd.f32 %v2418, %v2657
      %v2659 = vpop.f32.mrb[0].mxu0
      %2660 = vmatprep.mubr.bf16.mxu0 %v2342
      %2661 = vmatmul.mubr.bf16.gmra.mrb[0].mxu0 %v2341
      %v2662 = vpop.f32.mrb[0].mxu0
      %v2663 = vadd.f32 %v2418, %v2662
      %v2664 = vpop.f32.mrb[0].mxu0
      %v2665 = vpop.f32.mrb[0].mxu0
      %v2666 = vadd.f32 %v2418, %v2665
      %v2667 = vpop.f32.mrb[0].mxu0
      %2668 = vmatprep.mubr.bf16.mxu0 %v2346
      %2669 = vmatmul.mubr.bf16.gmra.mrb[0].mxu0 %v2345
      %v2670 = vpop.f32.mrb[0].mxu0
      %v2671 = vadd.f32 %v2418, %v2670
      %v2672 = vpop.f32.mrb[0].mxu0
      %v2673 = vpop.f32.mrb[0].mxu0
      %v2674 = vadd.f32 %v2418, %v2673
      %v2675 = vpop.f32.mrb[0].mxu0
      %2676 = vdwg.mxu0
      %2677 = vmatprep.subr.bf16.mxu0 0
      %2678 = vmatpush1.bf16.msra.mxu0 %v2564
      %2679 = vmatprep.subr.bf16.mxu0 0
      %2680 = vmatpush1.bf16.msra.mxu0 %v2565
      %2681 = vmatprep.subr.bf16.mxu0 0
      %2682 = vmatpush1.bf16.msra.mxu0 %v2566
      %2683 = vmatprep.subr.bf16.mxu0 0
      %2684 = vmatpush1.bf16.msra.mxu0 %v2567
      %2685 = vmatprep.subr.bf16.mxu0 0
      %2686 = vmatpush1.bf16.msra.mxu0 %v2568
      %2687 = vmatprep.subr.bf16.mxu0 0
      %2688 = vmatpush1.bf16.msra.mxu0 %v2569
      %2689 = vmatprep.subr.bf16.mxu0 0
      %2690 = vmatpush1.bf16.msra.mxu0 %v2570
      %2691 = vmatprep.subr.bf16.mxu0 0
      %2692 = vmatpush1.bf16.msra.mxu0 %v2571
      %2693 = vmatprep.subr.bf16.mxu0 0
      %2694 = vmatpush1.bf16.msra.mxu0 %v2572
      %2695 = vmatprep.subr.bf16.mxu0 0
      %2696 = vmatpush1.bf16.msra.mxu0 %v2573
      %2697 = vmatprep.subr.bf16.mxu0 0
      %2698 = vmatpush1.bf16.msra.mxu0 %v2574
      %2699 = vmatprep.subr.bf16.mxu0 0
      %2700 = vmatpush1.bf16.msra.mxu0 %v2575
      %2701 = vmatprep.subr.bf16.mxu0 0
      %2702 = vmatpush1.bf16.msra.mxu0 %v2576
      %2703 = vmatprep.subr.bf16.mxu0 0
      %2704 = vmatpush1.bf16.msra.mxu0 %v2577
      %2705 = vmatprep.subr.bf16.mxu0 0
      %2706 = vmatpush1.bf16.msra.mxu0 %v2578
      %2707 = vmatprep.subr.bf16.mxu0 0
      %2708 = vmatpush1.bf16.msra.mxu0 %v2579
      %2709 = vmatprep.mubr.bf16.mxu0 %v2336
      %2710 = vmatmul.mubr.bf16.gmra.mrb[0].mxu0 %v2335
      %v2711 = vpop.f32.mrb[0].mxu0
      %v2712 = vadd.f32 %v2647, %v2711
      %v2713 = vpop.f32.mrb[0].mxu0
      %v2714 = vpop.f32.mrb[0].mxu0
      %v2715 = vadd.f32 %v2650, %v2714
      %v2716 = vpop.f32.mrb[0].mxu0
      %2717 = vmatprep.mubr.bf16.mxu0 %v2340
      %2718 = vmatmul.mubr.bf16.gmra.mrb[0].mxu0 %v2339
      %v2719 = vpop.f32.mrb[0].mxu0
      %v2720 = vadd.f32 %v2655, %v2719
      %v2721 = vpop.f32.mrb[0].mxu0
      %v2722 = vpop.f32.mrb[0].mxu0
      %v2723 = vadd.f32 %v2658, %v2722
      %v2724 = vpop.f32.mrb[0].mxu0
      %2725 = vmatprep.mubr.bf16.mxu0 %v2344
      %2726 = vmatmul.mubr.bf16.gmra.mrb[0].mxu0 %v2343
      %v2727 = vpop.f32.mrb[0].mxu0
      %v2728 = vadd.f32 %v2663, %v2727
      %v2729 = vpop.f32.mrb[0].mxu0
      %v2730 = vpop.f32.mrb[0].mxu0
      %v2731 = vadd.f32 %v2666, %v2730
      %v2732 = vpop.f32.mrb[0].mxu0
      %2733 = vmatprep.mubr.bf16.mxu0 %v2348
      %2734 = vmatmul.mubr.bf16.gmra.mrb[0].mxu0 %v2347
      %v2735 = vpop.f32.mrb[0].mxu0
      %v2736 = vadd.f32 %v2671, %v2735
      %v2737 = vpop.f32.mrb[0].mxu0
      %v2738 = vpop.f32.mrb[0].mxu0
      %v2739 = vadd.f32 %v2674, %v2738
      %v2740 = vpop.f32.mrb[0].mxu0
      %2741 = vdwg.mxu0
      %2742 = vst [vmem:[%s259] sm:$0xff] %v2712
      %2743 = vst [vmem:[%s259 + $0x8] sm:$0xff] %v2715
      %2744 = vst [vmem:[%s259 + $0x10] sm:$0xff] %v2720
      %2745 = vst [vmem:[%s259 + $0x18] sm:$0xff] %v2723
      %2746 = vst [vmem:[%s259 + $0x20] sm:$0xff] %v2728
      %2747 = vst [vmem:[%s259 + $0x28] sm:$0xff] %v2731
      %2748 = vst [vmem:[%s259 + $0x30] sm:$0xff] %v2736
      %2749 = vst [vmem:[%s259 + $0x38] sm:$0xff] %v2739
      %v2750 = vsub.f32 %v2712, %v265
      %v2751 = vsub.f32 %v2715, %v266
      %v2752 = vsub.f32 %v2720, %v267
      %v2753 = vsub.f32 %v2723, %v268
      %v2754 = vsub.f32 %v2728, %v269
      %v2755 = vsub.f32 %v2731, %v270
      %v2756 = vsub.f32 %v2736, %v271
      %v2757 = vsub.f32 %v2739, %v272
      %s2758 = smul.u32 %s18, 64
      %v2759 = vlaneseq
      %v2760 = vshrl.u32 %v2759, 7
      %v2761 = vadd.s32 %v2760, 8
      %v2762 = vadd.s32 %v2760, 16
      %v2763 = vadd.s32 %v2760, 24
      %v2764 = vadd.s32 %v2760, 32
      %v2765 = vadd.s32 %v2760, 40
      %v2766 = vadd.s32 %v2760, 48
      %v2767 = vadd.s32 %v2760, 56
      %v2768 = vstv %s2758
      %v2769 = vadd.s32 %v2768, %v2760
      %v2770 = vadd.s32 %v2768, %v2761
      %v2771 = vadd.s32 %v2768, %v2762
      %v2772 = vadd.s32 %v2768, %v2763
      %v2773 = vadd.s32 %v2768, %v2764
      %v2774 = vadd.s32 %v2768, %v2765
      %v2775 = vadd.s32 %v2768, %v2766
      %v2776 = vadd.s32 %v2768, %v2767
      %vm2777 = vcmp.lt.s32.totalorder %v2769, 500
      %vm2778 = vcmp.lt.s32.totalorder %v2770, 500
      %vm2779 = vcmp.lt.s32.totalorder %v2771, 500
      %vm2780 = vcmp.lt.s32.totalorder %v2772, 500
      %vm2781 = vcmp.lt.s32.totalorder %v2773, 500
      %vm2782 = vcmp.lt.s32.totalorder %v2774, 500
      %vm2783 = vcmp.lt.s32.totalorder %v2775, 500
      %vm2784 = vcmp.lt.s32.totalorder %v2776, 500
      %v2785 = vsel %vm2777, 1, 0
      %v2786 = vsel %vm2778, 1, 0
      %v2787 = vsel %vm2779, 1, 0
      %v2788 = vsel %vm2780, 1, 0
      %v2789 = vsel %vm2781, 1, 0
      %v2790 = vsel %vm2782, 1, 0
      %v2791 = vsel %vm2783, 1, 0
      %v2792 = vsel %vm2784, 1, 0
      %vm2793 = vcmp.eq.s32.totalorder %v2785, 1
      %vm2794 = vcmp.eq.s32.totalorder %v2786, 1
      %vm2795 = vcmp.eq.s32.totalorder %v2787, 1
      %vm2796 = vcmp.eq.s32.totalorder %v2788, 1
      %vm2797 = vcmp.eq.s32.totalorder %v2789, 1
      %vm2798 = vcmp.eq.s32.totalorder %v2790, 1
      %vm2799 = vcmp.eq.s32.totalorder %v2791, 1
      %vm2800 = vcmp.eq.s32.totalorder %v2792, 1
      %v2801 = vsel %vm2793, %v2750, 0.0
      %v2802 = vsel %vm2794, %v2751, 0.0
      %v2803 = vsel %vm2795, %v2752, 0.0
      %v2804 = vsel %vm2796, %v2753, 0.0
      %v2805 = vsel %vm2797, %v2754, 0.0
      %v2806 = vsel %vm2798, %v2755, 0.0
      %v2807 = vsel %vm2799, %v2756, 0.0
      %v2808 = vsel %vm2800, %v2757, 0.0
      %v2809 = vmul.f32 %v2801, %v2801
      %v2810 = vmul.f32 %v2802, %v2802
      %v2811 = vmul.f32 %v2803, %v2803
      %v2812 = vmul.f32 %v2804, %v2804
      %v2813 = vmul.f32 %v2805, %v2805
      %v2814 = vmul.f32 %v2806, %v2806
      %v2815 = vmul.f32 %v2807, %v2807
      %v2816 = vmul.f32 %v2808, %v2808
      %v2817 = vadd.f32 %v2809, %v2810
      %v2818 = vadd.f32 %v2817, %v2811
      %v2819 = vadd.f32 %v2818, %v2812
      %v2820 = vadd.f32 %v2819, %v2813
      %v2821 = vadd.f32 %v2820, %v2814
      %v2822 = vadd.f32 %v2821, %v2815
      %v2823 = vadd.f32 %v2822, %v2816
      %v2824 = vrot.slane %v2823, 4
      %v2825 = vadd.f32 %v2823, %v2824
      %v2826 = vrot.slane %v2825, 2
      %v2827 = vadd.f32 %v2825, %v2826
      %v2828 = vrot.slane %v2827, 1
      %v2829 = vadd.f32 %v2827, %v2828
      %2830 = vst [vmem:[%s263] sm:$0x1] %v2829
      %s2831 = smul.u32 8, %s18
      %p2832 = scmp.lt.s32.totalorder %s2831, 63
      %s2833 = scalar_select %p2832, %s2831, 63
      %s2834 = smul.addr %s2833, 8
      %s2835 = scalar_lea.vmem %s5, %s2834
      %p2836 = scmp.lt.s32.totalorder %s18, 7
      %s2837 = scalar_select %p2836, %s18, 7
      %s2838 = scalar_lea.vmem %s6, %s2837
      // Predicated region
      $region41: #{sae_forward.1} parent=39 // pred_check
        %p2839 = pneg %p146
      $region42: #{sae_forward.1} parent=39 // pred_check_branch
        %2841 = sbr.rel (%p2839) target = $region44
      $region43: #{sae_forward.1} parent=39 // pred_region
        %s2842 = smul.u32 8, %s18
      $region44: #{sae_forward.1} parent=39 // pred_fallthru
        _
      // Predicated region
      $region45: #{sae_forward.1} parent=39 // pred_check
        %p2843 = pneg %p172
      $region46: #{sae_forward.1} parent=39 // pred_check_branch
        %2845 = sbr.rel (%p2843) target = $region48
      $region47: #{sae_forward.1} parent=39 // pred_region
        _
      $region48: #{sae_forward.1} parent=39 // pred_fallthru
        _
    $region40: #{sae_forward.1} parent=5 // pred_fallthru
      _
    %p2846 = scmp.le.s32.totalorder 2, %s13
    // Predicated region
    $region49: #{sae_forward.1} parent=5 // pred_check
      %p2847 = pneg %p2846
    $region50: #{sae_forward.1} parent=5 // pred_check_branch
      %2849 = sbr.rel (%p2847) target = $region52
    $region51: #{sae_forward.1} parent=5 // pred_region
      %s2850 = ssub.s32 %s13, 2
      // Predicated region
      $region53: #{sae_forward.1} parent=51 // pred_check
        %p2851 = pneg %p152
      $region54: #{sae_forward.1} parent=51 // pred_check_branch
        %2853 = sbr.rel (%p2851) target = $region56
      $region55: #{sae_forward.1} parent=51 // pred_region
        %s2854 = smul.u32 8, %s19
        %p2855 = scmp.lt.s32.totalorder %s2854, 63
        %s2856 = scalar_select %p2855, %s2854, 63
        %s2857 = smul.addr %s2856, 8
        %s2858 = scalar_lea.vmem %s5, %s2857
      $region56: #{sae_forward.1} parent=51 // pred_fallthru
        _
      // Predicated region
      $region57: #{sae_forward.1} parent=51 // pred_check
        %p2859 = pneg %p178
      $region58: #{sae_forward.1} parent=51 // pred_check_branch
        %2861 = sbr.rel (%p2859) target = $region60
      $region59: #{sae_forward.1} parent=51 // pred_region
        %p2862 = scmp.lt.s32.totalorder %s19, 7
        %s2863 = scalar_select %p2862, %s19, 7
        %s2864 = scalar_lea.vmem %s6, %s2863
      $region60: #{sae_forward.1} parent=51 // pred_fallthru
        _
    $region52: #{sae_forward.1} parent=5 // pred_fallthru
      _
  $region6: #{sae_forward.1} parent=0 // loop_footer
    %s17 = sadd.s32 1, %s13
  $region7: #{sae_forward.1} parent=0 // loop_footer_branch
    %12 = sbr.rel target = $region3
  $region8: #{sae_forward.1} parent=0 // loop_exit
    _

// kernel: sae_forward.1
$region0: #{sae_forward.1}
  #allocation0 [shape = 'u32[]', space=smem, size = 0x4, offset = 0x4, fixed_abs, tag = 'smem constant byte address 0x4 - core index']
  #allocation1 [shape = 'u32[144,128]{1,0:T(1,128)}', space=vmem, size = 0x12000, scoped, tag = 'internal scratch']
  %s0 = inlined_call_operand.vmem [shape: f32[512,128], index: 0, kind: input, shape index: {}]
  %s1 = inlined_call_operand.vmem [shape: f32[1,512], index: 1, kind: input, shape index: {}]
  %s2 = inlined_call_operand.vmem [shape: bf16[128,512], index: 2, kind: input, shape index: {}]
  %s3 = inlined_call_operand.vmem [shape: bf16[512,128], index: 3, kind: input, shape index: {}]
  %s4 = inlined_call_operand.vmem [shape: f32[1,128], index: 4, kind: input, shape index: {}]
  %s5 = inlined_call_operand.vmem [shape: f32[512,128], index: 5, kind: output, shape index: {0}]
  %s6 = inlined_call_operand.vmem [shape: f32[8,1,128], index: 6, kind: output, shape index: {1}]
  %7 = xla_tuple %s5, %s6
  %s8 = sld [smem:[#allocation0]]
  $region61: #{sae_forward.1} parent=0
    _
  %s10 = ssub.s32 1, %s8
  %s11 = scalar_select 0, %s10, %s8
  loop: start=0, step=1, limit=10
  $region2: #{sae_forward.1} parent=0 // loop_pre_header
    _
  $region3: #{sae_forward.1} parent=0 // loop_header
    %s13 = sphi 0, %s17
    %p14 = scmp.ge.s32.totalorder %s13, 10
    %s23 = sphi 0, %s25
    %s26 = sphi 0, %s23
    %s27 = sphi 0, %s26
    %s43 = sphi 0, %s27
    %s47 = sphi 0, %s47
    %s49 = sphi 0, %s47
    %s50 = sphi 0, %s49
    %s64 = sphi 0, %s50
    %s68 = sphi 0, %s68
    %s70 = sphi 0, %s68
    %s71 = sphi 0, %s70
    %s85 = sphi 0, %s71
    %s89 = sphi 0, %s89
    %s91 = sphi 0, %s89
    %s92 = sphi 0, %s91
    %s106 = sphi 0, %s92
    %s110 = sphi 0, %s110
    %s112 = sphi 0, %s110
    %s113 = sphi 0, %s112
    %s127 = sphi 0, %s113
    %s133 = sphi 0, %s135
    %s136 = sphi 0, %s133
    %s137 = sphi 0, %s136
    %s153 = sphi 0, %s137
    %s159 = sphi 0, %s161
    %s162 = sphi 0, %s159
    %s163 = sphi 0, %s162
    %s179 = sphi 0, %s163
  $region4: #{sae_forward.1} parent=0 // loop_header_branch
    %16 = sbr.rel (%p14) target = $region8
  $region5: #{sae_forward.1} parent=0 // loop_body
    %s18 = ssub.s32 %s13, 1
    %s19 = ssub.s32 %s13, 2
    %s20 = sadd.s32 %s13, 1
    %s21 = ssub.s32 %s13, %s20
    %p22 = scmp.eq.s32.totalorder %s21, 0
    %s24 = sadd.s32 %s23, 1
    %s25 = scalar_select %p22, %s23, %s24
    %p28 = pneg %p22
    %p29 = scmp.eq.s32.totalorder %s13, 7
    %p30 = por %p28, %p29
    %p31 = scmp.ne.s32.totalorder %s23, %s26
    %p32 = scmp.eq.s32.totalorder %s13, 0
    %p33 = por %p31, %p32
    %p34 = scmp.ne.s32.totalorder %s23, %s26
    %p35 = scmp.eq.s32.totalorder %s18, 7
    %p36 = por %p34, %p35
    %p37 = scmp.ne.s32.totalorder %s26, %s27
    %p38 = scmp.eq.s32.totalorder %s18, 0
    %p39 = por %p37, %p38
    %p40 = scmp.ne.s32.totalorder %s26, %s27
    %p41 = scmp.eq.s32.totalorder %s19, 7
    %p42 = por %p40, %p41
    %p44 = scmp.ne.s32.totalorder %s27, %s43
    %p45 = scmp.eq.s32.totalorder %s19, 0
    %p46 = por %p44, %p45
    %s48 = sadd.s32 %s47, 1
    %p51 = scmp.eq.s32.totalorder %s13, 7
    %p52 = scmp.ne.s32.totalorder %s47, %s49
    %p53 = scmp.eq.s32.totalorder %s13, 0
    %p54 = por %p52, %p53
    %p55 = scmp.ne.s32.totalorder %s47, %s49
    %p56 = scmp.eq.s32.totalorder %s18, 7
    %p57 = por %p55, %p56
    %p58 = scmp.ne.s32.totalorder %s49, %s50
    %p59 = scmp.eq.s32.totalorder %s18, 0
    %p60 = por %p58, %p59
    %p61 = scmp.ne.s32.totalorder %s49, %s50
    %p62 = scmp.eq.s32.totalorder %s19, 7
    %p63 = por %p61, %p62
    %p65 = scmp.ne.s32.totalorder %s50, %s64
    %p66 = scmp.eq.s32.totalorder %s19, 0
    %p67 = por %p65, %p66
    %s69 = sadd.s32 %s68, 1
    %p72 = scmp.eq.s32.totalorder %s13, 7
    %p73 = scmp.ne.s32.totalorder %s68, %s70
    %p74 = scmp.eq.s32.totalorder %s13, 0
    %p75 = por %p73, %p74
    %p76 = scmp.ne.s32.totalorder %s68, %s70
    %p77 = scmp.eq.s32.totalorder %s18, 7
    %p78 = por %p76, %p77
    %p79 = scmp.ne.s32.totalorder %s70, %s71
    %p80 = scmp.eq.s32.totalorder %s18, 0
    %p81 = por %p79, %p80
    %p82 = scmp.ne.s32.totalorder %s70, %s71
    %p83 = scmp.eq.s32.totalorder %s19, 7
    %p84 = por %p82, %p83
    %p86 = scmp.ne.s32.totalorder %s71, %s85
    %p87 = scmp.eq.s32.totalorder %s19, 0
    %p88 = por %p86, %p87
    %s90 = sadd.s32 %s89, 1
    %p93 = scmp.eq.s32.totalorder %s13, 7
    %p94 = scmp.ne.s32.totalorder %s89, %s91
    %p95 = scmp.eq.s32.totalorder %s13, 0
    %p96 = por %p94, %p95
    %p97 = scmp.ne.s32.totalorder %s89, %s91
    %p98 = scmp.eq.s32.totalorder %s18, 7
    %p99 = por %p97, %p98
    %p100 = scmp.ne.s32.totalorder %s91, %s92
    %p101 = scmp.eq.s32.totalorder %s18, 0
    %p102 = por %p100, %p101
    %p103 = scmp.ne.s32.totalorder %s91, %s92
    %p104 = scmp.eq.s32.totalorder %s19, 7
    %p105 = por %p103, %p104
    %p107 = scmp.ne.s32.totalorder %s92, %s106
    %p108 = scmp.eq.s32.totalorder %s19, 0
    %p109 = por %p107, %p108
    %s111 = sadd.s32 %s110, 1
    %p114 = scmp.eq.s32.totalorder %s13, 7
    %p115 = scmp.ne.s32.totalorder %s110, %s112
    %p116 = scmp.eq.s32.totalorder %s13, 0
    %p117 = por %p115, %p116
    %p118 = scmp.ne.s32.totalorder %s110, %s112
    %p119 = scmp.eq.s32.totalorder %s18, 7
    %p120 = por %p118, %p119
    %p121 = scmp.ne.s32.totalorder %s112, %s113
    %p122 = scmp.eq.s32.totalorder %s18, 0
    %p123 = por %p121, %p122
    %p124 = scmp.ne.s32.totalorder %s112, %s113
    %p125 = scmp.eq.s32.totalorder %s19, 7
    %p126 = por %p124, %p125
    %p128 = scmp.ne.s32.totalorder %s113, %s127
    %p129 = scmp.eq.s32.totalorder %s19, 0
    %p130 = por %p128, %p129
    %s131 = ssub.s32 %s13, %s20
    %p132 = scmp.eq.s32.totalorder %s131, 0
    %s134 = sadd.s32 %s133, 1
    %s135 = scalar_select %p132, %s133, %s134
    %p138 = pneg %p132
    %p139 = scmp.eq.s32.totalorder %s13, 7
    %p140 = por %p138, %p139
    %p141 = scmp.ne.s32.totalorder %s133, %s136
    %p142 = scmp.eq.s32.totalorder %s13, 0
    %p143 = por %p141, %p142
    %p144 = scmp.ne.s32.totalorder %s133, %s136
    %p145 = scmp.eq.s32.totalorder %s18, 7
    %p146 = por %p144, %p145
    %p147 = scmp.ne.s32.totalorder %s136, %s137
    %p148 = scmp.eq.s32.totalorder %s18, 0
    %p149 = por %p147, %p148
    %p150 = scmp.ne.s32.totalorder %s136, %s137
    %p151 = scmp.eq.s32.totalorder %s19, 7
    %p152 = por %p150, %p151
    %p154 = scmp.ne.s32.totalorder %s137, %s153
    %p155 = scmp.eq.s32.totalorder %s19, 0
    %p156 = por %p154, %p155
    %s157 = ssub.s32 %s13, %s20
    %p158 = scmp.eq.s32.totalorder %s157, 0
    %s160 = sadd.s32 %s159, 1
    %s161 = scalar_select %p158, %s159, %s160
    %p164 = pneg %p158
    %p165 = scmp.eq.s32.totalorder %s13, 7
    %p166 = por %p164, %p165
    %p167 = scmp.ne.s32.totalorder %s159, %s162
    %p168 = scmp.eq.s32.totalorder %s13, 0
    %p169 = por %p167, %p168
    %p170 = scmp.ne.s32.totalorder %s159, %s162
    %p171 = scmp.eq.s32.totalorder %s18, 7
    %p172 = por %p170, %p171
    %p173 = scmp.ne.s32.totalorder %s162, %s163
    %p174 = scmp.eq.s32.totalorder %s18, 0
    %p175 = por %p173, %p174
    %p176 = scmp.ne.s32.totalorder %s162, %s163
    %p177 = scmp.eq.s32.totalorder %s19, 7
    %p178 = por %p176, %p177
    %p180 = scmp.ne.s32.totalorder %s163, %s179
    %p181 = scmp.eq.s32.totalorder %s19, 0
    %p182 = por %p180, %p181
    %p183 = scmp.le.s32.totalorder 1, %s13
    %p184 = scmp.lt.s32.totalorder %s13, 9
    %p185 = pnand %p183, %p184
    %p186 = pneg %p185
    // Predicated region
    $region9: #{sae_forward.1} parent=5 // pred_check
      _
    $region10: #{sae_forward.1} parent=5 // pred_check_branch
      %188 = sbr.rel (%p185) target = $region12
    $region11: #{sae_forward.1} parent=5 // pred_region
      %s189 = ssub.s32 %s13, 1
      // Predicated region
      $region13: #{sae_forward.1} parent=11 // pred_check
        %p190 = pneg %p60
      $region14: #{sae_forward.1} parent=11 // pred_check_branch
        %192 = sbr.rel (%p190) target = $region16
      $region15: #{sae_forward.1} parent=11 // pred_region
        _
      $region16: #{sae_forward.1} parent=11 // pred_fallthru
        _
      // Predicated region
      $region17: #{sae_forward.1} parent=11 // pred_check
        %p193 = pneg %p81
      $region18: #{sae_forward.1} parent=11 // pred_check_branch
        %195 = sbr.rel (%p193) target = $region20
      $region19: #{sae_forward.1} parent=11 // pred_region
        _
      $region20: #{sae_forward.1} parent=11 // pred_fallthru
        _
      // Predicated region
      $region21: #{sae_forward.1} parent=11 // pred_check
        %p196 = pneg %p102
      $region22: #{sae_forward.1} parent=11 // pred_check_branch
        %198 = sbr.rel (%p196) target = $region24
      $region23: #{sae_forward.1} parent=11 // pred_region
        _
      $region24: #{sae_forward.1} parent=11 // pred_fallthru
        _
      // Predicated region
      $region25: #{sae_forward.1} parent=11 // pred_check
        %p199 = pneg %p123
      $region26: #{sae_forward.1} parent=11 // pred_check_branch
        %201 = sbr.rel (%p199) target = $region28
      $region27: #{sae_forward.1} parent=11 // pred_region
        _
      $region28: #{sae_forward.1} parent=11 // pred_fallthru
        _
    $region12: #{sae_forward.1} parent=5 // pred_fallthru
      _
    %p202 = scmp.lt.s32.totalorder %s13, 8
    // Predicated region
    $region29: #{sae_forward.1} parent=5 // pred_check
      %p203 = pneg %p202
    $region30: #{sae_forward.1} parent=5 // pred_check_branch
      %205 = sbr.rel (%p203) target = $region32
    $region31: #{sae_forward.1} parent=5 // pred_region
      // Predicated region
      $region33: #{sae_forward.1} parent=31 // pred_check
        %p206 = pneg %p33
      $region34: #{sae_forward.1} parent=31 // pred_check_branch
        %208 = sbr.rel (%p206) target = $region36
      $region35: #{sae_forward.1} parent=31 // pred_region
        %s209 = smul.u32 8, %s13
        %p210 = scmp.lt.s32.totalorder %s209, 63
        %s211 = scalar_select %p210, %s209, 63
        %s212 = smul.addr %s211, 8
        %s213 = scalar_lea.vmem %s0, %s212
        %s214 = smul.u32 8, %s13
      $region36: #{sae_forward.1} parent=31 // pred_fallthru
        _
    $region32: #{sae_forward.1} parent=5 // pred_fallthru
      _
    %p215 = scmp.le.s32.totalorder 1, %s13
    %p216 = scmp.lt.s32.totalorder %s13, 9
    %p217 = pnand %p215, %p216
    %p218 = pneg %p217
    // Predicated region
    $region37: #{sae_forward.1} parent=5 // pred_check
      _
    $region38: #{sae_forward.1} parent=5 // pred_check_branch
      %220 = sbr.rel (%p217) target = $region40
    $region39: #{sae_forward.1} parent=5 // pred_region
      %s221 = ssub.s32 %s13, 1
      %s222 = smul.u32 8, %s18
      %p223 = scmp.lt.s32.totalorder %s222, 63
      %s224 = scalar_select %p223, %s222, 63
      %s225 = smul.addr %s224, 8
      %s226 = scalar_lea.vmem %s0, %s225
      %p227 = pneg %p39
      %p228 = pneg %p36
      %p229 = pneg %p60
      %p230 = pneg %p57
      %p231 = pneg %p81
      %p232 = pneg %p78
      %p233 = pneg %p102
      %p234 = pneg %p99
      %p235 = pneg %p123
      %p236 = pneg %p120
      %p237 = pneg %p149
      %p238 = pneg %p146
      %s239 = smul.u32 8, %s18
      %p240 = scmp.lt.s32.totalorder %s239, 63
      %s241 = scalar_select %p240, %s239, 63
      %s242 = smul.addr %s241, 8
      %s243 = scalar_lea.vmem %s5, %s242
      %p244 = pneg %p175
      %p245 = pneg %p172
      %p246 = scmp.lt.s32.totalorder %s18, 7
      %s247 = scalar_select %p246, %s18, 7
      %s248 = scalar_lea.vmem %s6, %s247
      %s249 = smul.u32 8, %s18
      %p250 = scmp.lt.s32.totalorder %s249, 63
      %s251 = scalar_select %p250, %s249, 63
      %s252 = smul.addr %s251, 8
      %s253 = scalar_lea.vmem %s0, %s252
      %s254 = smul.u32 8, %s18
      %s255 = smul.u32 8, %s18
      %p256 = scmp.lt.s32.totalorder %s255, 63
      %s257 = scalar_select %p256, %s255, 63
      %s258 = smul.addr %s257, 8
      %s259 = scalar_lea.vmem %s5, %s258
      %s260 = smul.u32 8, %s18
      %p261 = scmp.lt.s32.totalorder %s18, 7
      %s262 = scalar_select %p261, %s18, 7
      %s263 = scalar_lea.vmem %s6, %s262
      %v265 = vld [vmem:[%s253] sm:$0xff]
      %v266 = vld [vmem:[%s253 + $0x8] sm:$0xff]
      %v267 = vld [vmem:[%s253 + $0x10] sm:$0xff]
      %v268 = vld [vmem:[%s253 + $0x18] sm:$0xff]
      %v269 = vld [vmem:[%s253 + $0x20] sm:$0xff]
      %v270 = vld [vmem:[%s253 + $0x28] sm:$0xff]
      %v271 = vld [vmem:[%s253 + $0x30] sm:$0xff]
      %v272 = vld [vmem:[%s253 + $0x38] sm:$0xff]
      %v273 = vpack.c.bf16 %v266, %v265
      %v274 = vpack.c.bf16 %v268, %v267
      %v275 = vpack.c.bf16 %v270, %v269
      %v276 = vpack.c.bf16 %v272, %v271
      %v277 = vld [vmem:[%s2] sm:$0xff]
      %v278 = vld [vmem:[%s2 + $0x8] sm:$0xff]
      %v279 = vld [vmem:[%s2 + $0x10] sm:$0xff]
      %v280 = vld [vmem:[%s2 + $0x18] sm:$0xff]
      %v281 = vld [vmem:[%s2 + $0x20] sm:$0xff]
      %v282 = vld [vmem:[%s2 + $0x28] sm:$0xff]
      %v283 = vld [vmem:[%s2 + $0x30] sm:$0xff]
      %v284 = vld [vmem:[%s2 + $0x38] sm:$0xff]
      %v285 = vld [vmem:[%s2 + $0x40] sm:$0xff]
      %v286 = vld [vmem:[%s2 + $0x48] sm:$0xff]
      %v287 = vld [vmem:[%s2 + $0x50] sm:$0xff]
      %v288 = vld [vmem:[%s2 + $0x58] sm:$0xff]
      %v289 = vld [vmem:[%s2 + $0x60] sm:$0xff]
      %v290 = vld [vmem:[%s2 + $0x68] sm:$0xff]
      %v291 = vld [vmem:[%s2 + $0x70] sm:$0xff]
      %v292 = vld [vmem:[%s2 + $0x78] sm:$0xff]
      %v293 = vld [vmem:[%s2 + $0x80] sm:$0xff]
      %v294 = vld [vmem:[%s2 + $0x88] sm:$0xff]
      %v295 = vld [vmem:[%s2 + $0x90] sm:$0xff]
      %v296 = vld [vmem:[%s2 + $0x98] sm:$0xff]
      %v297 = vld [vmem:[%s2 + $0xa0] sm:$0xff]
      %v298 = vld [vmem:[%s2 + $0xa8] sm:$0xff]
      %v299 = vld [vmem:[%s2 + $0xb0] sm:$0xff]
      %v300 = vld [vmem:[%s2 + $0xb8] sm:$0xff]
      %v301 = vld [vmem:[%s2 + $0xc0] sm:$0xff]
      %v302 = vld [vmem:[%s2 + $0xc8] sm:$0xff]
      %v303 = vld [vmem:[%s2 + $0xd0] sm:$0xff]
      %v304 = vld [vmem:[%s2 + $0xd8] sm:$0xff]
      %v305 = vld [vmem:[%s2 + $0xe0] sm:$0xff]
      %v306 = vld [vmem:[%s2 + $0xe8] sm:$0xff]
      %v307 = vld [vmem:[%s2 + $0xf0] sm:$0xff]
      %v308 = vld [vmem:[%s2 + $0xf8] sm:$0xff]
      %v309 = vld [vmem:[%s1] sm:$0xf]
      %v311 = vlaneseq
      %v312 = vshrl.u32 %v311, 7
      %v313 = vsub.s32 0, %v312
      %v314 = vrot.slane %v309, %v313
      %v315 = vlaneseq
      %v316 = vshrl.u32 %v315, 7
      %v317 = vsub.s32 1, %v316
      %v318 = vrot.slane %v309, %v317
      %v319 = vlaneseq
      %v320 = vshrl.u32 %v319, 7
      %v321 = vsub.s32 2, %v320
      %v322 = vrot.slane %v309, %v321
      %v323 = vlaneseq
      %v324 = vshrl.u32 %v323, 7
      %v325 = vsub.s32 3, %v324
      %v326 = vrot.slane %v309, %v325
      %v363 = vunpack.c.l.b16 %v277
      %v364 = vunpack.c.h.b16 %v277
      %v365 = vunpack.c.l.b16 %v278
      %v366 = vunpack.c.h.b16 %v278
      %v367 = vunpack.c.l.b16 %v279
      %v368 = vunpack.c.h.b16 %v279
      %v369 = vunpack.c.l.b16 %v280
      %v370 = vunpack.c.h.b16 %v280
      %v371 = vunpack.c.l.b16 %v281
      %v372 = vunpack.c.h.b16 %v281
      %v373 = vunpack.c.l.b16 %v282
      %v374 = vunpack.c.h.b16 %v282
      %v375 = vunpack.c.l.b16 %v283
      %v376 = vunpack.c.h.b16 %v283
      %v377 = vunpack.c.l.b16 %v284
      %v378 = vunpack.c.h.b16 %v284
      %v379 = vunpack.c.l.b16 %v285
      %v380 = vunpack.c.h.b16 %v285
      %v381 = vunpack.c.l.b16 %v286
      %v382 = vunpack.c.h.b16 %v286
      %v383 = vunpack.c.l.b16 %v287
      %v384 = vunpack.c.h.b16 %v287
      %v385 = vunpack.c.l.b16 %v288
      %v386 = vunpack.c.h.b16 %v288
      %v387 = vunpack.c.l.b16 %v289
      %v388 = vunpack.c.h.b16 %v289
      %v389 = vunpack.c.l.b16 %v290
      %v390 = vunpack.c.h.b16 %v290
      %v391 = vunpack.c.l.b16 %v291
      %v392 = vunpack.c.h.b16 %v291
      %v393 = vunpack.c.l.b16 %v292
      %v394 = vunpack.c.h.b16 %v292
      %v395 = vunpack.c.l.b16 %v293
      %v396 = vunpack.c.h.b16 %v293
      %v397 = vunpack.c.l.b16 %v294
      %v398 = vunpack.c.h.b16 %v294
      %v399 = vunpack.c.l.b16 %v295
      %v400 = vunpack.c.h.b16 %v295
      %v401 = vunpack.c.l.b16 %v296
      %v402 = vunpack.c.h.b16 %v296
      %v403 = vunpack.c.l.b16 %v297
      %v404 = vunpack.c.h.b16 %v297
      %v405 = vunpack.c.l.b16 %v298
      %v406 = vunpack.c.h.b16 %v298
      %v407 = vunpack.c.l.b16 %v299
      %v408 = vunpack.c.h.b16 %v299
      %v409 = vunpack.c.l.b16 %v300
      %v410 = vunpack.c.h.b16 %v300
      %v411 = vunpack.c.l.b16 %v301
      %v412 = vunpack.c.h.b16 %v301
      %v413 = vunpack.c.l.b16 %v302
      %v414 = vunpack.c.h.b16 %v302
      %v415 = vunpack.c.l.b16 %v303
      %v416 = vunpack.c.h.b16 %v303
      %v417 = vunpack.c.l.b16 %v304
      %v418 = vunpack.c.h.b16 %v304
      %v419 = vunpack.c.l.b16 %v305
      %v420 = vunpack.c.h.b16 %v305
      %v421 = vunpack.c.l.b16 %v306
      %v422 = vunpack.c.h.b16 %v306
      %v423 = vunpack.c.l.b16 %v307
      %v424 = vunpack.c.h.b16 %v307
      %v425 = vunpack.c.l.b16 %v308
      %v426 = vunpack.c.h.b16 %v308
      %v427 = vpack.c.b16 %v367, %v363
      %v428 = vpack.c.b16 %v368, %v364
      %v429 = vpack.c.b16 %v369, %v365
      %v430 = vpack.c.b16 %v370, %v366
      %v431 = vpack.c.b16 %v375, %v371
      %v432 = vpack.c.b16 %v376, %v372
      %v433 = vpack.c.b16 %v377, %v373
      %v434 = vpack.c.b16 %v378, %v374
      %v435 = vpack.c.b16 %v383, %v379
      %v436 = vpack.c.b16 %v384, %v380
      %v437 = vpack.c.b16 %v385, %v381
      %v438 = vpack.c.b16 %v386, %v382
      %v439 = vpack.c.b16 %v391, %v387
      %v440 = vpack.c.b16 %v392, %v388
      %v441 = vpack.c.b16 %v393, %v389
      %v442 = vpack.c.b16 %v394, %v390
      %v443 = vpack.c.b16 %v399, %v395
      %v444 = vpack.c.b16 %v400, %v396
      %v445 = vpack.c.b16 %v401, %v397
      %v446 = vpack.c.b16 %v402, %v398
      %v447 = vpack.c.b16 %v407, %v403
      %v448 = vpack.c.b16 %v408, %v404
      %v449 = vpack.c.b16 %v409, %v405
      %v450 = vpack.c.b16 %v410, %v406
      %v451 = vpack.c.b16 %v415, %v411
      %v452 = vpack.c.b16 %v416, %v412
      %v453 = vpack.c.b16 %v417, %v413
      %v454 = vpack.c.b16 %v418, %v414
      %v455 = vpack.c.b16 %v423, %v419
      %v456 = vpack.c.b16 %v424, %v420
      %v457 = vpack.c.b16 %v425, %v421
      %v458 = vpack.c.b16 %v426, %v422
      %491 = vmatprep.subr.bf16.mxu0 %v428
      %492 = vmatpush1.bf16.msra.mxu0 %v427
      %493 = vmatprep.subr.bf16.mxu0 %v432
      %494 = vmatpush1.bf16.msra.mxu0 %v431
      %495 = vmatprep.subr.bf16.mxu0 %v436
      %496 = vmatpush1.bf16.msra.mxu0 %v435
      %497 = vmatprep.subr.bf16.mxu0 %v440
      %498 = vmatpush1.bf16.msra.mxu0 %v439
      %499 = vmatprep.subr.bf16.mxu0 %v444
      %500 = vmatpush1.bf16.msra.mxu0 %v443
      %501 = vmatprep.subr.bf16.mxu0 %v448
      %502 = vmatpush1.bf16.msra.mxu0 %v447
      %503 = vmatprep.subr.bf16.mxu0 %v452
      %504 = vmatpush1.bf16.msra.mxu0 %v451
      %505 = vmatprep.subr.bf16.mxu0 %v456
      %506 = vmatpush1.bf16.msra.mxu0 %v455
      %507 = vmatprep.subr.bf16.mxu0 0
      %508 = vmatpush1.bf16.msra.mxu0 0
      %509 = vmatprep.subr.bf16.mxu0 0
      %510 = vmatpush1.bf16.msra.mxu0 0
      %511 = vmatprep.subr.bf16.mxu0 0
      %512 = vmatpush1.bf16.msra.mxu0 0
      %513 = vmatprep.subr.bf16.mxu0 0
      %514 = vmatpush1.bf16.msra.mxu0 0
      %515 = vmatprep.subr.bf16.mxu0 0
      %516 = vmatpush1.bf16.msra.mxu0 0
      %517 = vmatprep.subr.bf16.mxu0 0
      %518 = vmatpush1.bf16.msra.mxu0 0
      %519 = vmatprep.subr.bf16.mxu0 0
      %520 = vmatpush1.bf16.msra.mxu0 0
      %521 = vmatprep.subr.bf16.mxu0 0
      %522 = vmatpush1.bf16.msra.mxu0 0
      %523 = vmatprep.mubr.bf16.mxu0 0
      %524 = vmatmul.mubr.bf16.gmra.mrb[0].mxu0 %v273
      %v525 = vpop.f32.mrb[0].mxu0
      %v526 = vadd.f32 %v314, %v525
      %v527 = vpop.f32.mrb[0].mxu0
      %v528 = vadd.f32 %v318, %v527
      %v529 = vpop.f32.mrb[0].mxu0
      %v530 = vadd.f32 %v314, %v529
      %v531 = vpop.f32.mrb[0].mxu0
      %v532 = vadd.f32 %v318, %v531
      %533 = vmatprep.mubr.bf16.mxu0 0
      %534 = vmatmul.mubr.bf16.gmra.mrb[0].mxu0 %v274
      %v535 = vpop.f32.mrb[0].mxu0
      %v536 = vadd.f32 %v314, %v535
      %v537 = vpop.f32.mrb[0].mxu0
      %v538 = vadd.f32 %v318, %v537
      %v539 = vpop.f32.mrb[0].mxu0
      %v540 = vadd.f32 %v314, %v539
      %v541 = vpop.f32.mrb[0].mxu0
      %v542 = vadd.f32 %v318, %v541
      %543 = vmatprep.mubr.bf16.mxu0 0
      %544 = vmatmul.mubr.bf16.gmra.mrb[0].mxu0 %v275
      %v545 = vpop.f32.mrb[0].mxu0
      %v546 = vadd.f32 %v314, %v545
      %v547 = vpop.f32.mrb[0].mxu0
      %v548 = vadd.f32 %v318, %v547
      %v549 = vpop.f32.mrb[0].mxu0
      %v550 = vadd.f32 %v314, %v549
      %v551 = vpop.f32.mrb[0].mxu0
      %v552 = vadd.f32 %v318, %v551
      %553 = vmatprep.mubr.bf16.mxu0 0
      %554 = vmatmul.mubr.bf16.gmra.mrb[0].mxu0 %v276
      %v555 = vpop.f32.mrb[0].mxu0
      %v556 = vadd.f32 %v314, %v555
      %v557 = vpop.f32.mrb[0].mxu0
      %v558 = vadd.f32 %v318, %v557
      %v559 = vpop.f32.mrb[0].mxu0
      %v560 = vadd.f32 %v314, %v559
      %v561 = vpop.f32.mrb[0].mxu0
      %v562 = vadd.f32 %v318, %v561
      %563 = vdwg.mxu0
      %564 = vmatprep.subr.bf16.mxu0 %v430
      %565 = vmatpush1.bf16.msra.mxu0 %v429
      %566 = vmatprep.subr.bf16.mxu0 %v434
      %567 = vmatpush1.bf16.msra.mxu0 %v433
      %568 = vmatprep.subr.bf16.mxu0 %v438
      %569 = vmatpush1.bf16.msra.mxu0 %v437
      %570 = vmatprep.subr.bf16.mxu0 %v442
      %571 = vmatpush1.bf16.msra.mxu0 %v441
      %572 = vmatprep.subr.bf16.mxu0 %v446
      %573 = vmatpush1.bf16.msra.mxu0 %v445
      %574 = vmatprep.subr.bf16.mxu0 %v450
      %575 = vmatpush1.bf16.msra.mxu0 %v449
      %576 = vmatprep.subr.bf16.mxu0 %v454
      %577 = vmatpush1.bf16.msra.mxu0 %v453
      %578 = vmatprep.subr.bf16.mxu0 %v458
      %579 = vmatpush1.bf16.msra.mxu0 %v457
      %580 = vmatprep.subr.bf16.mxu0 0
      %581 = vmatpush1.bf16.msra.mxu0 0
      %582 = vmatprep.subr.bf16.mxu0 0
      %583 = vmatpush1.bf16.msra.mxu0 0
      %584 = vmatprep.subr.bf16.mxu0 0
      %585 = vmatpush1.bf16.msra.mxu0 0
      %586 = vmatprep.subr.bf16.mxu0 0
      %587 = vmatpush1.bf16.msra.mxu0 0
      %588 = vmatprep.subr.bf16.mxu0 0
      %589 = vmatpush1.bf16.msra.mxu0 0
      %590 = vmatprep.subr.bf16.mxu0 0
      %591 = vmatpush1.bf16.msra.mxu0 0
      %592 = vmatprep.subr.bf16.mxu0 0
      %593 = vmatpush1.bf16.msra.mxu0 0
      %594 = vmatprep.subr.bf16.mxu0 0
      %595 = vmatpush1.bf16.msra.mxu0 0
      %596 = vmatprep.mubr.bf16.mxu0 0
      %597 = vmatmul.mubr.bf16.gmra.mrb[0].mxu0 %v273
      %v598 = vpop.f32.mrb[0].mxu0
      %v599 = vadd.f32 %v322, %v598
      %v600 = vpop.f32.mrb[0].mxu0
      %v601 = vadd.f32 %v326, %v600
      %v602 = vpop.f32.mrb[0].mxu0
      %v603 = vadd.f32 %v322, %v602
      %v604 = vpop.f32.mrb[0].mxu0
      %v605 = vadd.f32 %v326, %v604
      %606 = vmatprep.mubr.bf16.mxu0 0
      %607 = vmatmul.mubr.bf16.gmra.mrb[0].mxu0 %v274
      %v608 = vpop.f32.mrb[0].mxu0
      %v609 = vadd.f32 %v322, %v608
      %v610 = vpop.f32.mrb[0].mxu0
      %v611 = vadd.f32 %v326, %v610
      %v612 = vpop.f32.mrb[0].mxu0
      %v613 = vadd.f32 %v322, %v612
      %v614 = vpop.f32.mrb[0].mxu0
      %v615 = vadd.f32 %v326, %v614
      %616 = vmatprep.mubr.bf16.mxu0 0
      %617 = vmatmul.mubr.bf16.gmra.mrb[0].mxu0 %v275
      %v618 = vpop.f32.mrb[0].mxu0
      %v619 = vadd.f32 %v322, %v618
      %v620 = vpop.f32.mrb[0].mxu0
      %v621 = vadd.f32 %v326, %v620
      %v622 = vpop.f32.mrb[0].mxu0
      %v623 = vadd.f32 %v322, %v622
      %v624 = vpop.f32.mrb[0].mxu0
      %v625 = vadd.f32 %v326, %v624
      %626 = vmatprep.mubr.bf16.mxu0 0
      %627 = vmatmul.mubr.bf16.gmra.mrb[0].mxu0 %v276
      %v628 = vpop.f32.mrb[0].mxu0
      %v629 = vadd.f32 %v322, %v628
      %v630 = vpop.f32.mrb[0].mxu0
      %v631 = vadd.f32 %v326, %v630
      %v632 = vpop.f32.mrb[0].mxu0
      %v633 = vadd.f32 %v322, %v632
      %v634 = vpop.f32.mrb[0].mxu0
      %v635 = vadd.f32 %v326, %v634
      %636 = vdwg.mxu0
      %v637 = vmax.f32 %v526, 0.0
      %v638 = vmax.f32 %v528, 0.0
      %v639 = vmax.f32 %v599, 0.0
      %v640 = vmax.f32 %v601, 0.0
      %v641 = vmax.f32 %v530, 0.0
      %v642 = vmax.f32 %v532, 0.0
      %v643 = vmax.f32 %v603, 0.0
      %v644 = vmax.f32 %v605, 0.0
      %v645 = vmax.f32 %v536, 0.0
      %v646 = vmax.f32 %v538, 0.0
      %v647 = vmax.f32 %v609, 0.0
      %v648 = vmax.f32 %v611, 0.0
      %v649 = vmax.f32 %v540, 0.0
      %v650 = vmax.f32 %v542, 0.0
      %v651 = vmax.f32 %v613, 0.0
      %v652 = vmax.f32 %v615, 0.0
      %v653 = vmax.f32 %v546, 0.0
      %v654 = vmax.f32 %v548, 0.0
      %v655 = vmax.f32 %v619, 0.0
      %v656 = vmax.f32 %v621, 0.0
      %v657 = vmax.f32 %v550, 0.0
      %v658 = vmax.f32 %v552, 0.0
      %v659 = vmax.f32 %v623, 0.0
      %v660 = vmax.f32 %v625, 0.0
      %v661 = vmax.f32 %v556, 0.0
      %v662 = vmax.f32 %v558, 0.0
      %v663 = vmax.f32 %v629, 0.0
      %v664 = vmax.f32 %v631, 0.0
      %v665 = vmax.f32 %v560, 0.0
      %v666 = vmax.f32 %v562, 0.0
      %v667 = vmax.f32 %v633, 0.0
      %v668 = vmax.f32 %v635, 0.0
      %v669 = vmax.f32 %v637, %v638
      %v670 = vmax.f32 %v669, %v639
      %v671 = vmax.f32 %v670, %v640
      %672 = vmax.xlane.f32.xlu0 %v671
      %v673 = vpop.xlane.xlu0 %672
      %v674 = vmax.f32 %v641, %v642
      %v675 = vmax.f32 %v674, %v643
      %v676 = vmax.f32 %v675, %v644
      %677 = vmax.xlane.f32.xlu0 %v676
      %v678 = vpop.xlane.xlu0 %677
      %v679 = vmax.f32 %v645, %v646
      %v680 = vmax.f32 %v679, %v647
      %v681 = vmax.f32 %v680, %v648
      %682 = vmax.xlane.f32.xlu0 %v681
      %v683 = vpop.xlane.xlu0 %682
      %v684 = vmax.f32 %v649, %v650
      %v685 = vmax.f32 %v684, %v651
      %v686 = vmax.f32 %v685, %v652
      %687 = vmax.xlane.f32.xlu0 %v686
      %v688 = vpop.xlane.xlu0 %687
      %v689 = vmax.f32 %v653, %v654
      %v690 = vmax.f32 %v689, %v655
      %v691 = vmax.f32 %v690, %v656
      %692 = vmax.xlane.f32.xlu0 %v691
      %v693 = vpop.xlane.xlu0 %692
      %v694 = vmax.f32 %v657, %v658
      %v695 = vmax.f32 %v694, %v659
      %v696 = vmax.f32 %v695, %v660
      %697 = vmax.xlane.f32.xlu0 %v696
      %v698 = vpop.xlane.xlu0 %697
      %v699 = vmax.f32 %v661, %v662
      %v700 = vmax.f32 %v699, %v663
      %v701 = vmax.f32 %v700, %v664
      %702 = vmax.xlane.f32.xlu0 %v701
      %v703 = vpop.xlane.xlu0 %702
      %v704 = vmax.f32 %v665, %v666
      %v705 = vmax.f32 %v704, %v667
      %v706 = vmax.f32 %v705, %v668
      %707 = vmax.xlane.f32.xlu0 %v706
      %v708 = vpop.xlane.xlu0 %707
      %vm709 = vcmp.ge.f32.partialorder %v637, %v673
      %vm710 = vcmp.ge.f32.partialorder %v638, %v673
      %vm711 = vcmp.ge.f32.partialorder %v639, %v673
      %vm712 = vcmp.ge.f32.partialorder %v640, %v673
      %vm713 = vcmp.ge.f32.partialorder %v641, %v678
      %vm714 = vcmp.ge.f32.partialorder %v642, %v678
      %vm715 = vcmp.ge.f32.partialorder %v643, %v678
      %vm716 = vcmp.ge.f32.partialorder %v644, %v678
      %vm717 = vcmp.ge.f32.partialorder %v645, %v683
      %vm718 = vcmp.ge.f32.partialorder %v646, %v683
      %vm719 = vcmp.ge.f32.partialorder %v647, %v683
      %vm720 = vcmp.ge.f32.partialorder %v648, %v683
      %vm721 = vcmp.ge.f32.partialorder %v649, %v688
      %vm722 = vcmp.ge.f32.partialorder %v650, %v688
      %vm723 = vcmp.ge.f32.partialorder %v651, %v688
      %vm724 = vcmp.ge.f32.partialorder %v652, %v688
      %vm725 = vcmp.ge.f32.partialorder %v653, %v693
      %vm726 = vcmp.ge.f32.partialorder %v654, %v693
      %vm727 = vcmp.ge.f32.partialorder %v655, %v693
      %vm728 = vcmp.ge.f32.partialorder %v656, %v693
      %vm729 = vcmp.ge.f32.partialorder %v657, %v698
      %vm730 = vcmp.ge.f32.partialorder %v658, %v698
      %vm731 = vcmp.ge.f32.partialorder %v659, %v698
      %vm732 = vcmp.ge.f32.partialorder %v660, %v698
      %vm733 = vcmp.ge.f32.partialorder %v661, %v703
      %vm734 = vcmp.ge.f32.partialorder %v662, %v703
      %vm735 = vcmp.ge.f32.partialorder %v663, %v703
      %vm736 = vcmp.ge.f32.partialorder %v664, %v703
      %vm737 = vcmp.ge.f32.partialorder %v665, %v708
      %vm738 = vcmp.ge.f32.partialorder %v666, %v708
      %vm739 = vcmp.ge.f32.partialorder %v667, %v708
      %vm740 = vcmp.ge.f32.partialorder %v668, %v708
      %v741 = vsel %vm709, -inf, %v637
      %v742 = vsel %vm710, -inf, %v638
      %v743 = vsel %vm711, -inf, %v639
      %v744 = vsel %vm712, -inf, %v640
      %v745 = vsel %vm713, -inf, %v641
      %v746 = vsel %vm714, -inf, %v642
      %v747 = vsel %vm715, -inf, %v643
      %v748 = vsel %vm716, -inf, %v644
      %v749 = vsel %vm717, -inf, %v645
      %v750 = vsel %vm718, -inf, %v646
      %v751 = vsel %vm719, -inf, %v647
      %v752 = vsel %vm720, -inf, %v648
      %v753 = vsel %vm721, -inf, %v649
      %v754 = vsel %vm722, -inf, %v650
      %v755 = vsel %vm723, -inf, %v651
      %v756 = vsel %vm724, -inf, %v652
      %v757 = vsel %vm725, -inf, %v653
      %v758 = vsel %vm726, -inf, %v654
      %v759 = vsel %vm727, -inf, %v655
      %v760 = vsel %vm728, -inf, %v656
      %v761 = vsel %vm729, -inf, %v657
      %v762 = vsel %vm730, -inf, %v658
      %v763 = vsel %vm731, -inf, %v659
      %v764 = vsel %vm732, -inf, %v660
      %v765 = vsel %vm733, -inf, %v661
      %v766 = vsel %vm734, -inf, %v662
      %v767 = vsel %vm735, -inf, %v663
      %v768 = vsel %vm736, -inf, %v664
      %v769 = vsel %vm737, -inf, %v665
      %v770 = vsel %vm738, -inf, %v666
      %v771 = vsel %vm739, -inf, %v667
      %v772 = vsel %vm740, -inf, %v668
      %v773 = vmax.f32 %v741, %v742
      %v774 = vmax.f32 %v773, %v743
      %v775 = vmax.f32 %v774, %v744
      %776 = vmax.xlane.f32.xlu0 %v775
      %v777 = vpop.xlane.xlu0 %776
      %v778 = vmax.f32 %v745, %v746
      %v779 = vmax.f32 %v778, %v747
      %v780 = vmax.f32 %v779, %v748
      %781 = vmax.xlane.f32.xlu0 %v780
      %v782 = vpop.xlane.xlu0 %781
      %v783 = vmax.f32 %v749, %v750
      %v784 = vmax.f32 %v783, %v751
      %v785 = vmax.f32 %v784, %v752
      %786 = vmax.xlane.f32.xlu0 %v785
      %v787 = vpop.xlane.xlu0 %786
      %v788 = vmax.f32 %v753, %v754
      %v789 = vmax.f32 %v788, %v755
      %v790 = vmax.f32 %v789, %v756
      %791 = vmax.xlane.f32.xlu0 %v790
      %v792 = vpop.xlane.xlu0 %791
      %v793 = vmax.f32 %v757, %v758
      %v794 = vmax.f32 %v793, %v759
      %v795 = vmax.f32 %v794, %v760
      %796 = vmax.xlane.f32.xlu0 %v795
      %v797 = vpop.xlane.xlu0 %796
      %v798 = vmax.f32 %v761, %v762
      %v799 = vmax.f32 %v798, %v763
      %v800 = vmax.f32 %v799, %v764
      %801 = vmax.xlane.f32.xlu0 %v800
      %v802 = vpop.xlane.xlu0 %801
      %v803 = vmax.f32 %v765, %v766
      %v804 = vmax.f32 %v803, %v767
      %v805 = vmax.f32 %v804, %v768
      %806 = vmax.xlane.f32.xlu0 %v805
      %v807 = vpop.xlane.xlu0 %806
      %v808 = vmax.f32 %v769, %v770
      %v809 = vmax.f32 %v808, %v771
      %v810 = vmax.f32 %v809, %v772
      %811 = vmax.xlane.f32.xlu0 %v810
      %v812 = vpop.xlane.xlu0 %811
      %vm813 = vcmp.ge.f32.partialorder %v637, %v777
      %vm814 = vcmp.ge.f32.partialorder %v638, %v777
      %vm815 = vcmp.ge.f32.partialorder %v639, %v777
      %vm816 = vcmp.ge.f32.partialorder %v640, %v777
      %vm817 = vcmp.ge.f32.partialorder %v641, %v782
      %vm818 = vcmp.ge.f32.partialorder %v642, %v782
      %vm819 = vcmp.ge.f32.partialorder %v643, %v782
      %vm820 = vcmp.ge.f32.partialorder %v644, %v782
      %vm821 = vcmp.ge.f32.partialorder %v645, %v787
      %vm822 = vcmp.ge.f32.partialorder %v646, %v787
      %vm823 = vcmp.ge.f32.partialorder %v647, %v787
      %vm824 = vcmp.ge.f32.partialorder %v648, %v787
      %vm825 = vcmp.ge.f32.partialorder %v649, %v792
      %vm826 = vcmp.ge.f32.partialorder %v650, %v792
      %vm827 = vcmp.ge.f32.partialorder %v651, %v792
      %vm828 = vcmp.ge.f32.partialorder %v652, %v792
      %vm829 = vcmp.ge.f32.partialorder %v653, %v797
      %vm830 = vcmp.ge.f32.partialorder %v654, %v797
      %vm831 = vcmp.ge.f32.partialorder %v655, %v797
      %vm832 = vcmp.ge.f32.partialorder %v656, %v797
      %vm833 = vcmp.ge.f32.partialorder %v657, %v802
      %vm834 = vcmp.ge.f32.partialorder %v658, %v802
      %vm835 = vcmp.ge.f32.partialorder %v659, %v802
      %vm836 = vcmp.ge.f32.partialorder %v660, %v802
      %vm837 = vcmp.ge.f32.partialorder %v661, %v807
      %vm838 = vcmp.ge.f32.partialorder %v662, %v807
      %vm839 = vcmp.ge.f32.partialorder %v663, %v807
      %vm840 = vcmp.ge.f32.partialorder %v664, %v807
      %vm841 = vcmp.ge.f32.partialorder %v665, %v812
      %vm842 = vcmp.ge.f32.partialorder %v666, %v812
      %vm843 = vcmp.ge.f32.partialorder %v667, %v812
      %vm844 = vcmp.ge.f32.partialorder %v668, %v812
      %v845 = vsel %vm813, -inf, %v637
      %v846 = vsel %vm814, -inf, %v638
      %v847 = vsel %vm815, -inf, %v639
      %v848 = vsel %vm816, -inf, %v640
      %v849 = vsel %vm817, -inf, %v641
      %v850 = vsel %vm818, -inf, %v642
      %v851 = vsel %vm819, -inf, %v643
      %v852 = vsel %vm820, -inf, %v644
      %v853 = vsel %vm821, -inf, %v645
      %v854 = vsel %vm822, -inf, %v646
      %v855 = vsel %vm823, -inf, %v647
      %v856 = vsel %vm824, -inf, %v648
      %v857 = vsel %vm825, -inf, %v649
      %v858 = vsel %vm826, -inf, %v650
      %v859 = vsel %vm827, -inf, %v651
      %v860 = vsel %vm828, -inf, %v652
      %v861 = vsel %vm829, -inf, %v653
      %v862 = vsel %vm830, -inf, %v654
      %v863 = vsel %vm831, -inf, %v655
      %v864 = vsel %vm832, -inf, %v656
      %v865 = vsel %vm833, -inf, %v657
      %v866 = vsel %vm834, -inf, %v658
      %v867 = vsel %vm835, -inf, %v659
      %v868 = vsel %vm836, -inf, %v660
      %v869 = vsel %vm837, -inf, %v661
      %v870 = vsel %vm838, -inf, %v662
      %v871 = vsel %vm839, -inf, %v663
      %v872 = vsel %vm840, -inf, %v664
      %v873 = vsel %vm841, -inf, %v665
      %v874 = vsel %vm842, -inf, %v666
      %v875 = vsel %vm843, -inf, %v667
      %v876 = vsel %vm844, -inf, %v668
      %v877 = vmax.f32 %v845, %v846
      %v878 = vmax.f32 %v877, %v847
      %v879 = vmax.f32 %v878, %v848
      %880 = vmax.xlane.f32.xlu0 %v879
      %v881 = vpop.xlane.xlu0 %880
      %v882 = vmax.f32 %v849, %v850
      %v883 = vmax.f32 %v882, %v851
      %v884 = vmax.f32 %v883, %v852
      %885 = vmax.xlane.f32.xlu0 %v884
      %v886 = vpop.xlane.xlu0 %885
      %v887 = vmax.f32 %v853, %v854
      %v888 = vmax.f32 %v887, %v855
      %v889 = vmax.f32 %v888, %v856
      %890 = vmax.xlane.f32.xlu0 %v889
      %v891 = vpop.xlane.xlu0 %890
      %v892 = vmax.f32 %v857, %v858
      %v893 = vmax.f32 %v892, %v859
      %v894 = vmax.f32 %v893, %v860
      %895 = vmax.xlane.f32.xlu0 %v894
      %v896 = vpop.xlane.xlu0 %895
      %v897 = vmax.f32 %v861, %v862
      %v898 = vmax.f32 %v897, %v863
      %v899 = vmax.f32 %v898, %v864
      %900 = vmax.xlane.f32.xlu0 %v899
      %v901 = vpop.xlane.xlu0 %900
      %v902 = vmax.f32 %v865, %v866
      %v903 = vmax.f32 %v902, %v867
      %v904 = vmax.f32 %v903, %v868
      %905 = vmax.xlane.f32.xlu0 %v904
      %v906 = vpop.xlane.xlu0 %905
      %v907 = vmax.f32 %v869, %v870
      %v908 = vmax.f32 %v907, %v871
      %v909 = vmax.f32 %v908, %v872
      %910 = vmax.xlane.f32.xlu0 %v909
      %v911 = vpop.xlane.xlu0 %910
      %v912 = vmax.f32 %v873, %v874
      %v913 = vmax.f32 %v912, %v875
      %v914 = vmax.f32 %v913, %v876
      %915 = vmax.xlane.f32.xlu0 %v914
      %v916 = vpop.xlane.xlu0 %915
      %vm917 = vcmp.ge.f32.partialorder %v637, %v881
      %vm918 = vcmp.ge.f32.partialorder %v638, %v881
      %vm919 = vcmp.ge.f32.partialorder %v639, %v881
      %vm920 = vcmp.ge.f32.partialorder %v640, %v881
      %vm921 = vcmp.ge.f32.partialorder %v641, %v886
      %vm922 = vcmp.ge.f32.partialorder %v642, %v886
      %vm923 = vcmp.ge.f32.partialorder %v643, %v886
      %vm924 = vcmp.ge.f32.partialorder %v644, %v886
      %vm925 = vcmp.ge.f32.partialorder %v645, %v891
      %vm926 = vcmp.ge.f32.partialorder %v646, %v891
      %vm927 = vcmp.ge.f32.partialorder %v647, %v891
      %vm928 = vcmp.ge.f32.partialorder %v648, %v891
      %vm929 = vcmp.ge.f32.partialorder %v649, %v896
      %vm930 = vcmp.ge.f32.partialorder %v650, %v896
      %vm931 = vcmp.ge.f32.partialorder %v651, %v896
      %vm932 = vcmp.ge.f32.partialorder %v652, %v896
      %vm933 = vcmp.ge.f32.partialorder %v653, %v901
      %vm934 = vcmp.ge.f32.partialorder %v654, %v901
      %vm935 = vcmp.ge.f32.partialorder %v655, %v901
      %vm936 = vcmp.ge.f32.partialorder %v656, %v901
      %vm937 = vcmp.ge.f32.partialorder %v657, %v906
      %vm938 = vcmp.ge.f32.partialorder %v658, %v906
      %vm939 = vcmp.ge.f32.partialorder %v659, %v906
      %vm940 = vcmp.ge.f32.partialorder %v660, %v906
      %vm941 = vcmp.ge.f32.partialorder %v661, %v911
      %vm942 = vcmp.ge.f32.partialorder %v662, %v911
      %vm943 = vcmp.ge.f32.partialorder %v663, %v911
      %vm944 = vcmp.ge.f32.partialorder %v664, %v911
      %vm945 = vcmp.ge.f32.partialorder %v665, %v916
      %vm946 = vcmp.ge.f32.partialorder %v666, %v916
      %vm947 = vcmp.ge.f32.partialorder %v667, %v916
      %vm948 = vcmp.ge.f32.partialorder %v668, %v916
      %v949 = vsel %vm917, -inf, %v637
      %v950 = vsel %vm918, -inf, %v638
      %v951 = vsel %vm919, -inf, %v639
      %v952 = vsel %vm920, -inf, %v640
      %v953 = vsel %vm921, -inf, %v641
      %v954 = vsel %vm922, -inf, %v642
      %v955 = vsel %vm923, -inf, %v643
      %v956 = vsel %vm924, -inf, %v644
      %v957 = vsel %vm925, -inf, %v645
      %v958 = vsel %vm926, -inf, %v646
      %v959 = vsel %vm927, -inf, %v647
      %v960 = vsel %vm928, -inf, %v648
      %v961 = vsel %vm929, -inf, %v649
      %v962 = vsel %vm930, -inf, %v650
      %v963 = vsel %vm931, -inf, %v651
      %v964 = vsel %vm932, -inf, %v652
      %v965 = vsel %vm933, -inf, %v653
      %v966 = vsel %vm934, -inf, %v654
      %v967 = vsel %vm935, -inf, %v655
      %v968 = vsel %vm936, -inf, %v656
      %v969 = vsel %vm937, -inf, %v657
      %v970 = vsel %vm938, -inf, %v658
      %v971 = vsel %vm939, -inf, %v659
      %v972 = vsel %vm940, -inf, %v660
      %v973 = vsel %vm941, -inf, %v661
      %v974 = vsel %vm942, -inf, %v662
      %v975 = vsel %vm943, -inf, %v663
      %v976 = vsel %vm944, -inf, %v664
      %v977 = vsel %vm945, -inf, %v665
      %v978 = vsel %vm946, -inf, %v666
      %v979 = vsel %vm947, -inf, %v667
      %v980 = vsel %vm948, -inf, %v668
      %v981 = vmax.f32 %v949, %v950
      %v982 = vmax.f32 %v981, %v951
      %v983 = vmax.f32 %v982, %v952
      %984 = vmax.xlane.f32.xlu0 %v983
      %v985 = vpop.xlane.xlu0 %984
      %v986 = vmax.f32 %v953, %v954
      %v987 = vmax.f32 %v986, %v955
      %v988 = vmax.f32 %v987, %v956
      %989 = vmax.xlane.f32.xlu0 %v988
      %v990 = vpop.xlane.xlu0 %989
      %v991 = vmax.f32 %v957, %v958
      %v992 = vmax.f32 %v991, %v959
      %v993 = vmax.f32 %v992, %v960
      %994 = vmax.xlane.f32.xlu0 %v993
      %v995 = vpop.xlane.xlu0 %994
      %v996 = vmax.f32 %v961, %v962
      %v997 = vmax.f32 %v996, %v963
      %v998 = vmax.f32 %v997, %v964
      %999 = vmax.xlane.f32.xlu0 %v998
      %v1000 = vpop.xlane.xlu0 %999
      %v1001 = vmax.f32 %v965, %v966
      %v1002 = vmax.f32 %v1001, %v967
      %v1003 = vmax.f32 %v1002, %v968
      %1004 = vmax.xlane.f32.xlu0 %v1003
      %v1005 = vpop.xlane.xlu0 %1004
      %v1006 = vmax.f32 %v969, %v970
      %v1007 = vmax.f32 %v1006, %v971
      %v1008 = vmax.f32 %v1007, %v972
      %1009 = vmax.xlane.f32.xlu0 %v1008
      %v1010 = vpop.xlane.xlu0 %1009
      %v1011 = vmax.f32 %v973, %v974
      %v1012 = vmax.f32 %v1011, %v975
      %v1013 = vmax.f32 %v1012, %v976
      %1014 = vmax.xlane.f32.xlu0 %v1013
      %v1015 = vpop.xlane.xlu0 %1014
      %v1016 = vmax.f32 %v977, %v978
      %v1017 = vmax.f32 %v1016, %v979
      %v1018 = vmax.f32 %v1017, %v980
      %1019 = vmax.xlane.f32.xlu0 %v1018
      %v1020 = vpop.xlane.xlu0 %1019
      %vm1021 = vcmp.ge.f32.partialorder %v637, %v985
      %vm1022 = vcmp.ge.f32.partialorder %v638, %v985
      %vm1023 = vcmp.ge.f32.partialorder %v639, %v985
      %vm1024 = vcmp.ge.f32.partialorder %v640, %v985
      %vm1025 = vcmp.ge.f32.partialorder %v641, %v990
      %vm1026 = vcmp.ge.f32.partialorder %v642, %v990
      %vm1027 = vcmp.ge.f32.partialorder %v643, %v990
      %vm1028 = vcmp.ge.f32.partialorder %v644, %v990
      %vm1029 = vcmp.ge.f32.partialorder %v645, %v995
      %vm1030 = vcmp.ge.f32.partialorder %v646, %v995
      %vm1031 = vcmp.ge.f32.partialorder %v647, %v995
      %vm1032 = vcmp.ge.f32.partialorder %v648, %v995
      %vm1033 = vcmp.ge.f32.partialorder %v649, %v1000
      %vm1034 = vcmp.ge.f32.partialorder %v650, %v1000
      %vm1035 = vcmp.ge.f32.partialorder %v651, %v1000
      %vm1036 = vcmp.ge.f32.partialorder %v652, %v1000
      %vm1037 = vcmp.ge.f32.partialorder %v653, %v1005
      %vm1038 = vcmp.ge.f32.partialorder %v654, %v1005
      %vm1039 = vcmp.ge.f32.partialorder %v655, %v1005
      %vm1040 = vcmp.ge.f32.partialorder %v656, %v1005
      %vm1041 = vcmp.ge.f32.partialorder %v657, %v1010
      %vm1042 = vcmp.ge.f32.partialorder %v658, %v1010
      %vm1043 = vcmp.ge.f32.partialorder %v659, %v1010
      %vm1044 = vcmp.ge.f32.partialorder %v660, %v1010
      %vm1045 = vcmp.ge.f32.partialorder %v661, %v1015
      %vm1046 = vcmp.ge.f32.partialorder %v662, %v1015
      %vm1047 = vcmp.ge.f32.partialorder %v663, %v1015
      %vm1048 = vcmp.ge.f32.partialorder %v664, %v1015
      %vm1049 = vcmp.ge.f32.partialorder %v665, %v1020
      %vm1050 = vcmp.ge.f32.partialorder %v666, %v1020
      %vm1051 = vcmp.ge.f32.partialorder %v667, %v1020
      %vm1052 = vcmp.ge.f32.partialorder %v668, %v1020
      %v1053 = vsel %vm1021, -inf, %v637
      %v1054 = vsel %vm1022, -inf, %v638
      %v1055 = vsel %vm1023, -inf, %v639
      %v1056 = vsel %vm1024, -inf, %v640
      %v1057 = vsel %vm1025, -inf, %v641
      %v1058 = vsel %vm1026, -inf, %v642
      %v1059 = vsel %vm1027, -inf, %v643
      %v1060 = vsel %vm1028, -inf, %v644
      %v1061 = vsel %vm1029, -inf, %v645
      %v1062 = vsel %vm1030, -inf, %v646
      %v1063 = vsel %vm1031, -inf, %v647
      %v1064 = vsel %vm1032, -inf, %v648
      %v1065 = vsel %vm1033, -inf, %v649
      %v1066 = vsel %vm1034, -inf, %v650
      %v1067 = vsel %vm1035, -inf, %v651
      %v1068 = vsel %vm1036, -inf, %v652
      %v1069 = vsel %vm1037, -inf, %v653
      %v1070 = vsel %vm1038, -inf, %v654
      %v1071 = vsel %vm1039, -inf, %v655
      %v1072 = vsel %vm1040, -inf, %v656
      %v1073 = vsel %vm1041, -inf, %v657
      %v1074 = vsel %vm1042, -inf, %v658
      %v1075 = vsel %vm1043, -inf, %v659
      %v1076 = vsel %vm1044, -inf, %v660
      %v1077 = vsel %vm1045, -inf, %v661
      %v1078 = vsel %vm1046, -inf, %v662
      %v1079 = vsel %vm1047, -inf, %v663
      %v1080 = vsel %vm1048, -inf, %v664
      %v1081 = vsel %vm1049, -inf, %v665
      %v1082 = vsel %vm1050, -inf, %v666
      %v1083 = vsel %vm1051, -inf, %v667
      %v1084 = vsel %vm1052, -inf, %v668
      %v1085 = vmax.f32 %v1053, %v1054
      %v1086 = vmax.f32 %v1085, %v1055
      %v1087 = vmax.f32 %v1086, %v1056
      %1088 = vmax.xlane.f32.xlu0 %v1087
      %v1089 = vpop.xlane.xlu0 %1088
      %v1090 = vmax.f32 %v1057, %v1058
      %v1091 = vmax.f32 %v1090, %v1059
      %v1092 = vmax.f32 %v1091, %v1060
      %1093 = vmax.xlane.f32.xlu0 %v1092
      %v1094 = vpop.xlane.xlu0 %1093
      %v1095 = vmax.f32 %v1061, %v1062
      %v1096 = vmax.f32 %v1095, %v1063
      %v1097 = vmax.f32 %v1096, %v1064
      %1098 = vmax.xlane.f32.xlu0 %v1097
      %v1099 = vpop.xlane.xlu0 %1098
      %v1100 = vmax.f32 %v1065, %v1066
      %v1101 = vmax.f32 %v1100, %v1067
      %v1102 = vmax.f32 %v1101, %v1068
      %1103 = vmax.xlane.f32.xlu0 %v1102
      %v1104 = vpop.xlane.xlu0 %1103
      %v1105 = vmax.f32 %v1069, %v1070
      %v1106 = vmax.f32 %v1105, %v1071
      %v1107 = vmax.f32 %v1106, %v1072
      %1108 = vmax.xlane.f32.xlu0 %v1107
      %v1109 = vpop.xlane.xlu0 %1108
      %v1110 = vmax.f32 %v1073, %v1074
      %v1111 = vmax.f32 %v1110, %v1075
      %v1112 = vmax.f32 %v1111, %v1076
      %1113 = vmax.xlane.f32.xlu0 %v1112
      %v1114 = vpop.xlane.xlu0 %1113
      %v1115 = vmax.f32 %v1077, %v1078
      %v1116 = vmax.f32 %v1115, %v1079
      %v1117 = vmax.f32 %v1116, %v1080
      %1118 = vmax.xlane.f32.xlu0 %v1117
      %v1119 = vpop.xlane.xlu0 %1118
      %v1120 = vmax.f32 %v1081, %v1082
      %v1121 = vmax.f32 %v1120, %v1083
      %v1122 = vmax.f32 %v1121, %v1084
      %1123 = vmax.xlane.f32.xlu0 %v1122
      %v1124 = vpop.xlane.xlu0 %1123
      %vm1125 = vcmp.ge.f32.partialorder %v637, %v1089
      %vm1126 = vcmp.ge.f32.partialorder %v638, %v1089
      %vm1127 = vcmp.ge.f32.partialorder %v639, %v1089
      %vm1128 = vcmp.ge.f32.partialorder %v640, %v1089
      %vm1129 = vcmp.ge.f32.partialorder %v641, %v1094
      %vm1130 = vcmp.ge.f32.partialorder %v642, %v1094
      %vm1131 = vcmp.ge.f32.partialorder %v643, %v1094
      %vm1132 = vcmp.ge.f32.partialorder %v644, %v1094
      %vm1133 = vcmp.ge.f32.partialorder %v645, %v1099
      %vm1134 = vcmp.ge.f32.partialorder %v646, %v1099
      %vm1135 = vcmp.ge.f32.partialorder %v647, %v1099
      %vm1136 = vcmp.ge.f32.partialorder %v648, %v1099
      %vm1137 = vcmp.ge.f32.partialorder %v649, %v1104
      %vm1138 = vcmp.ge.f32.partialorder %v650, %v1104
      %vm1139 = vcmp.ge.f32.partialorder %v651, %v1104
      %vm1140 = vcmp.ge.f32.partialorder %v652, %v1104
      %vm1141 = vcmp.ge.f32.partialorder %v653, %v1109
      %vm1142 = vcmp.ge.f32.partialorder %v654, %v1109
      %vm1143 = vcmp.ge.f32.partialorder %v655, %v1109
      %vm1144 = vcmp.ge.f32.partialorder %v656, %v1109
      %vm1145 = vcmp.ge.f32.partialorder %v657, %v1114
      %vm1146 = vcmp.ge.f32.partialorder %v658, %v1114
      %vm1147 = vcmp.ge.f32.partialorder %v659, %v1114
      %vm1148 = vcmp.ge.f32.partialorder %v660, %v1114
      %vm1149 = vcmp.ge.f32.partialorder %v661, %v1119
      %vm1150 = vcmp.ge.f32.partialorder %v662, %v1119
      %vm1151 = vcmp.ge.f32.partialorder %v663, %v1119
      %vm1152 = vcmp.ge.f32.partialorder %v664, %v1119
      %vm1153 = vcmp.ge.f32.partialorder %v665, %v1124
      %vm1154 = vcmp.ge.f32.partialorder %v666, %v1124
      %vm1155 = vcmp.ge.f32.partialorder %v667, %v1124
      %vm1156 = vcmp.ge.f32.partialorder %v668, %v1124
      %v1157 = vsel %vm1125, -inf, %v637
      %v1158 = vsel %vm1126, -inf, %v638
      %v1159 = vsel %vm1127, -inf, %v639
      %v1160 = vsel %vm1128, -inf, %v640
      %v1161 = vsel %vm1129, -inf, %v641
      %v1162 = vsel %vm1130, -inf, %v642
      %v1163 = vsel %vm1131, -inf, %v643
      %v1164 = vsel %vm1132, -inf, %v644
      %v1165 = vsel %vm1133, -inf, %v645
      %v1166 = vsel %vm1134, -inf, %v646
      %v1167 = vsel %vm1135, -inf, %v647
      %v1168 = vsel %vm1136, -inf, %v648
      %v1169 = vsel %vm1137, -inf, %v649
      %v1170 = vsel %vm1138, -inf, %v650
      %v1171 = vsel %vm1139, -inf, %v651
      %v1172 = vsel %vm1140, -inf, %v652
      %v1173 = vsel %vm1141, -inf, %v653
      %v1174 = vsel %vm1142, -inf, %v654
      %v1175 = vsel %vm1143, -inf, %v655
      %v1176 = vsel %vm1144, -inf, %v656
      %v1177 = vsel %vm1145, -inf, %v657
      %v1178 = vsel %vm1146, -inf, %v658
      %v1179 = vsel %vm1147, -inf, %v659
      %v1180 = vsel %vm1148, -inf, %v660
      %v1181 = vsel %vm1149, -inf, %v661
      %v1182 = vsel %vm1150, -inf, %v662
      %v1183 = vsel %vm1151, -inf, %v663
      %v1184 = vsel %vm1152, -inf, %v664
      %v1185 = vsel %vm1153, -inf, %v665
      %v1186 = vsel %vm1154, -inf, %v666
      %v1187 = vsel %vm1155, -inf, %v667
      %v1188 = vsel %vm1156, -inf, %v668
      %v1189 = vmax.f32 %v1157, %v1158
      %v1190 = vmax.f32 %v1189, %v1159
      %v1191 = vmax.f32 %v1190, %v1160
      %1192 = vmax.xlane.f32.xlu0 %v1191
      %v1193 = vpop.xlane.xlu0 %1192
      %v1194 = vmax.f32 %v1161, %v1162
      %v1195 = vmax.f32 %v1194, %v1163
      %v1196 = vmax.f32 %v1195, %v1164
      %1197 = vmax.xlane.f32.xlu0 %v1196
      %v1198 = vpop.xlane.xlu0 %1197
      %v1199 = vmax.f32 %v1165, %v1166
      %v1200 = vmax.f32 %v1199, %v1167
      %v1201 = vmax.f32 %v1200, %v1168
      %1202 = vmax.xlane.f32.xlu0 %v1201
      %v1203 = vpop.xlane.xlu0 %1202
      %v1204 = vmax.f32 %v1169, %v1170
      %v1205 = vmax.f32 %v1204, %v1171
      %v1206 = vmax.f32 %v1205, %v1172
      %1207 = vmax.xlane.f32.xlu0 %v1206
      %v1208 = vpop.xlane.xlu0 %1207
      %v1209 = vmax.f32 %v1173, %v1174
      %v1210 = vmax.f32 %v1209, %v1175
      %v1211 = vmax.f32 %v1210, %v1176
      %1212 = vmax.xlane.f32.xlu0 %v1211
      %v1213 = vpop.xlane.xlu0 %1212
      %v1214 = vmax.f32 %v1177, %v1178
      %v1215 = vmax.f32 %v1214, %v1179
      %v1216 = vmax.f32 %v1215, %v1180
      %1217 = vmax.xlane.f32.xlu0 %v1216
      %v1218 = vpop.xlane.xlu0 %1217
      %v1219 = vmax.f32 %v1181, %v1182
      %v1220 = vmax.f32 %v1219, %v1183
      %v1221 = vmax.f32 %v1220, %v1184
      %1222 = vmax.xlane.f32.xlu0 %v1221
      %v1223 = vpop.xlane.xlu0 %1222
      %v1224 = vmax.f32 %v1185, %v1186
      %v1225 = vmax.f32 %v1224, %v1187
      %v1226 = vmax.f32 %v1225, %v1188
      %1227 = vmax.xlane.f32.xlu0 %v1226
      %v1228 = vpop.xlane.xlu0 %1227
      %vm1229 = vcmp.ge.f32.partialorder %v637, %v1193
      %vm1230 = vcmp.ge.f32.partialorder %v638, %v1193
      %vm1231 = vcmp.ge.f32.partialorder %v639, %v1193
      %vm1232 = vcmp.ge.f32.partialorder %v640, %v1193
      %vm1233 = vcmp.ge.f32.partialorder %v641, %v1198
      %vm1234 = vcmp.ge.f32.partialorder %v642, %v1198
      %vm1235 = vcmp.ge.f32.partialorder %v643, %v1198
      %vm1236 = vcmp.ge.f32.partialorder %v644, %v1198
      %vm1237 = vcmp.ge.f32.partialorder %v645, %v1203
      %vm1238 = vcmp.ge.f32.partialorder %v646, %v1203
      %vm1239 = vcmp.ge.f32.partialorder %v647, %v1203
      %vm1240 = vcmp.ge.f32.partialorder %v648, %v1203
      %vm1241 = vcmp.ge.f32.partialorder %v649, %v1208
      %vm1242 = vcmp.ge.f32.partialorder %v650, %v1208
      %vm1243 = vcmp.ge.f32.partialorder %v651, %v1208
      %vm1244 = vcmp.ge.f32.partialorder %v652, %v1208
      %vm1245 = vcmp.ge.f32.partialorder %v653, %v1213
      %vm1246 = vcmp.ge.f32.partialorder %v654, %v1213
      %vm1247 = vcmp.ge.f32.partialorder %v655, %v1213
      %vm1248 = vcmp.ge.f32.partialorder %v656, %v1213
      %vm1249 = vcmp.ge.f32.partialorder %v657, %v1218
      %vm1250 = vcmp.ge.f32.partialorder %v658, %v1218
      %vm1251 = vcmp.ge.f32.partialorder %v659, %v1218
      %vm1252 = vcmp.ge.f32.partialorder %v660, %v1218
      %vm1253 = vcmp.ge.f32.partialorder %v661, %v1223
      %vm1254 = vcmp.ge.f32.partialorder %v662, %v1223
      %vm1255 = vcmp.ge.f32.partialorder %v663, %v1223
      %vm1256 = vcmp.ge.f32.partialorder %v664, %v1223
      %vm1257 = vcmp.ge.f32.partialorder %v665, %v1228
      %vm1258 = vcmp.ge.f32.partialorder %v666, %v1228
      %vm1259 = vcmp.ge.f32.partialorder %v667, %v1228
      %vm1260 = vcmp.ge.f32.partialorder %v668, %v1228
      %v1261 = vsel %vm1229, -inf, %v637
      %v1262 = vsel %vm1230, -inf, %v638
      %v1263 = vsel %vm1231, -inf, %v639
      %v1264 = vsel %vm1232, -inf, %v640
      %v1265 = vsel %vm1233, -inf, %v641
      %v1266 = vsel %vm1234, -inf, %v642
      %v1267 = vsel %vm1235, -inf, %v643
      %v1268 = vsel %vm1236, -inf, %v644
      %v1269 = vsel %vm1237, -inf, %v645
      %v1270 = vsel %vm1238, -inf, %v646
      %v1271 = vsel %vm1239, -inf, %v647
      %v1272 = vsel %vm1240, -inf, %v648
      %v1273 = vsel %vm1241, -inf, %v649
      %v1274 = vsel %vm1242, -inf, %v650
      %v1275 = vsel %vm1243, -inf, %v651
      %v1276 = vsel %vm1244, -inf, %v652
      %v1277 = vsel %vm1245, -inf, %v653
      %v1278 = vsel %vm1246, -inf, %v654
      %v1279 = vsel %vm1247, -inf, %v655
      %v1280 = vsel %vm1248, -inf, %v656
      %v1281 = vsel %vm1249, -inf, %v657
      %v1282 = vsel %vm1250, -inf, %v658
      %v1283 = vsel %vm1251, -inf, %v659
      %v1284 = vsel %vm1252, -inf, %v660
      %v1285 = vsel %vm1253, -inf, %v661
      %v1286 = vsel %vm1254, -inf, %v662
      %v1287 = vsel %vm1255, -inf, %v663
      %v1288 = vsel %vm1256, -inf, %v664
      %v1289 = vsel %vm1257, -inf, %v665
      %v1290 = vsel %vm1258, -inf, %v666
      %v1291 = vsel %vm1259, -inf, %v667
      %v1292 = vsel %vm1260, -inf, %v668
      %v1293 = vmax.f32 %v1261, %v1262
      %v1294 = vmax.f32 %v1293, %v1263
      %v1295 = vmax.f32 %v1294, %v1264
      %1296 = vmax.xlane.f32.xlu0 %v1295
      %v1297 = vpop.xlane.xlu0 %1296
      %v1298 = vmax.f32 %v1265, %v1266
      %v1299 = vmax.f32 %v1298, %v1267
      %v1300 = vmax.f32 %v1299, %v1268
      %1301 = vmax.xlane.f32.xlu0 %v1300
      %v1302 = vpop.xlane.xlu0 %1301
      %v1303 = vmax.f32 %v1269, %v1270
      %v1304 = vmax.f32 %v1303, %v1271
      %v1305 = vmax.f32 %v1304, %v1272
      %1306 = vmax.xlane.f32.xlu0 %v1305
      %v1307 = vpop.xlane.xlu0 %1306
      %v1308 = vmax.f32 %v1273, %v1274
      %v1309 = vmax.f32 %v1308, %v1275
      %v1310 = vmax.f32 %v1309, %v1276
      %1311 = vmax.xlane.f32.xlu0 %v1310
      %v1312 = vpop.xlane.xlu0 %1311
      %v1313 = vmax.f32 %v1277, %v1278
      %v1314 = vmax.f32 %v1313, %v1279
      %v1315 = vmax.f32 %v1314, %v1280
      %1316 = vmax.xlane.f32.xlu0 %v1315
      %v1317 = vpop.xlane.xlu0 %1316
      %v1318 = vmax.f32 %v1281, %v1282
      %v1319 = vmax.f32 %v1318, %v1283
      %v1320 = vmax.f32 %v1319, %v1284
      %1321 = vmax.xlane.f32.xlu0 %v1320
      %v1322 = vpop.xlane.xlu0 %1321
      %v1323 = vmax.f32 %v1285, %v1286
      %v1324 = vmax.f32 %v1323, %v1287
      %v1325 = vmax.f32 %v1324, %v1288
      %1326 = vmax.xlane.f32.xlu0 %v1325
      %v1327 = vpop.xlane.xlu0 %1326
      %v1328 = vmax.f32 %v1289, %v1290
      %v1329 = vmax.f32 %v1328, %v1291
      %v1330 = vmax.f32 %v1329, %v1292
      %1331 = vmax.xlane.f32.xlu0 %v1330
      %v1332 = vpop.xlane.xlu0 %1331
      %vm1333 = vcmp.ge.f32.partialorder %v637, %v1297
      %vm1334 = vcmp.ge.f32.partialorder %v638, %v1297
      %vm1335 = vcmp.ge.f32.partialorder %v639, %v1297
      %vm1336 = vcmp.ge.f32.partialorder %v640, %v1297
      %vm1337 = vcmp.ge.f32.partialorder %v641, %v1302
      %vm1338 = vcmp.ge.f32.partialorder %v642, %v1302
      %vm1339 = vcmp.ge.f32.partialorder %v643, %v1302
      %vm1340 = vcmp.ge.f32.partialorder %v644, %v1302
      %vm1341 = vcmp.ge.f32.partialorder %v645, %v1307
      %vm1342 = vcmp.ge.f32.partialorder %v646, %v1307
      %vm1343 = vcmp.ge.f32.partialorder %v647, %v1307
      %vm1344 = vcmp.ge.f32.partialorder %v648, %v1307
      %vm1345 = vcmp.ge.f32.partialorder %v649, %v1312
      %vm1346 = vcmp.ge.f32.partialorder %v650, %v1312
      %vm1347 = vcmp.ge.f32.partialorder %v651, %v1312
      %vm1348 = vcmp.ge.f32.partialorder %v652, %v1312
      %vm1349 = vcmp.ge.f32.partialorder %v653, %v1317
      %vm1350 = vcmp.ge.f32.partialorder %v654, %v1317
      %vm1351 = vcmp.ge.f32.partialorder %v655, %v1317
      %vm1352 = vcmp.ge.f32.partialorder %v656, %v1317
      %vm1353 = vcmp.ge.f32.partialorder %v657, %v1322
      %vm1354 = vcmp.ge.f32.partialorder %v658, %v1322
      %vm1355 = vcmp.ge.f32.partialorder %v659, %v1322
      %vm1356 = vcmp.ge.f32.partialorder %v660, %v1322
      %vm1357 = vcmp.ge.f32.partialorder %v661, %v1327
      %vm1358 = vcmp.ge.f32.partialorder %v662, %v1327
      %vm1359 = vcmp.ge.f32.partialorder %v663, %v1327
      %vm1360 = vcmp.ge.f32.partialorder %v664, %v1327
      %vm1361 = vcmp.ge.f32.partialorder %v665, %v1332
      %vm1362 = vcmp.ge.f32.partialorder %v666, %v1332
      %vm1363 = vcmp.ge.f32.partialorder %v667, %v1332
      %vm1364 = vcmp.ge.f32.partialorder %v668, %v1332
      %v1365 = vsel %vm1333, -inf, %v637
      %v1366 = vsel %vm1334, -inf, %v638
      %v1367 = vsel %vm1335, -inf, %v639
      %v1368 = vsel %vm1336, -inf, %v640
      %v1369 = vsel %vm1337, -inf, %v641
      %v1370 = vsel %vm1338, -inf, %v642
      %v1371 = vsel %vm1339, -inf, %v643
      %v1372 = vsel %vm1340, -inf, %v644
      %v1373 = vsel %vm1341, -inf, %v645
      %v1374 = vsel %vm1342, -inf, %v646
      %v1375 = vsel %vm1343, -inf, %v647
      %v1376 = vsel %vm1344, -inf, %v648
      %v1377 = vsel %vm1345, -inf, %v649
      %v1378 = vsel %vm1346, -inf, %v650
      %v1379 = vsel %vm1347, -inf, %v651
      %v1380 = vsel %vm1348, -inf, %v652
      %v1381 = vsel %vm1349, -inf, %v653
      %v1382 = vsel %vm1350, -inf, %v654
      %v1383 = vsel %vm1351, -inf, %v655
      %v1384 = vsel %vm1352, -inf, %v656
      %v1385 = vsel %vm1353, -inf, %v657
      %v1386 = vsel %vm1354, -inf, %v658
      %v1387 = vsel %vm1355, -inf, %v659
      %v1388 = vsel %vm1356, -inf, %v660
      %v1389 = vsel %vm1357, -inf, %v661
      %v1390 = vsel %vm1358, -inf, %v662
      %v1391 = vsel %vm1359, -inf, %v663
      %v1392 = vsel %vm1360, -inf, %v664
      %v1393 = vsel %vm1361, -inf, %v665
      %v1394 = vsel %vm1362, -inf, %v666
      %v1395 = vsel %vm1363, -inf, %v667
      %v1396 = vsel %vm1364, -inf, %v668
      %v1397 = vmax.f32 %v1365, %v1366
      %v1398 = vmax.f32 %v1397, %v1367
      %v1399 = vmax.f32 %v1398, %v1368
      %1400 = vmax.xlane.f32.xlu0 %v1399
      %v1401 = vpop.xlane.xlu0 %1400
      %v1402 = vmax.f32 %v1369, %v1370
      %v1403 = vmax.f32 %v1402, %v1371
      %v1404 = vmax.f32 %v1403, %v1372
      %1405 = vmax.xlane.f32.xlu0 %v1404
      %v1406 = vpop.xlane.xlu0 %1405
      %v1407 = vmax.f32 %v1373, %v1374
      %v1408 = vmax.f32 %v1407, %v1375
      %v1409 = vmax.f32 %v1408, %v1376
      %1410 = vmax.xlane.f32.xlu0 %v1409
      %v1411 = vpop.xlane.xlu0 %1410
      %v1412 = vmax.f32 %v1377, %v1378
      %v1413 = vmax.f32 %v1412, %v1379
      %v1414 = vmax.f32 %v1413, %v1380
      %1415 = vmax.xlane.f32.xlu0 %v1414
      %v1416 = vpop.xlane.xlu0 %1415
      %v1417 = vmax.f32 %v1381, %v1382
      %v1418 = vmax.f32 %v1417, %v1383
      %v1419 = vmax.f32 %v1418, %v1384
      %1420 = vmax.xlane.f32.xlu0 %v1419
      %v1421 = vpop.xlane.xlu0 %1420
      %v1422 = vmax.f32 %v1385, %v1386
      %v1423 = vmax.f32 %v1422, %v1387
      %v1424 = vmax.f32 %v1423, %v1388
      %1425 = vmax.xlane.f32.xlu0 %v1424
      %v1426 = vpop.xlane.xlu0 %1425
      %v1427 = vmax.f32 %v1389, %v1390
      %v1428 = vmax.f32 %v1427, %v1391
      %v1429 = vmax.f32 %v1428, %v1392
      %1430 = vmax.xlane.f32.xlu0 %v1429
      %v1431 = vpop.xlane.xlu0 %1430
      %v1432 = vmax.f32 %v1393, %v1394
      %v1433 = vmax.f32 %v1432, %v1395
      %v1434 = vmax.f32 %v1433, %v1396
      %1435 = vmax.xlane.f32.xlu0 %v1434
      %v1436 = vpop.xlane.xlu0 %1435
      %vm1437 = vcmp.ge.f32.partialorder %v637, %v1401
      %vm1438 = vcmp.ge.f32.partialorder %v638, %v1401
      %vm1439 = vcmp.ge.f32.partialorder %v639, %v1401
      %vm1440 = vcmp.ge.f32.partialorder %v640, %v1401
      %vm1441 = vcmp.ge.f32.partialorder %v641, %v1406
      %vm1442 = vcmp.ge.f32.partialorder %v642, %v1406
      %vm1443 = vcmp.ge.f32.partialorder %v643, %v1406
      %vm1444 = vcmp.ge.f32.partialorder %v644, %v1406
      %vm1445 = vcmp.ge.f32.partialorder %v645, %v1411
      %vm1446 = vcmp.ge.f32.partialorder %v646, %v1411
      %vm1447 = vcmp.ge.f32.partialorder %v647, %v1411
      %vm1448 = vcmp.ge.f32.partialorder %v648, %v1411
      %vm1449 = vcmp.ge.f32.partialorder %v649, %v1416
      %vm1450 = vcmp.ge.f32.partialorder %v650, %v1416
      %vm1451 = vcmp.ge.f32.partialorder %v651, %v1416
      %vm1452 = vcmp.ge.f32.partialorder %v652, %v1416
      %vm1453 = vcmp.ge.f32.partialorder %v653, %v1421
      %vm1454 = vcmp.ge.f32.partialorder %v654, %v1421
      %vm1455 = vcmp.ge.f32.partialorder %v655, %v1421
      %vm1456 = vcmp.ge.f32.partialorder %v656, %v1421
      %vm1457 = vcmp.ge.f32.partialorder %v657, %v1426
      %vm1458 = vcmp.ge.f32.partialorder %v658, %v1426
      %vm1459 = vcmp.ge.f32.partialorder %v659, %v1426
      %vm1460 = vcmp.ge.f32.partialorder %v660, %v1426
      %vm1461 = vcmp.ge.f32.partialorder %v661, %v1431
      %vm1462 = vcmp.ge.f32.partialorder %v662, %v1431
      %vm1463 = vcmp.ge.f32.partialorder %v663, %v1431
      %vm1464 = vcmp.ge.f32.partialorder %v664, %v1431
      %vm1465 = vcmp.ge.f32.partialorder %v665, %v1436
      %vm1466 = vcmp.ge.f32.partialorder %v666, %v1436
      %vm1467 = vcmp.ge.f32.partialorder %v667, %v1436
      %vm1468 = vcmp.ge.f32.partialorder %v668, %v1436
      %v1469 = vsel %vm1437, -inf, %v637
      %v1470 = vsel %vm1438, -inf, %v638
      %v1471 = vsel %vm1439, -inf, %v639
      %v1472 = vsel %vm1440, -inf, %v640
      %v1473 = vsel %vm1441, -inf, %v641
      %v1474 = vsel %vm1442, -inf, %v642
      %v1475 = vsel %vm1443, -inf, %v643
      %v1476 = vsel %vm1444, -inf, %v644
      %v1477 = vsel %vm1445, -inf, %v645
      %v1478 = vsel %vm1446, -inf, %v646
      %v1479 = vsel %vm1447, -inf, %v647
      %v1480 = vsel %vm1448, -inf, %v648
      %v1481 = vsel %vm1449, -inf, %v649
      %v1482 = vsel %vm1450, -inf, %v650
      %v1483 = vsel %vm1451, -inf, %v651
      %v1484 = vsel %vm1452, -inf, %v652
      %v1485 = vsel %vm1453, -inf, %v653
      %v1486 = vsel %vm1454, -inf, %v654
      %v1487 = vsel %vm1455, -inf, %v655
      %v1488 = vsel %vm1456, -inf, %v656
      %v1489 = vsel %vm1457, -inf, %v657
      %v1490 = vsel %vm1458, -inf, %v658
      %v1491 = vsel %vm1459, -inf, %v659
      %v1492 = vsel %vm1460, -inf, %v660
      %v1493 = vsel %vm1461, -inf, %v661
      %v1494 = vsel %vm1462, -inf, %v662
      %v1495 = vsel %vm1463, -inf, %v663
      %v1496 = vsel %vm1464, -inf, %v664
      %v1497 = vsel %vm1465, -inf, %v665
      %v1498 = vsel %vm1466, -inf, %v666
      %v1499 = vsel %vm1467, -inf, %v667
      %v1500 = vsel %vm1468, -inf, %v668
      %v1501 = vmax.f32 %v1469, %v1470
      %v1502 = vmax.f32 %v1501, %v1471
      %v1503 = vmax.f32 %v1502, %v1472
      %1504 = vmax.xlane.f32.xlu0 %v1503
      %v1505 = vpop.xlane.xlu0 %1504
      %v1506 = vmax.f32 %v1473, %v1474
      %v1507 = vmax.f32 %v1506, %v1475
      %v1508 = vmax.f32 %v1507, %v1476
      %1509 = vmax.xlane.f32.xlu0 %v1508
      %v1510 = vpop.xlane.xlu0 %1509
      %v1511 = vmax.f32 %v1477, %v1478
      %v1512 = vmax.f32 %v1511, %v1479
      %v1513 = vmax.f32 %v1512, %v1480
      %1514 = vmax.xlane.f32.xlu0 %v1513
      %v1515 = vpop.xlane.xlu0 %1514
      %v1516 = vmax.f32 %v1481, %v1482
      %v1517 = vmax.f32 %v1516, %v1483
      %v1518 = vmax.f32 %v1517, %v1484
      %1519 = vmax.xlane.f32.xlu0 %v1518
      %v1520 = vpop.xlane.xlu0 %1519
      %v1521 = vmax.f32 %v1485, %v1486
      %v1522 = vmax.f32 %v1521, %v1487
      %v1523 = vmax.f32 %v1522, %v1488
      %1524 = vmax.xlane.f32.xlu0 %v1523
      %v1525 = vpop.xlane.xlu0 %1524
      %v1526 = vmax.f32 %v1489, %v1490
      %v1527 = vmax.f32 %v1526, %v1491
      %v1528 = vmax.f32 %v1527, %v1492
      %1529 = vmax.xlane.f32.xlu0 %v1528
      %v1530 = vpop.xlane.xlu0 %1529
      %v1531 = vmax.f32 %v1493, %v1494
      %v1532 = vmax.f32 %v1531, %v1495
      %v1533 = vmax.f32 %v1532, %v1496
      %1534 = vmax.xlane.f32.xlu0 %v1533
      %v1535 = vpop.xlane.xlu0 %1534
      %v1536 = vmax.f32 %v1497, %v1498
      %v1537 = vmax.f32 %v1536, %v1499
      %v1538 = vmax.f32 %v1537, %v1500
      %1539 = vmax.xlane.f32.xlu0 %v1538
      %v1540 = vpop.xlane.xlu0 %1539
      %vm1541 = vcmp.ge.f32.partialorder %v637, %v1505
      %vm1542 = vcmp.ge.f32.partialorder %v638, %v1505
      %vm1543 = vcmp.ge.f32.partialorder %v639, %v1505
      %vm1544 = vcmp.ge.f32.partialorder %v640, %v1505
      %vm1545 = vcmp.ge.f32.partialorder %v641, %v1510
      %vm1546 = vcmp.ge.f32.partialorder %v642, %v1510
      %vm1547 = vcmp.ge.f32.partialorder %v643, %v1510
      %vm1548 = vcmp.ge.f32.partialorder %v644, %v1510
      %vm1549 = vcmp.ge.f32.partialorder %v645, %v1515
      %vm1550 = vcmp.ge.f32.partialorder %v646, %v1515
      %vm1551 = vcmp.ge.f32.partialorder %v647, %v1515
      %vm1552 = vcmp.ge.f32.partialorder %v648, %v1515
      %vm1553 = vcmp.ge.f32.partialorder %v649, %v1520
      %vm1554 = vcmp.ge.f32.partialorder %v650, %v1520
      %vm1555 = vcmp.ge.f32.partialorder %v651, %v1520
      %vm1556 = vcmp.ge.f32.partialorder %v652, %v1520
      %vm1557 = vcmp.ge.f32.partialorder %v653, %v1525
      %vm1558 = vcmp.ge.f32.partialorder %v654, %v1525
      %vm1559 = vcmp.ge.f32.partialorder %v655, %v1525
      %vm1560 = vcmp.ge.f32.partialorder %v656, %v1525
      %vm1561 = vcmp.ge.f32.partialorder %v657, %v1530
      %vm1562 = vcmp.ge.f32.partialorder %v658, %v1530
      %vm1563 = vcmp.ge.f32.partialorder %v659, %v1530
      %vm1564 = vcmp.ge.f32.partialorder %v660, %v1530
      %vm1565 = vcmp.ge.f32.partialorder %v661, %v1535
      %vm1566 = vcmp.ge.f32.partialorder %v662, %v1535
      %vm1567 = vcmp.ge.f32.partialorder %v663, %v1535
      %vm1568 = vcmp.ge.f32.partialorder %v664, %v1535
      %vm1569 = vcmp.ge.f32.partialorder %v665, %v1540
      %vm1570 = vcmp.ge.f32.partialorder %v666, %v1540
      %vm1571 = vcmp.ge.f32.partialorder %v667, %v1540
      %vm1572 = vcmp.ge.f32.partialorder %v668, %v1540
      %v1573 = vsel %vm1541, -inf, %v637
      %v1574 = vsel %vm1542, -inf, %v638
      %v1575 = vsel %vm1543, -inf, %v639
      %v1576 = vsel %vm1544, -inf, %v640
      %v1577 = vsel %vm1545, -inf, %v641
      %v1578 = vsel %vm1546, -inf, %v642
      %v1579 = vsel %vm1547, -inf, %v643
      %v1580 = vsel %vm1548, -inf, %v644
      %v1581 = vsel %vm1549, -inf, %v645
      %v1582 = vsel %vm1550, -inf, %v646
      %v1583 = vsel %vm1551, -inf, %v647
      %v1584 = vsel %vm1552, -inf, %v648
      %v1585 = vsel %vm1553, -inf, %v649
      %v1586 = vsel %vm1554, -inf, %v650
      %v1587 = vsel %vm1555, -inf, %v651
      %v1588 = vsel %vm1556, -inf, %v652
      %v1589 = vsel %vm1557, -inf, %v653
      %v1590 = vsel %vm1558, -inf, %v654
      %v1591 = vsel %vm1559, -inf, %v655
      %v1592 = vsel %vm1560, -inf, %v656
      %v1593 = vsel %vm1561, -inf, %v657
      %v1594 = vsel %vm1562, -inf, %v658
      %v1595 = vsel %vm1563, -inf, %v659
      %v1596 = vsel %vm1564, -inf, %v660
      %v1597 = vsel %vm1565, -inf, %v661
      %v1598 = vsel %vm1566, -inf, %v662
      %v1599 = vsel %vm1567, -inf, %v663
      %v1600 = vsel %vm1568, -inf, %v664
      %v1601 = vsel %vm1569, -inf, %v665
      %v1602 = vsel %vm1570, -inf, %v666
      %v1603 = vsel %vm1571, -inf, %v667
      %v1604 = vsel %vm1572, -inf, %v668
      %v1605 = vmax.f32 %v1573, %v1574
      %v1606 = vmax.f32 %v1605, %v1575
      %v1607 = vmax.f32 %v1606, %v1576
      %1608 = vmax.xlane.f32.xlu0 %v1607
      %v1609 = vpop.xlane.xlu0 %1608
      %v1610 = vmax.f32 %v1577, %v1578
      %v1611 = vmax.f32 %v1610, %v1579
      %v1612 = vmax.f32 %v1611, %v1580
      %1613 = vmax.xlane.f32.xlu0 %v1612
      %v1614 = vpop.xlane.xlu0 %1613
      %v1615 = vmax.f32 %v1581, %v1582
      %v1616 = vmax.f32 %v1615, %v1583
      %v1617 = vmax.f32 %v1616, %v1584
      %1618 = vmax.xlane.f32.xlu0 %v1617
      %v1619 = vpop.xlane.xlu0 %1618
      %v1620 = vmax.f32 %v1585, %v1586
      %v1621 = vmax.f32 %v1620, %v1587
      %v1622 = vmax.f32 %v1621, %v1588
      %1623 = vmax.xlane.f32.xlu0 %v1622
      %v1624 = vpop.xlane.xlu0 %1623
      %v1625 = vmax.f32 %v1589, %v1590
      %v1626 = vmax.f32 %v1625, %v1591
      %v1627 = vmax.f32 %v1626, %v1592
      %1628 = vmax.xlane.f32.xlu0 %v1627
      %v1629 = vpop.xlane.xlu0 %1628
      %v1630 = vmax.f32 %v1593, %v1594
      %v1631 = vmax.f32 %v1630, %v1595
      %v1632 = vmax.f32 %v1631, %v1596
      %1633 = vmax.xlane.f32.xlu0 %v1632
      %v1634 = vpop.xlane.xlu0 %1633
      %v1635 = vmax.f32 %v1597, %v1598
      %v1636 = vmax.f32 %v1635, %v1599
      %v1637 = vmax.f32 %v1636, %v1600
      %1638 = vmax.xlane.f32.xlu0 %v1637
      %v1639 = vpop.xlane.xlu0 %1638
      %v1640 = vmax.f32 %v1601, %v1602
      %v1641 = vmax.f32 %v1640, %v1603
      %v1642 = vmax.f32 %v1641, %v1604
      %1643 = vmax.xlane.f32.xlu0 %v1642
      %v1644 = vpop.xlane.xlu0 %1643
      %vm1645 = vcmp.ge.f32.partialorder %v637, %v1609
      %vm1646 = vcmp.ge.f32.partialorder %v638, %v1609
      %vm1647 = vcmp.ge.f32.partialorder %v639, %v1609
      %vm1648 = vcmp.ge.f32.partialorder %v640, %v1609
      %vm1649 = vcmp.ge.f32.partialorder %v641, %v1614
      %vm1650 = vcmp.ge.f32.partialorder %v642, %v1614
      %vm1651 = vcmp.ge.f32.partialorder %v643, %v1614
      %vm1652 = vcmp.ge.f32.partialorder %v644, %v1614
      %vm1653 = vcmp.ge.f32.partialorder %v645, %v1619
      %vm1654 = vcmp.ge.f32.partialorder %v646, %v1619
      %vm1655 = vcmp.ge.f32.partialorder %v647, %v1619
      %vm1656 = vcmp.ge.f32.partialorder %v648, %v1619
      %vm1657 = vcmp.ge.f32.partialorder %v649, %v1624
      %vm1658 = vcmp.ge.f32.partialorder %v650, %v1624
      %vm1659 = vcmp.ge.f32.partialorder %v651, %v1624
      %vm1660 = vcmp.ge.f32.partialorder %v652, %v1624
      %vm1661 = vcmp.ge.f32.partialorder %v653, %v1629
      %vm1662 = vcmp.ge.f32.partialorder %v654, %v1629
      %vm1663 = vcmp.ge.f32.partialorder %v655, %v1629
      %vm1664 = vcmp.ge.f32.partialorder %v656, %v1629
      %vm1665 = vcmp.ge.f32.partialorder %v657, %v1634
      %vm1666 = vcmp.ge.f32.partialorder %v658, %v1634
      %vm1667 = vcmp.ge.f32.partialorder %v659, %v1634
      %vm1668 = vcmp.ge.f32.partialorder %v660, %v1634
      %vm1669 = vcmp.ge.f32.partialorder %v661, %v1639
      %vm1670 = vcmp.ge.f32.partialorder %v662, %v1639
      %vm1671 = vcmp.ge.f32.partialorder %v663, %v1639
      %vm1672 = vcmp.ge.f32.partialorder %v664, %v1639
      %vm1673 = vcmp.ge.f32.partialorder %v665, %v1644
      %vm1674 = vcmp.ge.f32.partialorder %v666, %v1644
      %vm1675 = vcmp.ge.f32.partialorder %v667, %v1644
      %vm1676 = vcmp.ge.f32.partialorder %v668, %v1644
      %v1677 = vsel %vm1645, -inf, %v637
      %v1678 = vsel %vm1646, -inf, %v638
      %v1679 = vsel %vm1647, -inf, %v639
      %v1680 = vsel %vm1648, -inf, %v640
      %v1681 = vsel %vm1649, -inf, %v641
      %v1682 = vsel %vm1650, -inf, %v642
      %v1683 = vsel %vm1651, -inf, %v643
      %v1684 = vsel %vm1652, -inf, %v644
      %v1685 = vsel %vm1653, -inf, %v645
      %v1686 = vsel %vm1654, -inf, %v646
      %v1687 = vsel %vm1655, -inf, %v647
      %v1688 = vsel %vm1656, -inf, %v648
      %v1689 = vsel %vm1657, -inf, %v649
      %v1690 = vsel %vm1658, -inf, %v650
      %v1691 = vsel %vm1659, -inf, %v651
      %v1692 = vsel %vm1660, -inf, %v652
      %v1693 = vsel %vm1661, -inf, %v653
      %v1694 = vsel %vm1662, -inf, %v654
      %v1695 = vsel %vm1663, -inf, %v655
      %v1696 = vsel %vm1664, -inf, %v656
      %v1697 = vsel %vm1665, -inf, %v657
      %v1698 = vsel %vm1666, -inf, %v658
      %v1699 = vsel %vm1667, -inf, %v659
      %v1700 = vsel %vm1668, -inf, %v660
      %v1701 = vsel %vm1669, -inf, %v661
      %v1702 = vsel %vm1670, -inf, %v662
      %v1703 = vsel %vm1671, -inf, %v663
      %v1704 = vsel %vm1672, -inf, %v664
      %v1705 = vsel %vm1673, -inf, %v665
      %v1706 = vsel %vm1674, -inf, %v666
      %v1707 = vsel %vm1675, -inf, %v667
      %v1708 = vsel %vm1676, -inf, %v668
      %v1709 = vmax.f32 %v1677, %v1678
      %v1710 = vmax.f32 %v1709, %v1679
      %v1711 = vmax.f32 %v1710, %v1680
      %1712 = vmax.xlane.f32.xlu0 %v1711
      %v1713 = vpop.xlane.xlu0 %1712
      %v1714 = vmax.f32 %v1681, %v1682
      %v1715 = vmax.f32 %v1714, %v1683
      %v1716 = vmax.f32 %v1715, %v1684
      %1717 = vmax.xlane.f32.xlu0 %v1716
      %v1718 = vpop.xlane.xlu0 %1717
      %v1719 = vmax.f32 %v1685, %v1686
      %v1720 = vmax.f32 %v1719, %v1687
      %v1721 = vmax.f32 %v1720, %v1688
      %1722 = vmax.xlane.f32.xlu0 %v1721
      %v1723 = vpop.xlane.xlu0 %1722
      %v1724 = vmax.f32 %v1689, %v1690
      %v1725 = vmax.f32 %v1724, %v1691
      %v1726 = vmax.f32 %v1725, %v1692
      %1727 = vmax.xlane.f32.xlu0 %v1726
      %v1728 = vpop.xlane.xlu0 %1727
      %v1729 = vmax.f32 %v1693, %v1694
      %v1730 = vmax.f32 %v1729, %v1695
      %v1731 = vmax.f32 %v1730, %v1696
      %1732 = vmax.xlane.f32.xlu0 %v1731
      %v1733 = vpop.xlane.xlu0 %1732
      %v1734 = vmax.f32 %v1697, %v1698
      %v1735 = vmax.f32 %v1734, %v1699
      %v1736 = vmax.f32 %v1735, %v1700
      %1737 = vmax.xlane.f32.xlu0 %v1736
      %v1738 = vpop.xlane.xlu0 %1737
      %v1739 = vmax.f32 %v1701, %v1702
      %v1740 = vmax.f32 %v1739, %v1703
      %v1741 = vmax.f32 %v1740, %v1704
      %1742 = vmax.xlane.f32.xlu0 %v1741
      %v1743 = vpop.xlane.xlu0 %1742
      %v1744 = vmax.f32 %v1705, %v1706
      %v1745 = vmax.f32 %v1744, %v1707
      %v1746 = vmax.f32 %v1745, %v1708
      %1747 = vmax.xlane.f32.xlu0 %v1746
      %v1748 = vpop.xlane.xlu0 %1747
      %vm1749 = vcmp.ge.f32.partialorder %v637, %v1713
      %vm1750 = vcmp.ge.f32.partialorder %v638, %v1713
      %vm1751 = vcmp.ge.f32.partialorder %v639, %v1713
      %vm1752 = vcmp.ge.f32.partialorder %v640, %v1713
      %vm1753 = vcmp.ge.f32.partialorder %v641, %v1718
      %vm1754 = vcmp.ge.f32.partialorder %v642, %v1718
      %vm1755 = vcmp.ge.f32.partialorder %v643, %v1718
      %vm1756 = vcmp.ge.f32.partialorder %v644, %v1718
      %vm1757 = vcmp.ge.f32.partialorder %v645, %v1723
      %vm1758 = vcmp.ge.f32.partialorder %v646, %v1723
      %vm1759 = vcmp.ge.f32.partialorder %v647, %v1723
      %vm1760 = vcmp.ge.f32.partialorder %v648, %v1723
      %vm1761 = vcmp.ge.f32.partialorder %v649, %v1728
      %vm1762 = vcmp.ge.f32.partialorder %v650, %v1728
      %vm1763 = vcmp.ge.f32.partialorder %v651, %v1728
      %vm1764 = vcmp.ge.f32.partialorder %v652, %v1728
      %vm1765 = vcmp.ge.f32.partialorder %v653, %v1733
      %vm1766 = vcmp.ge.f32.partialorder %v654, %v1733
      %vm1767 = vcmp.ge.f32.partialorder %v655, %v1733
      %vm1768 = vcmp.ge.f32.partialorder %v656, %v1733
      %vm1769 = vcmp.ge.f32.partialorder %v657, %v1738
      %vm1770 = vcmp.ge.f32.partialorder %v658, %v1738
      %vm1771 = vcmp.ge.f32.partialorder %v659, %v1738
      %vm1772 = vcmp.ge.f32.partialorder %v660, %v1738
      %vm1773 = vcmp.ge.f32.partialorder %v661, %v1743
      %vm1774 = vcmp.ge.f32.partialorder %v662, %v1743
      %vm1775 = vcmp.ge.f32.partialorder %v663, %v1743
      %vm1776 = vcmp.ge.f32.partialorder %v664, %v1743
      %vm1777 = vcmp.ge.f32.partialorder %v665, %v1748
      %vm1778 = vcmp.ge.f32.partialorder %v666, %v1748
      %vm1779 = vcmp.ge.f32.partialorder %v667, %v1748
      %vm1780 = vcmp.ge.f32.partialorder %v668, %v1748
      %v1781 = vsel %vm1749, -inf, %v637
      %v1782 = vsel %vm1750, -inf, %v638
      %v1783 = vsel %vm1751, -inf, %v639
      %v1784 = vsel %vm1752, -inf, %v640
      %v1785 = vsel %vm1753, -inf, %v641
      %v1786 = vsel %vm1754, -inf, %v642
      %v1787 = vsel %vm1755, -inf, %v643
      %v1788 = vsel %vm1756, -inf, %v644
      %v1789 = vsel %vm1757, -inf, %v645
      %v1790 = vsel %vm1758, -inf, %v646
      %v1791 = vsel %vm1759, -inf, %v647
      %v1792 = vsel %vm1760, -inf, %v648
      %v1793 = vsel %vm1761, -inf, %v649
      %v1794 = vsel %vm1762, -inf, %v650
      %v1795 = vsel %vm1763, -inf, %v651
      %v1796 = vsel %vm1764, -inf, %v652
      %v1797 = vsel %vm1765, -inf, %v653
      %v1798 = vsel %vm1766, -inf, %v654
      %v1799 = vsel %vm1767, -inf, %v655
      %v1800 = vsel %vm1768, -inf, %v656
      %v1801 = vsel %vm1769, -inf, %v657
      %v1802 = vsel %vm1770, -inf, %v658
      %v1803 = vsel %vm1771, -inf, %v659
      %v1804 = vsel %vm1772, -inf, %v660
      %v1805 = vsel %vm1773, -inf, %v661
      %v1806 = vsel %vm1774, -inf, %v662
      %v1807 = vsel %vm1775, -inf, %v663
      %v1808 = vsel %vm1776, -inf, %v664
      %v1809 = vsel %vm1777, -inf, %v665
      %v1810 = vsel %vm1778, -inf, %v666
      %v1811 = vsel %vm1779, -inf, %v667
      %v1812 = vsel %vm1780, -inf, %v668
      %v1813 = vmax.f32 %v1781, %v1782
      %v1814 = vmax.f32 %v1813, %v1783
      %v1815 = vmax.f32 %v1814, %v1784
      %1816 = vmax.xlane.f32.xlu0 %v1815
      %v1817 = vpop.xlane.xlu0 %1816
      %v1818 = vmax.f32 %v1785, %v1786
      %v1819 = vmax.f32 %v1818, %v1787
      %v1820 = vmax.f32 %v1819, %v1788
      %1821 = vmax.xlane.f32.xlu0 %v1820
      %v1822 = vpop.xlane.xlu0 %1821
      %v1823 = vmax.f32 %v1789, %v1790
      %v1824 = vmax.f32 %v1823, %v1791
      %v1825 = vmax.f32 %v1824, %v1792
      %1826 = vmax.xlane.f32.xlu0 %v1825
      %v1827 = vpop.xlane.xlu0 %1826
      %v1828 = vmax.f32 %v1793, %v1794
      %v1829 = vmax.f32 %v1828, %v1795
      %v1830 = vmax.f32 %v1829, %v1796
      %1831 = vmax.xlane.f32.xlu0 %v1830
      %v1832 = vpop.xlane.xlu0 %1831
      %v1833 = vmax.f32 %v1797, %v1798
      %v1834 = vmax.f32 %v1833, %v1799
      %v1835 = vmax.f32 %v1834, %v1800
      %1836 = vmax.xlane.f32.xlu0 %v1835
      %v1837 = vpop.xlane.xlu0 %1836
      %v1838 = vmax.f32 %v1801, %v1802
      %v1839 = vmax.f32 %v1838, %v1803
      %v1840 = vmax.f32 %v1839, %v1804
      %1841 = vmax.xlane.f32.xlu0 %v1840
      %v1842 = vpop.xlane.xlu0 %1841
      %v1843 = vmax.f32 %v1805, %v1806
      %v1844 = vmax.f32 %v1843, %v1807
      %v1845 = vmax.f32 %v1844, %v1808
      %1846 = vmax.xlane.f32.xlu0 %v1845
      %v1847 = vpop.xlane.xlu0 %1846
      %v1848 = vmax.f32 %v1809, %v1810
      %v1849 = vmax.f32 %v1848, %v1811
      %v1850 = vmax.f32 %v1849, %v1812
      %1851 = vmax.xlane.f32.xlu0 %v1850
      %v1852 = vpop.xlane.xlu0 %1851
      %vm1853 = vcmp.ge.f32.partialorder %v637, %v1817
      %vm1854 = vcmp.ge.f32.partialorder %v638, %v1817
      %vm1855 = vcmp.ge.f32.partialorder %v639, %v1817
      %vm1856 = vcmp.ge.f32.partialorder %v640, %v1817
      %vm1857 = vcmp.ge.f32.partialorder %v641, %v1822
      %vm1858 = vcmp.ge.f32.partialorder %v642, %v1822
      %vm1859 = vcmp.ge.f32.partialorder %v643, %v1822
      %vm1860 = vcmp.ge.f32.partialorder %v644, %v1822
      %vm1861 = vcmp.ge.f32.partialorder %v645, %v1827
      %vm1862 = vcmp.ge.f32.partialorder %v646, %v1827
      %vm1863 = vcmp.ge.f32.partialorder %v647, %v1827
      %vm1864 = vcmp.ge.f32.partialorder %v648, %v1827
      %vm1865 = vcmp.ge.f32.partialorder %v649, %v1832
      %vm1866 = vcmp.ge.f32.partialorder %v650, %v1832
      %vm1867 = vcmp.ge.f32.partialorder %v651, %v1832
      %vm1868 = vcmp.ge.f32.partialorder %v652, %v1832
      %vm1869 = vcmp.ge.f32.partialorder %v653, %v1837
      %vm1870 = vcmp.ge.f32.partialorder %v654, %v1837
      %vm1871 = vcmp.ge.f32.partialorder %v655, %v1837
      %vm1872 = vcmp.ge.f32.partialorder %v656, %v1837
      %vm1873 = vcmp.ge.f32.partialorder %v657, %v1842
      %vm1874 = vcmp.ge.f32.partialorder %v658, %v1842
      %vm1875 = vcmp.ge.f32.partialorder %v659, %v1842
      %vm1876 = vcmp.ge.f32.partialorder %v660, %v1842
      %vm1877 = vcmp.ge.f32.partialorder %v661, %v1847
      %vm1878 = vcmp.ge.f32.partialorder %v662, %v1847
      %vm1879 = vcmp.ge.f32.partialorder %v663, %v1847
      %vm1880 = vcmp.ge.f32.partialorder %v664, %v1847
      %vm1881 = vcmp.ge.f32.partialorder %v665, %v1852
      %vm1882 = vcmp.ge.f32.partialorder %v666, %v1852
      %vm1883 = vcmp.ge.f32.partialorder %v667, %v1852
      %vm1884 = vcmp.ge.f32.partialorder %v668, %v1852
      %v1885 = vsel %vm1853, -inf, %v637
      %v1886 = vsel %vm1854, -inf, %v638
      %v1887 = vsel %vm1855, -inf, %v639
      %v1888 = vsel %vm1856, -inf, %v640
      %v1889 = vsel %vm1857, -inf, %v641
      %v1890 = vsel %vm1858, -inf, %v642
      %v1891 = vsel %vm1859, -inf, %v643
      %v1892 = vsel %vm1860, -inf, %v644
      %v1893 = vsel %vm1861, -inf, %v645
      %v1894 = vsel %vm1862, -inf, %v646
      %v1895 = vsel %vm1863, -inf, %v647
      %v1896 = vsel %vm1864, -inf, %v648
      %v1897 = vsel %vm1865, -inf, %v649
      %v1898 = vsel %vm1866, -inf, %v650
      %v1899 = vsel %vm1867, -inf, %v651
      %v1900 = vsel %vm1868, -inf, %v652
      %v1901 = vsel %vm1869, -inf, %v653
      %v1902 = vsel %vm1870, -inf, %v654
      %v1903 = vsel %vm1871, -inf, %v655
      %v1904 = vsel %vm1872, -inf, %v656
      %v1905 = vsel %vm1873, -inf, %v657
      %v1906 = vsel %vm1874, -inf, %v658
      %v1907 = vsel %vm1875, -inf, %v659
      %v1908 = vsel %vm1876, -inf, %v660
      %v1909 = vsel %vm1877, -inf, %v661
      %v1910 = vsel %vm1878, -inf, %v662
      %v1911 = vsel %vm1879, -inf, %v663
      %v1912 = vsel %vm1880, -inf, %v664
      %v1913 = vsel %vm1881, -inf, %v665
      %v1914 = vsel %vm1882, -inf, %v666
      %v1915 = vsel %vm1883, -inf, %v667
      %v1916 = vsel %vm1884, -inf, %v668
      %v1917 = vmax.f32 %v1885, %v1886
      %v1918 = vmax.f32 %v1917, %v1887
      %v1919 = vmax.f32 %v1918, %v1888
      %1920 = vmax.xlane.f32.xlu0 %v1919
      %v1921 = vpop.xlane.xlu0 %1920
      %v1922 = vmax.f32 %v1889, %v1890
      %v1923 = vmax.f32 %v1922, %v1891
      %v1924 = vmax.f32 %v1923, %v1892
      %1925 = vmax.xlane.f32.xlu0 %v1924
      %v1926 = vpop.xlane.xlu0 %1925
      %v1927 = vmax.f32 %v1893, %v1894
      %v1928 = vmax.f32 %v1927, %v1895
      %v1929 = vmax.f32 %v1928, %v1896
      %1930 = vmax.xlane.f32.xlu0 %v1929
      %v1931 = vpop.xlane.xlu0 %1930
      %v1932 = vmax.f32 %v1897, %v1898
      %v1933 = vmax.f32 %v1932, %v1899
      %v1934 = vmax.f32 %v1933, %v1900
      %1935 = vmax.xlane.f32.xlu0 %v1934
      %v1936 = vpop.xlane.xlu0 %1935
      %v1937 = vmax.f32 %v1901, %v1902
      %v1938 = vmax.f32 %v1937, %v1903
      %v1939 = vmax.f32 %v1938, %v1904
      %1940 = vmax.xlane.f32.xlu0 %v1939
      %v1941 = vpop.xlane.xlu0 %1940
      %v1942 = vmax.f32 %v1905, %v1906
      %v1943 = vmax.f32 %v1942, %v1907
      %v1944 = vmax.f32 %v1943, %v1908
      %1945 = vmax.xlane.f32.xlu0 %v1944
      %v1946 = vpop.xlane.xlu0 %1945
      %v1947 = vmax.f32 %v1909, %v1910
      %v1948 = vmax.f32 %v1947, %v1911
      %v1949 = vmax.f32 %v1948, %v1912
      %1950 = vmax.xlane.f32.xlu0 %v1949
      %v1951 = vpop.xlane.xlu0 %1950
      %v1952 = vmax.f32 %v1913, %v1914
      %v1953 = vmax.f32 %v1952, %v1915
      %v1954 = vmax.f32 %v1953, %v1916
      %1955 = vmax.xlane.f32.xlu0 %v1954
      %v1956 = vpop.xlane.xlu0 %1955
      %vm1957 = vcmp.ge.f32.partialorder %v637, %v1921
      %vm1958 = vcmp.ge.f32.partialorder %v638, %v1921
      %vm1959 = vcmp.ge.f32.partialorder %v639, %v1921
      %vm1960 = vcmp.ge.f32.partialorder %v640, %v1921
      %vm1961 = vcmp.ge.f32.partialorder %v641, %v1926
      %vm1962 = vcmp.ge.f32.partialorder %v642, %v1926
      %vm1963 = vcmp.ge.f32.partialorder %v643, %v1926
      %vm1964 = vcmp.ge.f32.partialorder %v644, %v1926
      %vm1965 = vcmp.ge.f32.partialorder %v645, %v1931
      %vm1966 = vcmp.ge.f32.partialorder %v646, %v1931
      %vm1967 = vcmp.ge.f32.partialorder %v647, %v1931
      %vm1968 = vcmp.ge.f32.partialorder %v648, %v1931
      %vm1969 = vcmp.ge.f32.partialorder %v649, %v1936
      %vm1970 = vcmp.ge.f32.partialorder %v650, %v1936
      %vm1971 = vcmp.ge.f32.partialorder %v651, %v1936
      %vm1972 = vcmp.ge.f32.partialorder %v652, %v1936
      %vm1973 = vcmp.ge.f32.partialorder %v653, %v1941
      %vm1974 = vcmp.ge.f32.partialorder %v654, %v1941
      %vm1975 = vcmp.ge.f32.partialorder %v655, %v1941
      %vm1976 = vcmp.ge.f32.partialorder %v656, %v1941
      %vm1977 = vcmp.ge.f32.partialorder %v657, %v1946
      %vm1978 = vcmp.ge.f32.partialorder %v658, %v1946
      %vm1979 = vcmp.ge.f32.partialorder %v659, %v1946
      %vm1980 = vcmp.ge.f32.partialorder %v660, %v1946
      %vm1981 = vcmp.ge.f32.partialorder %v661, %v1951
      %vm1982 = vcmp.ge.f32.partialorder %v662, %v1951
      %vm1983 = vcmp.ge.f32.partialorder %v663, %v1951
      %vm1984 = vcmp.ge.f32.partialorder %v664, %v1951
      %vm1985 = vcmp.ge.f32.partialorder %v665, %v1956
      %vm1986 = vcmp.ge.f32.partialorder %v666, %v1956
      %vm1987 = vcmp.ge.f32.partialorder %v667, %v1956
      %vm1988 = vcmp.ge.f32.partialorder %v668, %v1956
      %v1989 = vsel %vm1957, -inf, %v637
      %v1990 = vsel %vm1958, -inf, %v638
      %v1991 = vsel %vm1959, -inf, %v639
      %v1992 = vsel %vm1960, -inf, %v640
      %v1993 = vsel %vm1961, -inf, %v641
      %v1994 = vsel %vm1962, -inf, %v642
      %v1995 = vsel %vm1963, -inf, %v643
      %v1996 = vsel %vm1964, -inf, %v644
      %v1997 = vsel %vm1965, -inf, %v645
      %v1998 = vsel %vm1966, -inf, %v646
      %v1999 = vsel %vm1967, -inf, %v647
      %v2000 = vsel %vm1968, -inf, %v648
      %v2001 = vsel %vm1969, -inf, %v649
      %v2002 = vsel %vm1970, -inf, %v650
      %v2003 = vsel %vm1971, -inf, %v651
      %v2004 = vsel %vm1972, -inf, %v652
      %v2005 = vsel %vm1973, -inf, %v653
      %v2006 = vsel %vm1974, -inf, %v654
      %v2007 = vsel %vm1975, -inf, %v655
      %v2008 = vsel %vm1976, -inf, %v656
      %v2009 = vsel %vm1977, -inf, %v657
      %v2010 = vsel %vm1978, -inf, %v658
      %v2011 = vsel %vm1979, -inf, %v659
      %v2012 = vsel %vm1980, -inf, %v660
      %v2013 = vsel %vm1981, -inf, %v661
      %v2014 = vsel %vm1982, -inf, %v662
      %v2015 = vsel %vm1983, -inf, %v663
      %v2016 = vsel %vm1984, -inf, %v664
      %v2017 = vsel %vm1985, -inf, %v665
      %v2018 = vsel %vm1986, -inf, %v666
      %v2019 = vsel %vm1987, -inf, %v667
      %v2020 = vsel %vm1988, -inf, %v668
      %v2021 = vmax.f32 %v1989, %v1990
      %v2022 = vmax.f32 %v2021, %v1991
      %v2023 = vmax.f32 %v2022, %v1992
      %2024 = vmax.xlane.f32.xlu0 %v2023
      %v2025 = vpop.xlane.xlu0 %2024
      %v2026 = vmax.f32 %v1993, %v1994
      %v2027 = vmax.f32 %v2026, %v1995
      %v2028 = vmax.f32 %v2027, %v1996
      %2029 = vmax.xlane.f32.xlu0 %v2028
      %v2030 = vpop.xlane.xlu0 %2029
      %v2031 = vmax.f32 %v1997, %v1998
      %v2032 = vmax.f32 %v2031, %v1999
      %v2033 = vmax.f32 %v2032, %v2000
      %2034 = vmax.xlane.f32.xlu0 %v2033
      %v2035 = vpop.xlane.xlu0 %2034
      %v2036 = vmax.f32 %v2001, %v2002
      %v2037 = vmax.f32 %v2036, %v2003
      %v2038 = vmax.f32 %v2037, %v2004
      %2039 = vmax.xlane.f32.xlu0 %v2038
      %v2040 = vpop.xlane.xlu0 %2039
      %v2041 = vmax.f32 %v2005, %v2006
      %v2042 = vmax.f32 %v2041, %v2007
      %v2043 = vmax.f32 %v2042, %v2008
      %2044 = vmax.xlane.f32.xlu0 %v2043
      %v2045 = vpop.xlane.xlu0 %2044
      %v2046 = vmax.f32 %v2009, %v2010
      %v2047 = vmax.f32 %v2046, %v2011
      %v2048 = vmax.f32 %v2047, %v2012
      %2049 = vmax.xlane.f32.xlu0 %v2048
      %v2050 = vpop.xlane.xlu0 %2049
      %v2051 = vmax.f32 %v2013, %v2014
      %v2052 = vmax.f32 %v2051, %v2015
      %v2053 = vmax.f32 %v2052, %v2016
      %2054 = vmax.xlane.f32.xlu0 %v2053
      %v2055 = vpop.xlane.xlu0 %2054
      %v2056 = vmax.f32 %v2017, %v2018
      %v2057 = vmax.f32 %v2056, %v2019
      %v2058 = vmax.f32 %v2057, %v2020
      %2059 = vmax.xlane.f32.xlu0 %v2058
      %v2060 = vpop.xlane.xlu0 %2059
      %vm2061 = vcmp.ge.f32.partialorder %v637, %v2025
      %vm2062 = vcmp.ge.f32.partialorder %v638, %v2025
      %vm2063 = vcmp.ge.f32.partialorder %v639, %v2025
      %vm2064 = vcmp.ge.f32.partialorder %v640, %v2025
      %vm2065 = vcmp.ge.f32.partialorder %v641, %v2030
      %vm2066 = vcmp.ge.f32.partialorder %v642, %v2030
      %vm2067 = vcmp.ge.f32.partialorder %v643, %v2030
      %vm2068 = vcmp.ge.f32.partialorder %v644, %v2030
      %vm2069 = vcmp.ge.f32.partialorder %v645, %v2035
      %vm2070 = vcmp.ge.f32.partialorder %v646, %v2035
      %vm2071 = vcmp.ge.f32.partialorder %v647, %v2035
      %vm2072 = vcmp.ge.f32.partialorder %v648, %v2035
      %vm2073 = vcmp.ge.f32.partialorder %v649, %v2040
      %vm2074 = vcmp.ge.f32.partialorder %v650, %v2040
      %vm2075 = vcmp.ge.f32.partialorder %v651, %v2040
      %vm2076 = vcmp.ge.f32.partialorder %v652, %v2040
      %vm2077 = vcmp.ge.f32.partialorder %v653, %v2045
      %vm2078 = vcmp.ge.f32.partialorder %v654, %v2045
      %vm2079 = vcmp.ge.f32.partialorder %v655, %v2045
      %vm2080 = vcmp.ge.f32.partialorder %v656, %v2045
      %vm2081 = vcmp.ge.f32.partialorder %v657, %v2050
      %vm2082 = vcmp.ge.f32.partialorder %v658, %v2050
      %vm2083 = vcmp.ge.f32.partialorder %v659, %v2050
      %vm2084 = vcmp.ge.f32.partialorder %v660, %v2050
      %vm2085 = vcmp.ge.f32.partialorder %v661, %v2055
      %vm2086 = vcmp.ge.f32.partialorder %v662, %v2055
      %vm2087 = vcmp.ge.f32.partialorder %v663, %v2055
      %vm2088 = vcmp.ge.f32.partialorder %v664, %v2055
      %vm2089 = vcmp.ge.f32.partialorder %v665, %v2060
      %vm2090 = vcmp.ge.f32.partialorder %v666, %v2060
      %vm2091 = vcmp.ge.f32.partialorder %v667, %v2060
      %vm2092 = vcmp.ge.f32.partialorder %v668, %v2060
      %v2093 = vsel %vm2061, -inf, %v637
      %v2094 = vsel %vm2062, -inf, %v638
      %v2095 = vsel %vm2063, -inf, %v639
      %v2096 = vsel %vm2064, -inf, %v640
      %v2097 = vsel %vm2065, -inf, %v641
      %v2098 = vsel %vm2066, -inf, %v642
      %v2099 = vsel %vm2067, -inf, %v643
      %v2100 = vsel %vm2068, -inf, %v644
      %v2101 = vsel %vm2069, -inf, %v645
      %v2102 = vsel %vm2070, -inf, %v646
      %v2103 = vsel %vm2071, -inf, %v647
      %v2104 = vsel %vm2072, -inf, %v648
      %v2105 = vsel %vm2073, -inf, %v649
      %v2106 = vsel %vm2074, -inf, %v650
      %v2107 = vsel %vm2075, -inf, %v651
      %v2108 = vsel %vm2076, -inf, %v652
      %v2109 = vsel %vm2077, -inf, %v653
      %v2110 = vsel %vm2078, -inf, %v654
      %v2111 = vsel %vm2079, -inf, %v655
      %v2112 = vsel %vm2080, -inf, %v656
      %v2113 = vsel %vm2081, -inf, %v657
      %v2114 = vsel %vm2082, -inf, %v658
      %v2115 = vsel %vm2083, -inf, %v659
      %v2116 = vsel %vm2084, -inf, %v660
      %v2117 = vsel %vm2085, -inf, %v661
      %v2118 = vsel %vm2086, -inf, %v662
      %v2119 = vsel %vm2087, -inf, %v663
      %v2120 = vsel %vm2088, -inf, %v664
      %v2121 = vsel %vm2089, -inf, %v665
      %v2122 = vsel %vm2090, -inf, %v666
      %v2123 = vsel %vm2091, -inf, %v667
      %v2124 = vsel %vm2092, -inf, %v668
      %v2125 = vmax.f32 %v2093, %v2094
      %v2126 = vmax.f32 %v2125, %v2095
      %v2127 = vmax.f32 %v2126, %v2096
      %2128 = vmax.xlane.f32.xlu0 %v2127
      %v2129 = vpop.xlane.xlu0 %2128
      %v2130 = vmax.f32 %v2097, %v2098
      %v2131 = vmax.f32 %v2130, %v2099
      %v2132 = vmax.f32 %v2131, %v2100
      %2133 = vmax.xlane.f32.xlu0 %v2132
      %v2134 = vpop.xlane.xlu0 %2133
      %v2135 = vmax.f32 %v2101, %v2102
      %v2136 = vmax.f32 %v2135, %v2103
      %v2137 = vmax.f32 %v2136, %v2104
      %2138 = vmax.xlane.f32.xlu0 %v2137
      %v2139 = vpop.xlane.xlu0 %2138
      %v2140 = vmax.f32 %v2105, %v2106
      %v2141 = vmax.f32 %v2140, %v2107
      %v2142 = vmax.f32 %v2141, %v2108
      %2143 = vmax.xlane.f32.xlu0 %v2142
      %v2144 = vpop.xlane.xlu0 %2143
      %v2145 = vmax.f32 %v2109, %v2110
      %v2146 = vmax.f32 %v2145, %v2111
      %v2147 = vmax.f32 %v2146, %v2112
      %2148 = vmax.xlane.f32.xlu0 %v2147
      %v2149 = vpop.xlane.xlu0 %2148
      %v2150 = vmax.f32 %v2113, %v2114
      %v2151 = vmax.f32 %v2150, %v2115
      %v2152 = vmax.f32 %v2151, %v2116
      %2153 = vmax.xlane.f32.xlu0 %v2152
      %v2154 = vpop.xlane.xlu0 %2153
      %v2155 = vmax.f32 %v2117, %v2118
      %v2156 = vmax.f32 %v2155, %v2119
      %v2157 = vmax.f32 %v2156, %v2120
      %2158 = vmax.xlane.f32.xlu0 %v2157
      %v2159 = vpop.xlane.xlu0 %2158
      %v2160 = vmax.f32 %v2121, %v2122
      %v2161 = vmax.f32 %v2160, %v2123
      %v2162 = vmax.f32 %v2161, %v2124
      %2163 = vmax.xlane.f32.xlu0 %v2162
      %v2164 = vpop.xlane.xlu0 %2163
      %vm2165 = vcmp.ge.f32.partialorder %v637, %v2129
      %vm2166 = vcmp.ge.f32.partialorder %v638, %v2129
      %vm2167 = vcmp.ge.f32.partialorder %v639, %v2129
      %vm2168 = vcmp.ge.f32.partialorder %v640, %v2129
      %vm2169 = vcmp.ge.f32.partialorder %v641, %v2134
      %vm2170 = vcmp.ge.f32.partialorder %v642, %v2134
      %vm2171 = vcmp.ge.f32.partialorder %v643, %v2134
      %vm2172 = vcmp.ge.f32.partialorder %v644, %v2134
      %vm2173 = vcmp.ge.f32.partialorder %v645, %v2139
      %vm2174 = vcmp.ge.f32.partialorder %v646, %v2139
      %vm2175 = vcmp.ge.f32.partialorder %v647, %v2139
      %vm2176 = vcmp.ge.f32.partialorder %v648, %v2139
      %vm2177 = vcmp.ge.f32.partialorder %v649, %v2144
      %vm2178 = vcmp.ge.f32.partialorder %v650, %v2144
      %vm2179 = vcmp.ge.f32.partialorder %v651, %v2144
      %vm2180 = vcmp.ge.f32.partialorder %v652, %v2144
      %vm2181 = vcmp.ge.f32.partialorder %v653, %v2149
      %vm2182 = vcmp.ge.f32.partialorder %v654, %v2149
      %vm2183 = vcmp.ge.f32.partialorder %v655, %v2149
      %vm2184 = vcmp.ge.f32.partialorder %v656, %v2149
      %vm2185 = vcmp.ge.f32.partialorder %v657, %v2154
      %vm2186 = vcmp.ge.f32.partialorder %v658, %v2154
      %vm2187 = vcmp.ge.f32.partialorder %v659, %v2154
      %vm2188 = vcmp.ge.f32.partialorder %v660, %v2154
      %vm2189 = vcmp.ge.f32.partialorder %v661, %v2159
      %vm2190 = vcmp.ge.f32.partialorder %v662, %v2159
      %vm2191 = vcmp.ge.f32.partialorder %v663, %v2159
      %vm2192 = vcmp.ge.f32.partialorder %v664, %v2159
      %vm2193 = vcmp.ge.f32.partialorder %v665, %v2164
      %vm2194 = vcmp.ge.f32.partialorder %v666, %v2164
      %vm2195 = vcmp.ge.f32.partialorder %v667, %v2164
      %vm2196 = vcmp.ge.f32.partialorder %v668, %v2164
      %v2197 = vsel %vm2165, -inf, %v637
      %v2198 = vsel %vm2166, -inf, %v638
      %v2199 = vsel %vm2167, -inf, %v639
      %v2200 = vsel %vm2168, -inf, %v640
      %v2201 = vsel %vm2169, -inf, %v641
      %v2202 = vsel %vm2170, -inf, %v642
      %v2203 = vsel %vm2171, -inf, %v643
      %v2204 = vsel %vm2172, -inf, %v644
      %v2205 = vsel %vm2173, -inf, %v645
      %v2206 = vsel %vm2174, -inf, %v646
      %v2207 = vsel %vm2175, -inf, %v647
      %v2208 = vsel %vm2176, -inf, %v648
      %v2209 = vsel %vm2177, -inf, %v649
      %v2210 = vsel %vm2178, -inf, %v650
      %v2211 = vsel %vm2179, -inf, %v651
      %v2212 = vsel %vm2180, -inf, %v652
      %v2213 = vsel %vm2181, -inf, %v653
      %v2214 = vsel %vm2182, -inf, %v654
      %v2215 = vsel %vm2183, -inf, %v655
      %v2216 = vsel %vm2184, -inf, %v656
      %v2217 = vsel %vm2185, -inf, %v657
      %v2218 = vsel %vm2186, -inf, %v658
      %v2219 = vsel %vm2187, -inf, %v659
      %v2220 = vsel %vm2188, -inf, %v660
      %v2221 = vsel %vm2189, -inf, %v661
      %v2222 = vsel %vm2190, -inf, %v662
      %v2223 = vsel %vm2191, -inf, %v663
      %v2224 = vsel %vm2192, -inf, %v664
      %v2225 = vsel %vm2193, -inf, %v665
      %v2226 = vsel %vm2194, -inf, %v666
      %v2227 = vsel %vm2195, -inf, %v667
      %v2228 = vsel %vm2196, -inf, %v668
      %v2229 = vmax.f32 %v2197, %v2198
      %v2230 = vmax.f32 %v2229, %v2199
      %v2231 = vmax.f32 %v2230, %v2200
      %2232 = vmax.xlane.f32.xlu0 %v2231
      %v2233 = vpop.xlane.xlu0 %2232
      %v2234 = vmax.f32 %v2201, %v2202
      %v2235 = vmax.f32 %v2234, %v2203
      %v2236 = vmax.f32 %v2235, %v2204
      %2237 = vmax.xlane.f32.xlu0 %v2236
      %v2238 = vpop.xlane.xlu0 %2237
      %v2239 = vmax.f32 %v2205, %v2206
      %v2240 = vmax.f32 %v2239, %v2207
      %v2241 = vmax.f32 %v2240, %v2208
      %2242 = vmax.xlane.f32.xlu0 %v2241
      %v2243 = vpop.xlane.xlu0 %2242
      %v2244 = vmax.f32 %v2209, %v2210
      %v2245 = vmax.f32 %v2244, %v2211
      %v2246 = vmax.f32 %v2245, %v2212
      %2247 = vmax.xlane.f32.xlu0 %v2246
      %v2248 = vpop.xlane.xlu0 %2247
      %v2249 = vmax.f32 %v2213, %v2214
      %v2250 = vmax.f32 %v2249, %v2215
      %v2251 = vmax.f32 %v2250, %v2216
      %2252 = vmax.xlane.f32.xlu0 %v2251
      %v2253 = vpop.xlane.xlu0 %2252
      %v2254 = vmax.f32 %v2217, %v2218
      %v2255 = vmax.f32 %v2254, %v2219
      %v2256 = vmax.f32 %v2255, %v2220
      %2257 = vmax.xlane.f32.xlu0 %v2256
      %v2258 = vpop.xlane.xlu0 %2257
      %v2259 = vmax.f32 %v2221, %v2222
      %v2260 = vmax.f32 %v2259, %v2223
      %v2261 = vmax.f32 %v2260, %v2224
      %2262 = vmax.xlane.f32.xlu0 %v2261
      %v2263 = vpop.xlane.xlu0 %2262
      %v2264 = vmax.f32 %v2225, %v2226
      %v2265 = vmax.f32 %v2264, %v2227
      %v2266 = vmax.f32 %v2265, %v2228
      %2267 = vmax.xlane.f32.xlu0 %v2266
      %v2268 = vpop.xlane.xlu0 %2267
      %vm2269 = vcmp.ge.f32.partialorder %v637, %v2233
      %vm2270 = vcmp.ge.f32.partialorder %v638, %v2233
      %vm2271 = vcmp.ge.f32.partialorder %v639, %v2233
      %vm2272 = vcmp.ge.f32.partialorder %v640, %v2233
      %vm2273 = vcmp.ge.f32.partialorder %v641, %v2238
      %vm2274 = vcmp.ge.f32.partialorder %v642, %v2238
      %vm2275 = vcmp.ge.f32.partialorder %v643, %v2238
      %vm2276 = vcmp.ge.f32.partialorder %v644, %v2238
      %vm2277 = vcmp.ge.f32.partialorder %v645, %v2243
      %vm2278 = vcmp.ge.f32.partialorder %v646, %v2243
      %vm2279 = vcmp.ge.f32.partialorder %v647, %v2243
      %vm2280 = vcmp.ge.f32.partialorder %v648, %v2243
      %vm2281 = vcmp.ge.f32.partialorder %v649, %v2248
      %vm2282 = vcmp.ge.f32.partialorder %v650, %v2248
      %vm2283 = vcmp.ge.f32.partialorder %v651, %v2248
      %vm2284 = vcmp.ge.f32.partialorder %v652, %v2248
      %vm2285 = vcmp.ge.f32.partialorder %v653, %v2253
      %vm2286 = vcmp.ge.f32.partialorder %v654, %v2253
      %vm2287 = vcmp.ge.f32.partialorder %v655, %v2253
      %vm2288 = vcmp.ge.f32.partialorder %v656, %v2253
      %vm2289 = vcmp.ge.f32.partialorder %v657, %v2258
      %vm2290 = vcmp.ge.f32.partialorder %v658, %v2258
      %vm2291 = vcmp.ge.f32.partialorder %v659, %v2258
      %vm2292 = vcmp.ge.f32.partialorder %v660, %v2258
      %vm2293 = vcmp.ge.f32.partialorder %v661, %v2263
      %vm2294 = vcmp.ge.f32.partialorder %v662, %v2263
      %vm2295 = vcmp.ge.f32.partialorder %v663, %v2263
      %vm2296 = vcmp.ge.f32.partialorder %v664, %v2263
      %vm2297 = vcmp.ge.f32.partialorder %v665, %v2268
      %vm2298 = vcmp.ge.f32.partialorder %v666, %v2268
      %vm2299 = vcmp.ge.f32.partialorder %v667, %v2268
      %vm2300 = vcmp.ge.f32.partialorder %v668, %v2268
      %v2301 = vsel %vm2269, %v637, 0.0
      %v2302 = vsel %vm2270, %v638, 0.0
      %v2303 = vsel %vm2271, %v639, 0.0
      %v2304 = vsel %vm2272, %v640, 0.0
      %v2305 = vsel %vm2273, %v641, 0.0
      %v2306 = vsel %vm2274, %v642, 0.0
      %v2307 = vsel %vm2275, %v643, 0.0
      %v2308 = vsel %vm2276, %v644, 0.0
      %v2309 = vsel %vm2277, %v645, 0.0
      %v2310 = vsel %vm2278, %v646, 0.0
      %v2311 = vsel %vm2279, %v647, 0.0
      %v2312 = vsel %vm2280, %v648, 0.0
      %v2313 = vsel %vm2281, %v649, 0.0
      %v2314 = vsel %vm2282, %v650, 0.0
      %v2315 = vsel %vm2283, %v651, 0.0
      %v2316 = vsel %vm2284, %v652, 0.0
      %v2317 = vsel %vm2285, %v653, 0.0
      %v2318 = vsel %vm2286, %v654, 0.0
      %v2319 = vsel %vm2287, %v655, 0.0
      %v2320 = vsel %vm2288, %v656, 0.0
      %v2321 = vsel %vm2289, %v657, 0.0
      %v2322 = vsel %vm2290, %v658, 0.0
      %v2323 = vsel %vm2291, %v659, 0.0
      %v2324 = vsel %vm2292, %v660, 0.0
      %v2325 = vsel %vm2293, %v661, 0.0
      %v2326 = vsel %vm2294, %v662, 0.0
      %v2327 = vsel %vm2295, %v663, 0.0
      %v2328 = vsel %vm2296, %v664, 0.0
      %v2329 = vsel %vm2297, %v665, 0.0
      %v2330 = vsel %vm2298, %v666, 0.0
      %v2331 = vsel %vm2299, %v667, 0.0
      %v2332 = vsel %vm2300, %v668, 0.0
      %v2333 = vpack.c.bf16 %v2305, %v2301
      %v2334 = vpack.c.bf16 %v2306, %v2302
      %v2335 = vpack.c.bf16 %v2307, %v2303
      %v2336 = vpack.c.bf16 %v2308, %v2304
      %v2337 = vpack.c.bf16 %v2313, %v2309
      %v2338 = vpack.c.bf16 %v2314, %v2310
      %v2339 = vpack.c.bf16 %v2315, %v2311
      %v2340 = vpack.c.bf16 %v2316, %v2312
      %v2341 = vpack.c.bf16 %v2321, %v2317
      %v2342 = vpack.c.bf16 %v2322, %v2318
      %v2343 = vpack.c.bf16 %v2323, %v2319
      %v2344 = vpack.c.bf16 %v2324, %v2320
      %v2345 = vpack.c.bf16 %v2329, %v2325
      %v2346 = vpack.c.bf16 %v2330, %v2326
      %v2347 = vpack.c.bf16 %v2331, %v2327
      %v2348 = vpack.c.bf16 %v2332, %v2328
      %v2349 = vld [vmem:[%s3] sm:$0xf]
      %v2350 = vld [vmem:[%s3 + $0x4] sm:$0xf]
      %v2351 = vld [vmem:[%s3 + $0x8] sm:$0xf]
      %v2352 = vld [vmem:[%s3 + $0xc] sm:$0xf]
      %v2353 = vld [vmem:[%s3 + $0x10] sm:$0xf]
      %v2354 = vld [vmem:[%s3 + $0x14] sm:$0xf]
      %v2355 = vld [vmem:[%s3 + $0x18] sm:$0xf]
      %v2356 = vld [vmem:[%s3 + $0x1c] sm:$0xf]
      %v2357 = vld [vmem:[%s3 + $0x20] sm:$0xf]
      %v2358 = vld [vmem:[%s3 + $0x24] sm:$0xf]
      %v2359 = vld [vmem:[%s3 + $0x28] sm:$0xf]
      %v2360 = vld [vmem:[%s3 + $0x2c] sm:$0xf]
      %v2361 = vld [vmem:[%s3 + $0x30] sm:$0xf]
      %v2362 = vld [vmem:[%s3 + $0x34] sm:$0xf]
      %v2363 = vld [vmem:[%s3 + $0x38] sm:$0xf]
      %v2364 = vld [vmem:[%s3 + $0x3c] sm:$0xf]
      %v2365 = vld [vmem:[%s3 + $0x40] sm:$0xf]
      %v2366 = vld [vmem:[%s3 + $0x44] sm:$0xf]
      %v2367 = vld [vmem:[%s3 + $0x48] sm:$0xf]
      %v2368 = vld [vmem:[%s3 + $0x4c] sm:$0xf]
      %v2369 = vld [vmem:[%s3 + $0x50] sm:$0xf]
      %v2370 = vld [vmem:[%s3 + $0x54] sm:$0xf]
      %v2371 = vld [vmem:[%s3 + $0x58] sm:$0xf]
      %v2372 = vld [vmem:[%s3 + $0x5c] sm:$0xf]
      %v2373 = vld [vmem:[%s3 + $0x60] sm:$0xf]
      %v2374 = vld [vmem:[%s3 + $0x64] sm:$0xf]
      %v2375 = vld [vmem:[%s3 + $0x68] sm:$0xf]
      %v2376 = vld [vmem:[%s3 + $0x6c] sm:$0xf]
      %v2377 = vld [vmem:[%s3 + $0x70] sm:$0xf]
      %v2378 = vld [vmem:[%s3 + $0x74] sm:$0xf]
      %v2379 = vld [vmem:[%s3 + $0x78] sm:$0xf]
      %v2380 = vld [vmem:[%s3 + $0x7c] sm:$0xf]
      %v2381 = vld [vmem:[%s3 + $0x80] sm:$0xf]
      %v2382 = vld [vmem:[%s3 + $0x84] sm:$0xf]
      %v2383 = vld [vmem:[%s3 + $0x88] sm:$0xf]
      %v2384 = vld [vmem:[%s3 + $0x8c] sm:$0xf]
      %v2385 = vld [vmem:[%s3 + $0x90] sm:$0xf]
      %v2386 = vld [vmem:[%s3 + $0x94] sm:$0xf]
      %v2387 = vld [vmem:[%s3 + $0x98] sm:$0xf]
      %v2388 = vld [vmem:[%s3 + $0x9c] sm:$0xf]
      %v2389 = vld [vmem:[%s3 + $0xa0] sm:$0xf]
      %v2390 = vld [vmem:[%s3 + $0xa4] sm:$0xf]
      %v2391 = vld [vmem:[%s3 + $0xa8] sm:$0xf]
      %v2392 = vld [vmem:[%s3 + $0xac] sm:$0xf]
      %v2393 = vld [vmem:[%s3 + $0xb0] sm:$0xf]
      %v2394 = vld [vmem:[%s3 + $0xb4] sm:$0xf]
      %v2395 = vld [vmem:[%s3 + $0xb8] sm:$0xf]
      %v2396 = vld [vmem:[%s3 + $0xbc] sm:$0xf]
      %v2397 = vld [vmem:[%s3 + $0xc0] sm:$0xf]
      %v2398 = vld [vmem:[%s3 + $0xc4] sm:$0xf]
      %v2399 = vld [vmem:[%s3 + $0xc8] sm:$0xf]
      %v2400 = vld [vmem:[%s3 + $0xcc] sm:$0xf]
      %v2401 = vld [vmem:[%s3 + $0xd0] sm:$0xf]
      %v2402 = vld [vmem:[%s3 + $0xd4] sm:$0xf]
      %v2403 = vld [vmem:[%s3 + $0xd8] sm:$0xf]
      %v2404 = vld [vmem:[%s3 + $0xdc] sm:$0xf]
      %v2405 = vld [vmem:[%s3 + $0xe0] sm:$0xf]
      %v2406 = vld [vmem:[%s3 + $0xe4] sm:$0xf]
      %v2407 = vld [vmem:[%s3 + $0xe8] sm:$0xf]
      %v2408 = vld [vmem:[%s3 + $0xec] sm:$0xf]
      %v2409 = vld [vmem:[%s3 + $0xf0] sm:$0xf]
      %v2410 = vld [vmem:[%s3 + $0xf4] sm:$0xf]
      %v2411 = vld [vmem:[%s3 + $0xf8] sm:$0xf]
      %v2412 = vld [vmem:[%s3 + $0xfc] sm:$0xf]
      %v2413 = vld [vmem:[%s4] sm:$0x1]
      %v2415 = vlaneseq
      %v2416 = vshrl.u32 %v2415, 7
      %v2417 = vsub.s32 0, %v2416
      %v2418 = vrot.slane %v2413, %v2417
      %v2484 = vunpack.c.l.b16 %v2349
      %v2485 = vunpack.c.l.b16 %v2350
      %v2486 = vunpack.c.l.b16 %v2351
      %v2487 = vunpack.c.l.b16 %v2352
      %v2488 = vunpack.c.l.b16 %v2353
      %v2489 = vunpack.c.l.b16 %v2354
      %v2490 = vunpack.c.l.b16 %v2355
      %v2491 = vunpack.c.l.b16 %v2356
      %v2492 = vunpack.c.l.b16 %v2357
      %v2493 = vunpack.c.l.b16 %v2358
      %v2494 = vunpack.c.l.b16 %v2359
      %v2495 = vunpack.c.l.b16 %v2360
      %v2496 = vunpack.c.l.b16 %v2361
      %v2497 = vunpack.c.l.b16 %v2362
      %v2498 = vunpack.c.l.b16 %v2363
      %v2499 = vunpack.c.l.b16 %v2364
      %v2500 = vunpack.c.l.b16 %v2365
      %v2501 = vunpack.c.l.b16 %v2366
      %v2502 = vunpack.c.l.b16 %v2367
      %v2503 = vunpack.c.l.b16 %v2368
      %v2504 = vunpack.c.l.b16 %v2369
      %v2505 = vunpack.c.l.b16 %v2370
      %v2506 = vunpack.c.l.b16 %v2371
      %v2507 = vunpack.c.l.b16 %v2372
      %v2508 = vunpack.c.l.b16 %v2373
      %v2509 = vunpack.c.l.b16 %v2374
      %v2510 = vunpack.c.l.b16 %v2375
      %v2511 = vunpack.c.l.b16 %v2376
      %v2512 = vunpack.c.l.b16 %v2377
      %v2513 = vunpack.c.l.b16 %v2378
      %v2514 = vunpack.c.l.b16 %v2379
      %v2515 = vunpack.c.l.b16 %v2380
      %v2516 = vunpack.c.l.b16 %v2381
      %v2517 = vunpack.c.l.b16 %v2382
      %v2518 = vunpack.c.l.b16 %v2383
      %v2519 = vunpack.c.l.b16 %v2384
      %v2520 = vunpack.c.l.b16 %v2385
      %v2521 = vunpack.c.l.b16 %v2386
      %v2522 = vunpack.c.l.b16 %v2387
      %v2523 = vunpack.c.l.b16 %v2388
      %v2524 = vunpack.c.l.b16 %v2389
      %v2525 = vunpack.c.l.b16 %v2390
      %v2526 = vunpack.c.l.b16 %v2391
      %v2527 = vunpack.c.l.b16 %v2392
      %v2528 = vunpack.c.l.b16 %v2393
      %v2529 = vunpack.c.l.b16 %v2394
      %v2530 = vunpack.c.l.b16 %v2395
      %v2531 = vunpack.c.l.b16 %v2396
      %v2532 = vunpack.c.l.b16 %v2397
      %v2533 = vunpack.c.l.b16 %v2398
      %v2534 = vunpack.c.l.b16 %v2399
      %v2535 = vunpack.c.l.b16 %v2400
      %v2536 = vunpack.c.l.b16 %v2401
      %v2537 = vunpack.c.l.b16 %v2402
      %v2538 = vunpack.c.l.b16 %v2403
      %v2539 = vunpack.c.l.b16 %v2404
      %v2540 = vunpack.c.l.b16 %v2405
      %v2541 = vunpack.c.l.b16 %v2406
      %v2542 = vunpack.c.l.b16 %v2407
      %v2543 = vunpack.c.l.b16 %v2408
      %v2544 = vunpack.c.l.b16 %v2409
      %v2545 = vunpack.c.l.b16 %v2410
      %v2546 = vunpack.c.l.b16 %v2411
      %v2547 = vunpack.c.l.b16 %v2412
      %v2548 = vpack.c.b16 %v2485, %v2484
      %v2549 = vpack.c.b16 %v2487, %v2486
      %v2550 = vpack.c.b16 %v2489, %v2488
      %v2551 = vpack.c.b16 %v2491, %v2490
      %v2552 = vpack.c.b16 %v2493, %v2492
      %v2553 = vpack.c.b16 %v2495, %v2494
      %v2554 = vpack.c.b16 %v2497, %v2496
      %v2555 = vpack.c.b16 %v2499, %v2498
      %v2556 = vpack.c.b16 %v2501, %v2500
      %v2557 = vpack.c.b16 %v2503, %v2502
      %v2558 = vpack.c.b16 %v2505, %v2504
      %v2559 = vpack.c.b16 %v2507, %v2506
      %v2560 = vpack.c.b16 %v2509, %v2508
      %v2561 = vpack.c.b16 %v2511, %v2510
      %v2562 = vpack.c.b16 %v2513, %v2512
      %v2563 = vpack.c.b16 %v2515, %v2514
      %v2564 = vpack.c.b16 %v2517, %v2516
      %v2565 = vpack.c.b16 %v2519, %v2518
      %v2566 = vpack.c.b16 %v2521, %v2520
      %v2567 = vpack.c.b16 %v2523, %v2522
      %v2568 = vpack.c.b16 %v2525, %v2524
      %v2569 = vpack.c.b16 %v2527, %v2526
      %v2570 = vpack.c.b16 %v2529, %v2528
      %v2571 = vpack.c.b16 %v2531, %v2530
      %v2572 = vpack.c.b16 %v2533, %v2532
      %v2573 = vpack.c.b16 %v2535, %v2534
      %v2574 = vpack.c.b16 %v2537, %v2536
      %v2575 = vpack.c.b16 %v2539, %v2538
      %v2576 = vpack.c.b16 %v2541, %v2540
      %v2577 = vpack.c.b16 %v2543, %v2542
      %v2578 = vpack.c.b16 %v2545, %v2544
      %v2579 = vpack.c.b16 %v2547, %v2546
      %2612 = vmatprep.subr.bf16.mxu0 0
      %2613 = vmatpush1.bf16.msra.mxu0 %v2548
      %2614 = vmatprep.subr.bf16.mxu0 0
      %2615 = vmatpush1.bf16.msra.mxu0 %v2549
      %2616 = vmatprep.subr.bf16.mxu0 0
      %2617 = vmatpush1.bf16.msra.mxu0 %v2550
      %2618 = vmatprep.subr.bf16.mxu0 0
      %2619 = vmatpush1.bf16.msra.mxu0 %v2551
      %2620 = vmatprep.subr.bf16.mxu0 0
      %2621 = vmatpush1.bf16.msra.mxu0 %v2552
      %2622 = vmatprep.subr.bf16.mxu0 0
      %2623 = vmatpush1.bf16.msra.mxu0 %v2553
      %2624 = vmatprep.subr.bf16.mxu0 0
      %2625 = vmatpush1.bf16.msra.mxu0 %v2554
      %2626 = vmatprep.subr.bf16.mxu0 0
      %2627 = vmatpush1.bf16.msra.mxu0 %v2555
      %2628 = vmatprep.subr.bf16.mxu0 0
      %2629 = vmatpush1.bf16.msra.mxu0 %v2556
      %2630 = vmatprep.subr.bf16.mxu0 0
      %2631 = vmatpush1.bf16.msra.mxu0 %v2557
      %2632 = vmatprep.subr.bf16.mxu0 0
      %2633 = vmatpush1.bf16.msra.mxu0 %v2558
      %2634 = vmatprep.subr.bf16.mxu0 0
      %2635 = vmatpush1.bf16.msra.mxu0 %v2559
      %2636 = vmatprep.subr.bf16.mxu0 0
      %2637 = vmatpush1.bf16.msra.mxu0 %v2560
      %2638 = vmatprep.subr.bf16.mxu0 0
      %2639 = vmatpush1.bf16.msra.mxu0 %v2561
      %2640 = vmatprep.subr.bf16.mxu0 0
      %2641 = vmatpush1.bf16.msra.mxu0 %v2562
      %2642 = vmatprep.subr.bf16.mxu0 0
      %2643 = vmatpush1.bf16.msra.mxu0 %v2563
      %2644 = vmatprep.mubr.bf16.mxu0 %v2334
      %2645 = vmatmul.mubr.bf16.gmra.mrb[0].mxu0 %v2333
      %v2646 = vpop.f32.mrb[0].mxu0
      %v2647 = vadd.f32 %v2418, %v2646
      %v2648 = vpop.f32.mrb[0].mxu0
      %v2649 = vpop.f32.mrb[0].mxu0
      %v2650 = vadd.f32 %v2418, %v2649
      %v2651 = vpop.f32.mrb[0].mxu0
      %2652 = vmatprep.mubr.bf16.mxu0 %v2338
      %2653 = vmatmul.mubr.bf16.gmra.mrb[0].mxu0 %v2337
      %v2654 = vpop.f32.mrb[0].mxu0
      %v2655 = vadd.f32 %v2418, %v2654
      %v2656 = vpop.f32.mrb[0].mxu0
      %v2657 = vpop.f32.mrb[0].mxu0
      %v2658 = vadd.f32 %v2418, %v2657
      %v2659 = vpop.f32.mrb[0].mxu0
      %2660 = vmatprep.mubr.bf16.mxu0 %v2342
      %2661 = vmatmul.mubr.bf16.gmra.mrb[0].mxu0 %v2341
      %v2662 = vpop.f32.mrb[0].mxu0
      %v2663 = vadd.f32 %v2418, %v2662
      %v2664 = vpop.f32.mrb[0].mxu0
      %v2665 = vpop.f32.mrb[0].mxu0
      %v2666 = vadd.f32 %v2418, %v2665
      %v2667 = vpop.f32.mrb[0].mxu0
      %2668 = vmatprep.mubr.bf16.mxu0 %v2346
      %2669 = vmatmul.mubr.bf16.gmra.mrb[0].mxu0 %v2345
      %v2670 = vpop.f32.mrb[0].mxu0
      %v2671 = vadd.f32 %v2418, %v2670
      %v2672 = vpop.f32.mrb[0].mxu0
      %v2673 = vpop.f32.mrb[0].mxu0
      %v2674 = vadd.f32 %v2418, %v2673
      %v2675 = vpop.f32.mrb[0].mxu0
      %2676 = vdwg.mxu0
      %2677 = vmatprep.subr.bf16.mxu0 0
      %2678 = vmatpush1.bf16.msra.mxu0 %v2564
      %2679 = vmatprep.subr.bf16.mxu0 0
      %2680 = vmatpush1.bf16.msra.mxu0 %v2565
      %2681 = vmatprep.subr.bf16.mxu0 0
      %2682 = vmatpush1.bf16.msra.mxu0 %v2566
      %2683 = vmatprep.subr.bf16.mxu0 0
      %2684 = vmatpush1.bf16.msra.mxu0 %v2567
      %2685 = vmatprep.subr.bf16.mxu0 0
      %2686 = vmatpush1.bf16.msra.mxu0 %v2568
      %2687 = vmatprep.subr.bf16.mxu0 0
      %2688 = vmatpush1.bf16.msra.mxu0 %v2569
      %2689 = vmatprep.subr.bf16.mxu0 0
      %2690 = vmatpush1.bf16.msra.mxu0 %v2570
      %2691 = vmatprep.subr.bf16.mxu0 0
      %2692 = vmatpush1.bf16.msra.mxu0 %v2571
      %2693 = vmatprep.subr.bf16.mxu0 0
      %2694 = vmatpush1.bf16.msra.mxu0 %v2572
      %2695 = vmatprep.subr.bf16.mxu0 0
      %2696 = vmatpush1.bf16.msra.mxu0 %v2573
      %2697 = vmatprep.subr.bf16.mxu0 0
      %2698 = vmatpush1.bf16.msra.mxu0 %v2574
      %2699 = vmatprep.subr.bf16.mxu0 0
      %2700 = vmatpush1.bf16.msra.mxu0 %v2575
      %2701 = vmatprep.subr.bf16.mxu0 0
      %2702 = vmatpush1.bf16.msra.mxu0 %v2576
      %2703 = vmatprep.subr.bf16.mxu0 0
      %2704 = vmatpush1.bf16.msra.mxu0 %v2577
      %2705 = vmatprep.subr.bf16.mxu0 0
      %2706 = vmatpush1.bf16.msra.mxu0 %v2578
      %2707 = vmatprep.subr.bf16.mxu0 0
      %2708 = vmatpush1.bf16.msra.mxu0 %v2579
      %2709 = vmatprep.mubr.bf16.mxu0 %v2336
      %2710 = vmatmul.mubr.bf16.gmra.mrb[0].mxu0 %v2335
      %v2711 = vpop.f32.mrb[0].mxu0
      %v2712 = vadd.f32 %v2647, %v2711
      %v2713 = vpop.f32.mrb[0].mxu0
      %v2714 = vpop.f32.mrb[0].mxu0
      %v2715 = vadd.f32 %v2650, %v2714
      %v2716 = vpop.f32.mrb[0].mxu0
      %2717 = vmatprep.mubr.bf16.mxu0 %v2340
      %2718 = vmatmul.mubr.bf16.gmra.mrb[0].mxu0 %v2339
      %v2719 = vpop.f32.mrb[0].mxu0
      %v2720 = vadd.f32 %v2655, %v2719
      %v2721 = vpop.f32.mrb[0].mxu0
      %v2722 = vpop.f32.mrb[0].mxu0
      %v2723 = vadd.f32 %v2658, %v2722
      %v2724 = vpop.f32.mrb[0].mxu0
      %2725 = vmatprep.mubr.bf16.mxu0 %v2344
      %2726 = vmatmul.mubr.bf16.gmra.mrb[0].mxu0 %v2343
      %v2727 = vpop.f32.mrb[0].mxu0
      %v2728 = vadd.f32 %v2663, %v2727
      %v2729 = vpop.f32.mrb[0].mxu0
      %v2730 = vpop.f32.mrb[0].mxu0
      %v2731 = vadd.f32 %v2666, %v2730
      %v2732 = vpop.f32.mrb[0].mxu0
      %2733 = vmatprep.mubr.bf16.mxu0 %v2348
      %2734 = vmatmul.mubr.bf16.gmra.mrb[0].mxu0 %v2347
      %v2735 = vpop.f32.mrb[0].mxu0
      %v2736 = vadd.f32 %v2671, %v2735
      %v2737 = vpop.f32.mrb[0].mxu0
      %v2738 = vpop.f32.mrb[0].mxu0
      %v2739 = vadd.f32 %v2674, %v2738
      %v2740 = vpop.f32.mrb[0].mxu0
      %2741 = vdwg.mxu0
      %2742 = vst [vmem:[%s259] sm:$0xff] %v2712
      %2743 = vst [vmem:[%s259 + $0x8] sm:$0xff] %v2715
      %2744 = vst [vmem:[%s259 + $0x10] sm:$0xff] %v2720
      %2745 = vst [vmem:[%s259 + $0x18] sm:$0xff] %v2723
      %2746 = vst [vmem:[%s259 + $0x20] sm:$0xff] %v2728
      %2747 = vst [vmem:[%s259 + $0x28] sm:$0xff] %v2731
      %2748 = vst [vmem:[%s259 + $0x30] sm:$0xff] %v2736
      %2749 = vst [vmem:[%s259 + $0x38] sm:$0xff] %v2739
      %v2750 = vsub.f32 %v2712, %v265
      %v2751 = vsub.f32 %v2715, %v266
      %v2752 = vsub.f32 %v2720, %v267
      %v2753 = vsub.f32 %v2723, %v268
      %v2754 = vsub.f32 %v2728, %v269
      %v2755 = vsub.f32 %v2731, %v270
      %v2756 = vsub.f32 %v2736, %v271
      %v2757 = vsub.f32 %v2739, %v272
      %s2758 = smul.u32 %s18, 64
      %v2759 = vlaneseq
      %v2760 = vshrl.u32 %v2759, 7
      %v2761 = vadd.s32 %v2760, 8
      %v2762 = vadd.s32 %v2760, 16
      %v2763 = vadd.s32 %v2760, 24
      %v2764 = vadd.s32 %v2760, 32
      %v2765 = vadd.s32 %v2760, 40
      %v2766 = vadd.s32 %v2760, 48
      %v2767 = vadd.s32 %v2760, 56
      %v2768 = vstv %s2758
      %v2769 = vadd.s32 %v2768, %v2760
      %v2770 = vadd.s32 %v2768, %v2761
      %v2771 = vadd.s32 %v2768, %v2762
      %v2772 = vadd.s32 %v2768, %v2763
      %v2773 = vadd.s32 %v2768, %v2764
      %v2774 = vadd.s32 %v2768, %v2765
      %v2775 = vadd.s32 %v2768, %v2766
      %v2776 = vadd.s32 %v2768, %v2767
      %vm2777 = vcmp.lt.s32.totalorder %v2769, 500
      %vm2778 = vcmp.lt.s32.totalorder %v2770, 500
      %vm2779 = vcmp.lt.s32.totalorder %v2771, 500
      %vm2780 = vcmp.lt.s32.totalorder %v2772, 500
      %vm2781 = vcmp.lt.s32.totalorder %v2773, 500
      %vm2782 = vcmp.lt.s32.totalorder %v2774, 500
      %vm2783 = vcmp.lt.s32.totalorder %v2775, 500
      %vm2784 = vcmp.lt.s32.totalorder %v2776, 500
      %v2785 = vsel %vm2777, 1, 0
      %v2786 = vsel %vm2778, 1, 0
      %v2787 = vsel %vm2779, 1, 0
      %v2788 = vsel %vm2780, 1, 0
      %v2789 = vsel %vm2781, 1, 0
      %v2790 = vsel %vm2782, 1, 0
      %v2791 = vsel %vm2783, 1, 0
      %v2792 = vsel %vm2784, 1, 0
      %vm2793 = vcmp.eq.s32.totalorder %v2785, 1
      %vm2794 = vcmp.eq.s32.totalorder %v2786, 1
      %vm2795 = vcmp.eq.s32.totalorder %v2787, 1
      %vm2796 = vcmp.eq.s32.totalorder %v2788, 1
      %vm2797 = vcmp.eq.s32.totalorder %v2789, 1
      %vm2798 = vcmp.eq.s32.totalorder %v2790, 1
      %vm2799 = vcmp.eq.s32.totalorder %v2791, 1
      %vm2800 = vcmp.eq.s32.totalorder %v2792, 1
      %v2801 = vsel %vm2793, %v2750, 0.0
      %v2802 = vsel %vm2794, %v2751, 0.0
      %v2803 = vsel %vm2795, %v2752, 0.0
      %v2804 = vsel %vm2796, %v2753, 0.0
      %v2805 = vsel %vm2797, %v2754, 0.0
      %v2806 = vsel %vm2798, %v2755, 0.0
      %v2807 = vsel %vm2799, %v2756, 0.0
      %v2808 = vsel %vm2800, %v2757, 0.0
      %v2809 = vmul.f32 %v2801, %v2801
      %v2810 = vmul.f32 %v2802, %v2802
      %v2811 = vmul.f32 %v2803, %v2803
      %v2812 = vmul.f32 %v2804, %v2804
      %v2813 = vmul.f32 %v2805, %v2805
      %v2814 = vmul.f32 %v2806, %v2806
      %v2815 = vmul.f32 %v2807, %v2807
      %v2816 = vmul.f32 %v2808, %v2808
      %v2817 = vadd.f32 %v2809, %v2810
      %v2818 = vadd.f32 %v2817, %v2811
      %v2819 = vadd.f32 %v2818, %v2812
      %v2820 = vadd.f32 %v2819, %v2813
      %v2821 = vadd.f32 %v2820, %v2814
      %v2822 = vadd.f32 %v2821, %v2815
      %v2823 = vadd.f32 %v2822, %v2816
      %v2824 = vrot.slane %v2823, 4
      %v2825 = vadd.f32 %v2823, %v2824
      %v2826 = vrot.slane %v2825, 2
      %v2827 = vadd.f32 %v2825, %v2826
      %v2828 = vrot.slane %v2827, 1
      %v2829 = vadd.f32 %v2827, %v2828
      %2830 = vst [vmem:[%s263] sm:$0x1] %v2829
      %s2831 = smul.u32 8, %s18
      %p2832 = scmp.lt.s32.totalorder %s2831, 63
      %s2833 = scalar_select %p2832, %s2831, 63
      %s2834 = smul.addr %s2833, 8
      %s2835 = scalar_lea.vmem %s5, %s2834
      %p2836 = scmp.lt.s32.totalorder %s18, 7
      %s2837 = scalar_select %p2836, %s18, 7
      %s2838 = scalar_lea.vmem %s6, %s2837
      // Predicated region
      $region41: #{sae_forward.1} parent=39 // pred_check
        %p2839 = pneg %p146
      $region42: #{sae_forward.1} parent=39 // pred_check_branch
        %2841 = sbr.rel (%p2839) target = $region44
      $region43: #{sae_forward.1} parent=39 // pred_region
        %s2842 = smul.u32 8, %s18
      $region44: #{sae_forward.1} parent=39 // pred_fallthru
        _
      // Predicated region
      $region45: #{sae_forward.1} parent=39 // pred_check
        %p2843 = pneg %p172
      $region46: #{sae_forward.1} parent=39 // pred_check_branch
        %2845 = sbr.rel (%p2843) target = $region48
      $region47: #{sae_forward.1} parent=39 // pred_region
        _
      $region48: #{sae_forward.1} parent=39 // pred_fallthru
        _
    $region40: #{sae_forward.1} parent=5 // pred_fallthru
      _
    %p2846 = scmp.le.s32.totalorder 2, %s13
    // Predicated region
    $region49: #{sae_forward.1} parent=5 // pred_check
      %p2847 = pneg %p2846
    $region50: #{sae_forward.1} parent=5 // pred_check_branch
      %2849 = sbr.rel (%p2847) target = $region52
    $region51: #{sae_forward.1} parent=5 // pred_region
      %s2850 = ssub.s32 %s13, 2
      // Predicated region
      $region53: #{sae_forward.1} parent=51 // pred_check
        %p2851 = pneg %p152
      $region54: #{sae_forward.1} parent=51 // pred_check_branch
        %2853 = sbr.rel (%p2851) target = $region56
      $region55: #{sae_forward.1} parent=51 // pred_region
        %s2854 = smul.u32 8, %s19
        %p2855 = scmp.lt.s32.totalorder %s2854, 63
        %s2856 = scalar_select %p2855, %s2854, 63
        %s2857 = smul.addr %s2856, 8
        %s2858 = scalar_lea.vmem %s5, %s2857
      $region56: #{sae_forward.1} parent=51 // pred_fallthru
        _
      // Predicated region
      $region57: #{sae_forward.1} parent=51 // pred_check
        %p2859 = pneg %p178
      $region58: #{sae_forward.1} parent=51 // pred_check_branch
        %2861 = sbr.rel (%p2859) target = $region60
      $region59: #{sae_forward.1} parent=51 // pred_region
        %p2862 = scmp.lt.s32.totalorder %s19, 7
        %s2863 = scalar_select %p2862, %s19, 7
        %s2864 = scalar_lea.vmem %s6, %s2863
      $region60: #{sae_forward.1} parent=51 // pred_fallthru
        _
    $region52: #{sae_forward.1} parent=5 // pred_fallthru
      _
  $region6: #{sae_forward.1} parent=0 // loop_footer
    %s17 = sadd.s32 1, %s13
  $region7: #{sae_forward.1} parent=0 // loop_footer_branch
    %12 = sbr.rel target = $region3
  $region8: #{sae_forward.1} parent=0 // loop_exit
    _

</llo_original>
